<compile_context>
chip_gen: v7x
topology: tpu7x:2x2x1
jax: 0.10.0
libtpu: 0.0.40
codegen_flags: <defaults>
</compile_context>

<pallas_src>
import functools

import jax
import jax.numpy as jnp
from jax import lax
from jax.experimental import pallas as pl
from jax.experimental.pallas import tpu as pltpu


def _down_kernel(x_ref, w1_ref, b1_ref, w2_ref, b2_ref, o_ref,
                 pad1_ref, col1_ref, pad2_ref, col2_ref,
                 *, b_tile, hp, wp):
    """Fused MaxPool2d(2) -> Conv3x3+ReLU -> Conv3x3+ReLU for B_TILE images.

    x_ref   : (B_TILE, Cin, H*W)       raw images, spatial flattened on lanes
    w*_ref  : (Cout, 9*Cin)            im2col-ordered weights (kh, kw, ic)
    b*_ref  : (Cout, 1)                bias column (broadcasts along lanes)
    o_ref   : (1, Cout, B_TILE*Hp*Wp)  lane-dense output slab
    pad*_ref: (B_TILE, C, Hp*Wp+2*S)   zero-haloed flattened activations
    col*_ref: (9*C, B_TILE*Hp*Wp)      im2col staging buffers
    """
    f32 = jnp.float32
    wr = 2 * wp              # raw (cropped) image width
    hw = hp * wp             # pooled pixels per image
    s = wp + 1               # flattened-offset halo size
    lanes = b_tile * hw

    # Exact 0/1 lane-compaction matrices for the horizontal 2x pool.
    p_row = lax.broadcasted_iota(jnp.int32, (wr, wp), 0)
    p_col = lax.broadcasted_iota(jnp.int32, (wr, wp), 1)
    sel_even = (p_row == 2 * p_col).astype(f32)
    sel_odd = (p_row == 2 * p_col + 1).astype(f32)

    # Row-wrap masks for the dw = +/-1 taps of a SAME-padded 3x3 conv in the
    # flattened layout (cheap VPU filler next to the MXU matmul).
    col_in_row = lax.broadcasted_iota(jnp.int32, (1, hw), 1) % wp
    mask_l = col_in_row >= 1
    mask_r = col_in_row <= wp - 2

    # ---- fused 2x2 max-pool, written straight into conv1's staging buffer ----
    cin = pad1_ref.shape[1]
    for b in range(b_tile):
        pad1_ref[b, :, 0:s] = jnp.zeros((cin, s), f32)
        pad1_ref[b, :, s + hw:s + hw + s] = jnp.zeros((cin, s), f32)
        for r in range(hp):
            top = x_ref[b, :, 2 * r * wr: 2 * r * wr + wr].astype(f32)
            bot = x_ref[b, :, 2 * r * wr + wr: 2 * r * wr + 2 * wr].astype(f32)
            v = jnp.maximum(top, bot)                                   # (Cin, 2*Wp)
            row = jnp.maximum(
                jnp.dot(v, sel_even, preferred_element_type=f32),
                jnp.dot(v, sel_odd, preferred_element_type=f32))        # (Cin, Wp)
            pad1_ref[b, :, s + r * wp: s + (r + 1) * wp] = row

    # ---- one im2col + one MXU matmul per conv ----
    def conv3x3_relu(pad_ref, col_ref, w_ref, b_ref):
        c_in = pad_ref.shape[1]
        for b in range(b_tile):
            for k in range(9):
                dh, dw = k // 3 - 1, k % 3 - 1
                off = dh * wp + dw
                tap = pad_ref[b, :, s + off: s + off + hw]              # (c_in, hw)
                if dw == -1:
                    tap = jnp.where(mask_l, tap, 0.0)
                elif dw == 1:
                    tap = jnp.where(mask_r, tap, 0.0)
                col_ref[k * c_in:(k + 1) * c_in, b * hw:(b + 1) * hw] = tap
        acc = jnp.dot(w_ref[...], col_ref[...], preferred_element_type=f32)
        return jnp.maximum(acc + b_ref[...], 0.0)                       # (c_out, lanes)

    h1 = conv3x3_relu(pad1_ref, col1_ref, w1_ref, b1_ref)               # (Cmid, lanes)

    # Stage conv1's output directly into conv2's zero-haloed buffer.
    cmid = pad2_ref.shape[1]
    for b in range(b_tile):
        pad2_ref[b, :, 0:s] = jnp.zeros((cmid, s), f32)
        pad2_ref[b, :, s + hw:s + hw + s] = jnp.zeros((cmid, s), f32)
        pad2_ref[b, :, s:s + hw] = h1[:, b * hw:(b + 1) * hw]

    y = conv3x3_relu(pad2_ref, col2_ref, w2_ref, b2_ref)                # (Cout, lanes)
    o_ref[0] = y.astype(o_ref.dtype)


@jax.jit
def down_forward(x, w1, b1, w2, b2):
    """Down.forward: MaxPool2d(2) -> Conv3x3(pad=1)+ReLU -> Conv3x3(pad=1)+ReLU.

    x  : (N, Cin, H, W) float32
    w1 : (Cmid, Cin, 3, 3), b1: (Cmid,)
    w2 : (Cout, Cmid, 3, 3), b2: (Cout,)
    returns (N, Cout, H//2, W//2) float32
    """
    N, Cin, H, W = x.shape
    Cmid = w1.shape[0]
    Cout = w2.shape[0]
    Hp, Wp = H // 2, W // 2
    HW = Hp * Wp
    S = Wp + 1

    # Crop to even spatial dims (MaxPool2d floor semantics) and flatten spatial
    # onto the lane axis — a free reshape, no transpose, no pooled HBM tensor.
    x = x[:, :, :Hp * 2, :Wp * 2]
    x_flat = x.reshape(N, Cin, Hp * 2 * Wp * 2)

    # Pack images onto the lane axis until the conv/store lane width >= 128.
    b_tile = N
    for d in range(1, N + 1):
        if N % d == 0 and d * HW >= 128:
            b_tile = d
            break
    n_tiles = N // b_tile
    lanes = b_tile * HW

    # im2col-ordered weights: column index = (kh*3 + kw)*Cin + ic.
    w1_2d = jnp.transpose(w1, (0, 2, 3, 1)).reshape(Cmid, 9 * Cin)
    w2_2d = jnp.transpose(w2, (0, 2, 3, 1)).reshape(Cout, 9 * Cmid)
    b1_col = b1.reshape(Cmid, 1)
    b2_col = b2.reshape(Cout, 1)

    kernel = functools.partial(_down_kernel, b_tile=b_tile, hp=Hp, wp=Wp)

    out = pl.pallas_call(
        kernel,
        out_shape=jax.ShapeDtypeStruct((n_tiles, Cout, lanes), x.dtype),
        grid_spec=pltpu.PrefetchScalarGridSpec(
            num_scalar_prefetch=0,
            grid=(n_tiles,),
            in_specs=[
                pl.BlockSpec((b_tile, Cin, Hp * 2 * Wp * 2), lambda n: (n, 0, 0)),
                pl.BlockSpec((Cmid, 9 * Cin), lambda n: (0, 0)),
                pl.BlockSpec((Cmid, 1), lambda n: (0, 0)),
                pl.BlockSpec((Cout, 9 * Cmid), lambda n: (0, 0)),
                pl.BlockSpec((Cout, 1), lambda n: (0, 0)),
            ],
            out_specs=pl.BlockSpec((1, Cout, lanes), lambda n: (n, 0, 0)),
            scratch_shapes=[
                pltpu.VMEM((b_tile, Cin, HW + 2 * S), jnp.float32),   # pad1
                pltpu.VMEM((9 * Cin, lanes), jnp.float32),            # im2col 1
                pltpu.VMEM((b_tile, Cmid, HW + 2 * S), jnp.float32),  # pad2
                pltpu.VMEM((9 * Cmid, lanes), jnp.float32),           # im2col 2
            ],
        ),
        compiler_params=pltpu.CompilerParams(
            dimension_semantics=("parallel",),
            vmem_limit_bytes=32 * 1024 * 1024,
        ),
    )(x_flat, w1_2d, b1_col, w2_2d, b2_col)

    # Un-pack the lane-dense output slab back to NCHW (cheap layout plumbing
    # at pooled resolution).
    out = out.reshape(n_tiles, Cout, b_tile, Hp, Wp)
    out = jnp.transpose(out, (0, 2, 1, 3, 4)).reshape(N, Cout, Hp, Wp)
    return out


def init_down_params(key, in_channels, out_channels):
    """Deterministic init matching nn.Conv2d(.., kernel_size=3) shapes/bounds."""
    k1, k2, k3, k4 = jax.random.split(key, 4)
    bound1 = 1.0 / jnp.sqrt(in_channels * 9)
    w1 = jax.random.uniform(k1, (out_channels, in_channels, 3, 3),
                            jnp.float32, -bound1, bound1)
    b1 = jax.random.uniform(k2, (out_channels,), jnp.float32, -bound1, bound1)
    bound2 = 1.0 / jnp.sqrt(out_channels * 9)
    w2 = jax.random.uniform(k3, (out_channels, out_channels, 3, 3),
                            jnp.float32, -bound2, bound2)
    b2 = jax.random.uniform(k4, (out_channels,), jnp.float32, -bound2, bound2)
    return w1, b1, w2, b2


def _ref_down(x, w1, b1, w2, b2):
    """Plain-JAX reference (same math as torch MaxPool2d(2) + MultiConv)."""
    N, C, H, W = x.shape
    Hp, Wp = H // 2, W // 2
    x = x[:, :, : Hp * 2, : Wp * 2]
    p = x.reshape(N, C, Hp, 2, Wp, 2).max(axis=(3, 5))
    dn = ("NCHW", "OIHW", "NCHW")
    h = lax.conv_general_dilated(p, w1, (1, 1), "SAME", dimension_numbers=dn,
                                 precision=lax.Precision.HIGHEST)
    h = jnp.maximum(h + b1[None, :, None, None], 0.0)
    y = lax.conv_general_dilated(h, w2, (1, 1), "SAME", dimension_numbers=dn,
                                 precision=lax.Precision.HIGHEST)
    return jnp.maximum(y + b2[None, :, None, None], 0.0)


if __name__ == "__main__":
    key = jax.random.PRNGKey(0)
    k_x, k_p = jax.random.split(key)

    N, Cin, Cout, H, W = 2, 4, 8, 16, 16
    x = jax.random.normal(k_x, (N, Cin, H, W), jnp.float32)
    w1, b1, w2, b2 = init_down_params(k_p, Cin, Cout)

    y = down_forward(x, w1, b1, w2, b2)
    jax.block_until_ready(y)

    ref = _ref_down(x, w1, b1, w2, b2)
    assert y.shape == (N, Cout, H // 2, W // 2)
    err = float(jnp.max(jnp.abs(y - ref)))
    assert jnp.allclose(y, ref, atol=1e-4, rtol=1e-4), f"mismatch vs reference: {err}"

    print("KERNEL_OK")
</pallas_src>

<mosaic_0001>
module attributes {stable_mosaic.version = 11 : i64} {
  func.func @_down_kernel(%arg0: i32, %arg1: memref<2x4x256xf32, #tpu.memory_space<vmem>>, %arg2: memref<8x36xf32, #tpu.memory_space<vmem>>, %arg3: memref<8x1xf32, #tpu.memory_space<vmem>>, %arg4: memref<8x72xf32, #tpu.memory_space<vmem>>, %arg5: memref<8x1xf32, #tpu.memory_space<vmem>>, %arg6: memref<1x8x128xf32, #tpu.memory_space<vmem>>, %arg7: memref<2x4x82xf32, #tpu.memory_space<vmem>>, %arg8: memref<36x128xf32, #tpu.memory_space<vmem>>, %arg9: memref<2x8x82xf32, #tpu.memory_space<vmem>>, %arg10: memref<72x128xf32, #tpu.memory_space<vmem>>) attributes {dimension_semantics = [#tpu.dimension_semantics<parallel>], iteration_bounds = array<i64: 1>, scalar_prefetch = 0 : i64, scratch_operands = 4 : i64, tpu.core_type = #tpu.core_type<tc>, window_params = [{transform_indices = @transform_0, window_bounds = array<i64: 2, 4, 256>}, {pipeline_mode = #tpu.pipeline_mode<synchronous>, transform_indices = @transform_1, window_bounds = array<i64: 8, 36>}, {pipeline_mode = #tpu.pipeline_mode<synchronous>, transform_indices = @transform_2, window_bounds = array<i64: 8, 1>}, {pipeline_mode = #tpu.pipeline_mode<synchronous>, transform_indices = @transform_3, window_bounds = array<i64: 8, 72>}, {pipeline_mode = #tpu.pipeline_mode<synchronous>, transform_indices = @transform_4, window_bounds = array<i64: 8, 1>}, {transform_indices = @transform_5, window_bounds = array<i64: 1, 8, 128>}]} {
    %0 = tpu.iota {dimensions = array<i32: 0>} : vector<16x8xi32>
    %1 = tpu.iota {dimensions = array<i32: 1>} : vector<16x8xi32>
    %c2_i32 = arith.constant 2 : i32
    %2 = vector.broadcast %c2_i32 : i32 to vector<16x8xi32>
    %3 = arith.muli %2, %1 : vector<16x8xi32>
    %4 = arith.cmpi eq, %0, %3 : vector<16x8xi32>
    %5 = arith.extui %4 : vector<16x8xi1> to vector<16x8xi32>
    %6 = arith.sitofp %5 : vector<16x8xi32> to vector<16x8xf32>
    %c2_i32_0 = arith.constant 2 : i32
    %7 = vector.broadcast %c2_i32_0 : i32 to vector<16x8xi32>
    %8 = arith.muli %7, %1 : vector<16x8xi32>
    %c1_i32 = arith.constant 1 : i32
    %9 = vector.broadcast %c1_i32 : i32 to vector<16x8xi32>
    %10 = arith.addi %8, %9 : vector<16x8xi32>
    %11 = arith.cmpi eq, %0, %10 : vector<16x8xi32>
    %12 = arith.extui %11 : vector<16x8xi1> to vector<16x8xi32>
    %13 = arith.sitofp %12 : vector<16x8xi32> to vector<16x8xf32>
    %14 = tpu.iota {dimensions = array<i32: 1>} : vector<1x64xi32>
    %c8_i32 = arith.constant 8 : i32
    %c0_i32 = arith.constant 0 : i32
    %15 = arith.cmpi eq, %c8_i32, %c0_i32 : i32
    %c1_i32_1 = arith.constant 1 : i32
    %16 = arith.select %15, %c1_i32_1, %c8_i32 : i32
    %17 = vector.broadcast %16 : i32 to vector<1x64xi32>
    %18 = arith.remsi %14, %17 : vector<1x64xi32>
    %c0_i32_2 = arith.constant 0 : i32
    %19 = vector.broadcast %c0_i32_2 : i32 to vector<1x64xi32>
    %20 = arith.cmpi ne, %18, %19 : vector<1x64xi32>
    %c0_i32_3 = arith.constant 0 : i32
    %21 = vector.broadcast %c0_i32_3 : i32 to vector<1x64xi32>
    %22 = arith.cmpi slt, %18, %21 : vector<1x64xi32>
    %c0_i32_4 = arith.constant 0 : i32
    %23 = arith.cmpi slt, %16, %c0_i32_4 : i32
    %24 = vector.broadcast %23 : i1 to vector<1x64xi1>
    %25 = vector.broadcast %24 : vector<1x64xi1> to vector<1x64xi1>
    %26 = arith.xori %22, %25 : vector<1x64xi1>
    %27 = arith.andi %26, %20 : vector<1x64xi1>
    %28 = vector.broadcast %16 : i32 to vector<1x64xi32>
    %29 = arith.addi %18, %28 : vector<1x64xi32>
    %30 = arith.select %27, %29, %18 : vector<1x64xi1>, vector<1x64xi32>
    %c1_i32_5 = arith.constant 1 : i32
    %31 = vector.broadcast %c1_i32_5 : i32 to vector<1x64xi32>
    %32 = arith.cmpi sge, %30, %31 : vector<1x64xi32>
    %c6_i32 = arith.constant 6 : i32
    %33 = vector.broadcast %c6_i32 : i32 to vector<1x64xi32>
    %34 = arith.cmpi sle, %30, %33 : vector<1x64xi32>
    %cst = arith.constant 0.000000e+00 : f32
    %35 = vector.broadcast %cst : f32 to vector<4x9xf32>
    %c0 = arith.constant 0 : index
    %c0_6 = arith.constant 0 : index
    %c0_7 = arith.constant 0 : index
    %36 = vector.load %arg7[%c0, %c0_6, %c0_7] : memref<2x4x82xf32, #tpu.memory_space<vmem>>, vector<1x4x9xf32>
    %37 = vector.shape_cast %36 : vector<1x4x9xf32> to vector<4x9xf32>
    %38 = vector.shape_cast %35 : vector<4x9xf32> to vector<1x4x9xf32>
    tpu.vector_store %arg7[%c0, %c0_6, %c0_7], %38 {strides = array<i32>} : memref<2x4x82xf32, #tpu.memory_space<vmem>>, vector<1x4x9xf32>,
    %cst_8 = arith.constant 0.000000e+00 : f32
    %39 = vector.broadcast %cst_8 : f32 to vector<4x9xf32>
    %c0_9 = arith.constant 0 : index
    %c0_10 = arith.constant 0 : index
    %c73 = arith.constant 73 : index
    %40 = vector.load %arg7[%c0_9, %c0_10, %c73] : memref<2x4x82xf32, #tpu.memory_space<vmem>>, vector<1x4x9xf32>
    %41 = vector.shape_cast %40 : vector<1x4x9xf32> to vector<4x9xf32>
    %42 = vector.shape_cast %39 : vector<4x9xf32> to vector<1x4x9xf32>
    tpu.vector_store %arg7[%c0_9, %c0_10, %c73], %42 {strides = array<i32>} : memref<2x4x82xf32, #tpu.memory_space<vmem>>, vector<1x4x9xf32>,
    %c0_11 = arith.constant 0 : index
    %c0_12 = arith.constant 0 : index
    %c0_13 = arith.constant 0 : index
    %43 = vector.load %arg1[%c0_11, %c0_12, %c0_13] : memref<2x4x256xf32, #tpu.memory_space<vmem>>, vector<1x4x16xf32>
    %44 = vector.shape_cast %43 : vector<1x4x16xf32> to vector<4x16xf32>
    %c0_14 = arith.constant 0 : index
    %c0_15 = arith.constant 0 : index
    %c16 = arith.constant 16 : index
    %45 = vector.load %arg1[%c0_14, %c0_15, %c16] : memref<2x4x256xf32, #tpu.memory_space<vmem>>, vector<1x4x16xf32>
    %46 = vector.shape_cast %45 : vector<1x4x16xf32> to vector<4x16xf32>
    %47 = arith.maximumf %44, %46 : vector<4x16xf32>
    %cst_16 = arith.constant dense<0.000000e+00> : vector<4x8xf32>
    %48 = tpu.matmul %47, %6, %cst_16 {dimension_numbers = #tpu.dot_dimension_numbers<[1], [0], [0], [1], [0, 0, 1, 1], [], []>} : vector<4x16xf32>, vector<16x8xf32>, vector<4x8xf32> -> vector<4x8xf32>
    %cst_17 = arith.constant dense<0.000000e+00> : vector<4x8xf32>
    %49 = tpu.matmul %47, %13, %cst_17 {dimension_numbers = #tpu.dot_dimension_numbers<[1], [0], [0], [1], [0, 0, 1, 1], [], []>} : vector<4x16xf32>, vector<16x8xf32>, vector<4x8xf32> -> vector<4x8xf32>
    %50 = arith.maximumf %48, %49 : vector<4x8xf32>
    %c0_18 = arith.constant 0 : index
    %c0_19 = arith.constant 0 : index
    %c9 = arith.constant 9 : index
    %51 = vector.load %arg7[%c0_18, %c0_19, %c9] : memref<2x4x82xf32, #tpu.memory_space<vmem>>, vector<1x4x8xf32>
    %52 = vector.shape_cast %51 : vector<1x4x8xf32> to vector<4x8xf32>
    %53 = vector.shape_cast %50 : vector<4x8xf32> to vector<1x4x8xf32>
    tpu.vector_store %arg7[%c0_18, %c0_19, %c9], %53 {strides = array<i32>} : memref<2x4x82xf32, #tpu.memory_space<vmem>>, vector<1x4x8xf32>,
    %c0_20 = arith.constant 0 : index
    %c0_21 = arith.constant 0 : index
    %c32 = arith.constant 32 : index
    %54 = vector.load %arg1[%c0_20, %c0_21, %c32] : memref<2x4x256xf32, #tpu.memory_space<vmem>>, vector<1x4x16xf32>
    %55 = vector.shape_cast %54 : vector<1x4x16xf32> to vector<4x16xf32>
    %c0_22 = arith.constant 0 : index
    %c0_23 = arith.constant 0 : index
    %c48 = arith.constant 48 : index
    %56 = vector.load %arg1[%c0_22, %c0_23, %c48] : memref<2x4x256xf32, #tpu.memory_space<vmem>>, vector<1x4x16xf32>
    %57 = vector.shape_cast %56 : vector<1x4x16xf32> to vector<4x16xf32>
    %58 = arith.maximumf %55, %57 : vector<4x16xf32>
    %cst_24 = arith.constant dense<0.000000e+00> : vector<4x8xf32>
    %59 = tpu.matmul %58, %6, %cst_24 {dimension_numbers = #tpu.dot_dimension_numbers<[1], [0], [0], [1], [0, 0, 1, 1], [], []>} : vector<4x16xf32>, vector<16x8xf32>, vector<4x8xf32> -> vector<4x8xf32>
    %cst_25 = arith.constant dense<0.000000e+00> : vector<4x8xf32>
    %60 = tpu.matmul %58, %13, %cst_25 {dimension_numbers = #tpu.dot_dimension_numbers<[1], [0], [0], [1], [0, 0, 1, 1], [], []>} : vector<4x16xf32>, vector<16x8xf32>, vector<4x8xf32> -> vector<4x8xf32>
    %61 = arith.maximumf %59, %60 : vector<4x8xf32>
    %c0_26 = arith.constant 0 : index
    %c0_27 = arith.constant 0 : index
    %c17 = arith.constant 17 : index
    %62 = vector.load %arg7[%c0_26, %c0_27, %c17] : memref<2x4x82xf32, #tpu.memory_space<vmem>>, vector<1x4x8xf32>
    %63 = vector.shape_cast %62 : vector<1x4x8xf32> to vector<4x8xf32>
    %64 = vector.shape_cast %61 : vector<4x8xf32> to vector<1x4x8xf32>
    tpu.vector_store %arg7[%c0_26, %c0_27, %c17], %64 {strides = array<i32>} : memref<2x4x82xf32, #tpu.memory_space<vmem>>, vector<1x4x8xf32>,
    %c0_28 = arith.constant 0 : index
    %c0_29 = arith.constant 0 : index
    %c64 = arith.constant 64 : index
    %65 = vector.load %arg1[%c0_28, %c0_29, %c64] : memref<2x4x256xf32, #tpu.memory_space<vmem>>, vector<1x4x16xf32>
    %66 = vector.shape_cast %65 : vector<1x4x16xf32> to vector<4x16xf32>
    %c0_30 = arith.constant 0 : index
    %c0_31 = arith.constant 0 : index
    %c80 = arith.constant 80 : index
    %67 = vector.load %arg1[%c0_30, %c0_31, %c80] : memref<2x4x256xf32, #tpu.memory_space<vmem>>, vector<1x4x16xf32>
    %68 = vector.shape_cast %67 : vector<1x4x16xf32> to vector<4x16xf32>
    %69 = arith.maximumf %66, %68 : vector<4x16xf32>
    %cst_32 = arith.constant dense<0.000000e+00> : vector<4x8xf32>
    %70 = tpu.matmul %69, %6, %cst_32 {dimension_numbers = #tpu.dot_dimension_numbers<[1], [0], [0], [1], [0, 0, 1, 1], [], []>} : vector<4x16xf32>, vector<16x8xf32>, vector<4x8xf32> -> vector<4x8xf32>
    %cst_33 = arith.constant dense<0.000000e+00> : vector<4x8xf32>
    %71 = tpu.matmul %69, %13, %cst_33 {dimension_numbers = #tpu.dot_dimension_numbers<[1], [0], [0], [1], [0, 0, 1, 1], [], []>} : vector<4x16xf32>, vector<16x8xf32>, vector<4x8xf32> -> vector<4x8xf32>
    %72 = arith.maximumf %70, %71 : vector<4x8xf32>
    %c0_34 = arith.constant 0 : index
    %c0_35 = arith.constant 0 : index
    %c25 = arith.constant 25 : index
    %73 = vector.load %arg7[%c0_34, %c0_35, %c25] : memref<2x4x82xf32, #tpu.memory_space<vmem>>, vector<1x4x8xf32>
    %74 = vector.shape_cast %73 : vector<1x4x8xf32> to vector<4x8xf32>
    %75 = vector.shape_cast %72 : vector<4x8xf32> to vector<1x4x8xf32>
    tpu.vector_store %arg7[%c0_34, %c0_35, %c25], %75 {strides = array<i32>} : memref<2x4x82xf32, #tpu.memory_space<vmem>>, vector<1x4x8xf32>,
    %c0_36 = arith.constant 0 : index
    %c0_37 = arith.constant 0 : index
    %c96 = arith.constant 96 : index
    %76 = vector.load %arg1[%c0_36, %c0_37, %c96] : memref<2x4x256xf32, #tpu.memory_space<vmem>>, vector<1x4x16xf32>
    %77 = vector.shape_cast %76 : vector<1x4x16xf32> to vector<4x16xf32>
    %c0_38 = arith.constant 0 : index
    %c0_39 = arith.constant 0 : index
    %c112 = arith.constant 112 : index
    %78 = vector.load %arg1[%c0_38, %c0_39, %c112] : memref<2x4x256xf32, #tpu.memory_space<vmem>>, vector<1x4x16xf32>
    %79 = vector.shape_cast %78 : vector<1x4x16xf32> to vector<4x16xf32>
    %80 = arith.maximumf %77, %79 : vector<4x16xf32>
    %cst_40 = arith.constant dense<0.000000e+00> : vector<4x8xf32>
    %81 = tpu.matmul %80, %6, %cst_40 {dimension_numbers = #tpu.dot_dimension_numbers<[1], [0], [0], [1], [0, 0, 1, 1], [], []>} : vector<4x16xf32>, vector<16x8xf32>, vector<4x8xf32> -> vector<4x8xf32>
    %cst_41 = arith.constant dense<0.000000e+00> : vector<4x8xf32>
    %82 = tpu.matmul %80, %13, %cst_41 {dimension_numbers = #tpu.dot_dimension_numbers<[1], [0], [0], [1], [0, 0, 1, 1], [], []>} : vector<4x16xf32>, vector<16x8xf32>, vector<4x8xf32> -> vector<4x8xf32>
    %83 = arith.maximumf %81, %82 : vector<4x8xf32>
    %c0_42 = arith.constant 0 : index
    %c0_43 = arith.constant 0 : index
    %c33 = arith.constant 33 : index
    %84 = vector.load %arg7[%c0_42, %c0_43, %c33] : memref<2x4x82xf32, #tpu.memory_space<vmem>>, vector<1x4x8xf32>
    %85 = vector.shape_cast %84 : vector<1x4x8xf32> to vector<4x8xf32>
    %86 = vector.shape_cast %83 : vector<4x8xf32> to vector<1x4x8xf32>
    tpu.vector_store %arg7[%c0_42, %c0_43, %c33], %86 {strides = array<i32>} : memref<2x4x82xf32, #tpu.memory_space<vmem>>, vector<1x4x8xf32>,
    %c0_44 = arith.constant 0 : index
    %c0_45 = arith.constant 0 : index
    %c128 = arith.constant 128 : index
    %87 = vector.load %arg1[%c0_44, %c0_45, %c128] : memref<2x4x256xf32, #tpu.memory_space<vmem>>, vector<1x4x16xf32>
    %88 = vector.shape_cast %87 : vector<1x4x16xf32> to vector<4x16xf32>
    %c0_46 = arith.constant 0 : index
    %c0_47 = arith.constant 0 : index
    %c144 = arith.constant 144 : index
    %89 = vector.load %arg1[%c0_46, %c0_47, %c144] : memref<2x4x256xf32, #tpu.memory_space<vmem>>, vector<1x4x16xf32>
    %90 = vector.shape_cast %89 : vector<1x4x16xf32> to vector<4x16xf32>
    %91 = arith.maximumf %88, %90 : vector<4x16xf32>
    %cst_48 = arith.constant dense<0.000000e+00> : vector<4x8xf32>
    %92 = tpu.matmul %91, %6, %cst_48 {dimension_numbers = #tpu.dot_dimension_numbers<[1], [0], [0], [1], [0, 0, 1, 1], [], []>} : vector<4x16xf32>, vector<16x8xf32>, vector<4x8xf32> -> vector<4x8xf32>
    %cst_49 = arith.constant dense<0.000000e+00> : vector<4x8xf32>
    %93 = tpu.matmul %91, %13, %cst_49 {dimension_numbers = #tpu.dot_dimension_numbers<[1], [0], [0], [1], [0, 0, 1, 1], [], []>} : vector<4x16xf32>, vector<16x8xf32>, vector<4x8xf32> -> vector<4x8xf32>
    %94 = arith.maximumf %92, %93 : vector<4x8xf32>
    %c0_50 = arith.constant 0 : index
    %c0_51 = arith.constant 0 : index
    %c41 = arith.constant 41 : index
    %95 = vector.load %arg7[%c0_50, %c0_51, %c41] : memref<2x4x82xf32, #tpu.memory_space<vmem>>, vector<1x4x8xf32>
    %96 = vector.shape_cast %95 : vector<1x4x8xf32> to vector<4x8xf32>
    %97 = vector.shape_cast %94 : vector<4x8xf32> to vector<1x4x8xf32>
    tpu.vector_store %arg7[%c0_50, %c0_51, %c41], %97 {strides = array<i32>} : memref<2x4x82xf32, #tpu.memory_space<vmem>>, vector<1x4x8xf32>,
    %c0_52 = arith.constant 0 : index
    %c0_53 = arith.constant 0 : index
    %c160 = arith.constant 160 : index
    %98 = vector.load %arg1[%c0_52, %c0_53, %c160] : memref<2x4x256xf32, #tpu.memory_space<vmem>>, vector<1x4x16xf32>
    %99 = vector.shape_cast %98 : vector<1x4x16xf32> to vector<4x16xf32>
    %c0_54 = arith.constant 0 : index
    %c0_55 = arith.constant 0 : index
    %c176 = arith.constant 176 : index
    %100 = vector.load %arg1[%c0_54, %c0_55, %c176] : memref<2x4x256xf32, #tpu.memory_space<vmem>>, vector<1x4x16xf32>
    %101 = vector.shape_cast %100 : vector<1x4x16xf32> to vector<4x16xf32>
    %102 = arith.maximumf %99, %101 : vector<4x16xf32>
    %cst_56 = arith.constant dense<0.000000e+00> : vector<4x8xf32>
    %103 = tpu.matmul %102, %6, %cst_56 {dimension_numbers = #tpu.dot_dimension_numbers<[1], [0], [0], [1], [0, 0, 1, 1], [], []>} : vector<4x16xf32>, vector<16x8xf32>, vector<4x8xf32> -> vector<4x8xf32>
    %cst_57 = arith.constant dense<0.000000e+00> : vector<4x8xf32>
    %104 = tpu.matmul %102, %13, %cst_57 {dimension_numbers = #tpu.dot_dimension_numbers<[1], [0], [0], [1], [0, 0, 1, 1], [], []>} : vector<4x16xf32>, vector<16x8xf32>, vector<4x8xf32> -> vector<4x8xf32>
    %105 = arith.maximumf %103, %104 : vector<4x8xf32>
    %c0_58 = arith.constant 0 : index
    %c0_59 = arith.constant 0 : index
    %c49 = arith.constant 49 : index
    %106 = vector.load %arg7[%c0_58, %c0_59, %c49] : memref<2x4x82xf32, #tpu.memory_space<vmem>>, vector<1x4x8xf32>
    %107 = vector.shape_cast %106 : vector<1x4x8xf32> to vector<4x8xf32>
    %108 = vector.shape_cast %105 : vector<4x8xf32> to vector<1x4x8xf32>
    tpu.vector_store %arg7[%c0_58, %c0_59, %c49], %108 {strides = array<i32>} : memref<2x4x82xf32, #tpu.memory_space<vmem>>, vector<1x4x8xf32>,
    %c0_60 = arith.constant 0 : index
    %c0_61 = arith.constant 0 : index
    %c192 = arith.constant 192 : index
    %109 = vector.load %arg1[%c0_60, %c0_61, %c192] : memref<2x4x256xf32, #tpu.memory_space<vmem>>, vector<1x4x16xf32>
    %110 = vector.shape_cast %109 : vector<1x4x16xf32> to vector<4x16xf32>
    %c0_62 = arith.constant 0 : index
    %c0_63 = arith.constant 0 : index
    %c208 = arith.constant 208 : index
    %111 = vector.load %arg1[%c0_62, %c0_63, %c208] : memref<2x4x256xf32, #tpu.memory_space<vmem>>, vector<1x4x16xf32>
    %112 = vector.shape_cast %111 : vector<1x4x16xf32> to vector<4x16xf32>
    %113 = arith.maximumf %110, %112 : vector<4x16xf32>
    %cst_64 = arith.constant dense<0.000000e+00> : vector<4x8xf32>
    %114 = tpu.matmul %113, %6, %cst_64 {dimension_numbers = #tpu.dot_dimension_numbers<[1], [0], [0], [1], [0, 0, 1, 1], [], []>} : vector<4x16xf32>, vector<16x8xf32>, vector<4x8xf32> -> vector<4x8xf32>
    %cst_65 = arith.constant dense<0.000000e+00> : vector<4x8xf32>
    %115 = tpu.matmul %113, %13, %cst_65 {dimension_numbers = #tpu.dot_dimension_numbers<[1], [0], [0], [1], [0, 0, 1, 1], [], []>} : vector<4x16xf32>, vector<16x8xf32>, vector<4x8xf32> -> vector<4x8xf32>
    %116 = arith.maximumf %114, %115 : vector<4x8xf32>
    %c0_66 = arith.constant 0 : index
    %c0_67 = arith.constant 0 : index
    %c57 = arith.constant 57 : index
    %117 = vector.load %arg7[%c0_66, %c0_67, %c57] : memref<2x4x82xf32, #tpu.memory_space<vmem>>, vector<1x4x8xf32>
    %118 = vector.shape_cast %117 : vector<1x4x8xf32> to vector<4x8xf32>
    %119 = vector.shape_cast %116 : vector<4x8xf32> to vector<1x4x8xf32>
    tpu.vector_store %arg7[%c0_66, %c0_67, %c57], %119 {strides = array<i32>} : memref<2x4x82xf32, #tpu.memory_space<vmem>>, vector<1x4x8xf32>,
    %c0_68 = arith.constant 0 : index
    %c0_69 = arith.constant 0 : index
    %c224 = arith.constant 224 : index
    %120 = vector.load %arg1[%c0_68, %c0_69, %c224] : memref<2x4x256xf32, #tpu.memory_space<vmem>>, vector<1x4x16xf32>
    %121 = vector.shape_cast %120 : vector<1x4x16xf32> to vector<4x16xf32>
    %c0_70 = arith.constant 0 : index
    %c0_71 = arith.constant 0 : index
    %c240 = arith.constant 240 : index
    %122 = vector.load %arg1[%c0_70, %c0_71, %c240] : memref<2x4x256xf32, #tpu.memory_space<vmem>>, vector<1x4x16xf32>
    %123 = vector.shape_cast %122 : vector<1x4x16xf32> to vector<4x16xf32>
    %124 = arith.maximumf %121, %123 : vector<4x16xf32>
    %cst_72 = arith.constant dense<0.000000e+00> : vector<4x8xf32>
    %125 = tpu.matmul %124, %6, %cst_72 {dimension_numbers = #tpu.dot_dimension_numbers<[1], [0], [0], [1], [0, 0, 1, 1], [], []>} : vector<4x16xf32>, vector<16x8xf32>, vector<4x8xf32> -> vector<4x8xf32>
    %cst_73 = arith.constant dense<0.000000e+00> : vector<4x8xf32>
    %126 = tpu.matmul %124, %13, %cst_73 {dimension_numbers = #tpu.dot_dimension_numbers<[1], [0], [0], [1], [0, 0, 1, 1], [], []>} : vector<4x16xf32>, vector<16x8xf32>, vector<4x8xf32> -> vector<4x8xf32>
    %127 = arith.maximumf %125, %126 : vector<4x8xf32>
    %c0_74 = arith.constant 0 : index
    %c0_75 = arith.constant 0 : index
    %c65 = arith.constant 65 : index
    %128 = vector.load %arg7[%c0_74, %c0_75, %c65] : memref<2x4x82xf32, #tpu.memory_space<vmem>>, vector<1x4x8xf32>
    %129 = vector.shape_cast %128 : vector<1x4x8xf32> to vector<4x8xf32>
    %130 = vector.shape_cast %127 : vector<4x8xf32> to vector<1x4x8xf32>
    tpu.vector_store %arg7[%c0_74, %c0_75, %c65], %130 {strides = array<i32>} : memref<2x4x82xf32, #tpu.memory_space<vmem>>, vector<1x4x8xf32>,
    %cst_76 = arith.constant 0.000000e+00 : f32
    %131 = vector.broadcast %cst_76 : f32 to vector<4x9xf32>
    %c1 = arith.constant 1 : index
    %c0_77 = arith.constant 0 : index
    %c0_78 = arith.constant 0 : index
    %132 = vector.load %arg7[%c1, %c0_77, %c0_78] : memref<2x4x82xf32, #tpu.memory_space<vmem>>, vector<1x4x9xf32>
    %133 = vector.shape_cast %132 : vector<1x4x9xf32> to vector<4x9xf32>
    %134 = vector.shape_cast %131 : vector<4x9xf32> to vector<1x4x9xf32>
    tpu.vector_store %arg7[%c1, %c0_77, %c0_78], %134 {strides = array<i32>} : memref<2x4x82xf32, #tpu.memory_space<vmem>>, vector<1x4x9xf32>,
    %cst_79 = arith.constant 0.000000e+00 : f32
    %135 = vector.broadcast %cst_79 : f32 to vector<4x9xf32>
    %c1_80 = arith.constant 1 : index
    %c0_81 = arith.constant 0 : index
    %c73_82 = arith.constant 73 : index
    %136 = vector.load %arg7[%c1_80, %c0_81, %c73_82] : memref<2x4x82xf32, #tpu.memory_space<vmem>>, vector<1x4x9xf32>
    %137 = vector.shape_cast %136 : vector<1x4x9xf32> to vector<4x9xf32>
    %138 = vector.shape_cast %135 : vector<4x9xf32> to vector<1x4x9xf32>
    tpu.vector_store %arg7[%c1_80, %c0_81, %c73_82], %138 {strides = array<i32>} : memref<2x4x82xf32, #tpu.memory_space<vmem>>, vector<1x4x9xf32>,
    %c1_83 = arith.constant 1 : index
    %c0_84 = arith.constant 0 : index
    %c0_85 = arith.constant 0 : index
    %139 = vector.load %arg1[%c1_83, %c0_84, %c0_85] : memref<2x4x256xf32, #tpu.memory_space<vmem>>, vector<1x4x16xf32>
    %140 = vector.shape_cast %139 : vector<1x4x16xf32> to vector<4x16xf32>
    %c1_86 = arith.constant 1 : index
    %c0_87 = arith.constant 0 : index
    %c16_88 = arith.constant 16 : index
    %141 = vector.load %arg1[%c1_86, %c0_87, %c16_88] : memref<2x4x256xf32, #tpu.memory_space<vmem>>, vector<1x4x16xf32>
    %142 = vector.shape_cast %141 : vector<1x4x16xf32> to vector<4x16xf32>
    %143 = arith.maximumf %140, %142 : vector<4x16xf32>
    %cst_89 = arith.constant dense<0.000000e+00> : vector<4x8xf32>
    %144 = tpu.matmul %143, %6, %cst_89 {dimension_numbers = #tpu.dot_dimension_numbers<[1], [0], [0], [1], [0, 0, 1, 1], [], []>} : vector<4x16xf32>, vector<16x8xf32>, vector<4x8xf32> -> vector<4x8xf32>
    %cst_90 = arith.constant dense<0.000000e+00> : vector<4x8xf32>
    %145 = tpu.matmul %143, %13, %cst_90 {dimension_numbers = #tpu.dot_dimension_numbers<[1], [0], [0], [1], [0, 0, 1, 1], [], []>} : vector<4x16xf32>, vector<16x8xf32>, vector<4x8xf32> -> vector<4x8xf32>
    %146 = arith.maximumf %144, %145 : vector<4x8xf32>
    %c1_91 = arith.constant 1 : index
    %c0_92 = arith.constant 0 : index
    %c9_93 = arith.constant 9 : index
    %147 = vector.load %arg7[%c1_91, %c0_92, %c9_93] : memref<2x4x82xf32, #tpu.memory_space<vmem>>, vector<1x4x8xf32>
    %148 = vector.shape_cast %147 : vector<1x4x8xf32> to vector<4x8xf32>
    %149 = vector.shape_cast %146 : vector<4x8xf32> to vector<1x4x8xf32>
    tpu.vector_store %arg7[%c1_91, %c0_92, %c9_93], %149 {strides = array<i32>} : memref<2x4x82xf32, #tpu.memory_space<vmem>>, vector<1x4x8xf32>,
    %c1_94 = arith.constant 1 : index
    %c0_95 = arith.constant 0 : index
    %c32_96 = arith.constant 32 : index
    %150 = vector.load %arg1[%c1_94, %c0_95, %c32_96] : memref<2x4x256xf32, #tpu.memory_space<vmem>>, vector<1x4x16xf32>
    %151 = vector.shape_cast %150 : vector<1x4x16xf32> to vector<4x16xf32>
    %c1_97 = arith.constant 1 : index
    %c0_98 = arith.constant 0 : index
    %c48_99 = arith.constant 48 : index
    %152 = vector.load %arg1[%c1_97, %c0_98, %c48_99] : memref<2x4x256xf32, #tpu.memory_space<vmem>>, vector<1x4x16xf32>
    %153 = vector.shape_cast %152 : vector<1x4x16xf32> to vector<4x16xf32>
    %154 = arith.maximumf %151, %153 : vector<4x16xf32>
    %cst_100 = arith.constant dense<0.000000e+00> : vector<4x8xf32>
    %155 = tpu.matmul %154, %6, %cst_100 {dimension_numbers = #tpu.dot_dimension_numbers<[1], [0], [0], [1], [0, 0, 1, 1], [], []>} : vector<4x16xf32>, vector<16x8xf32>, vector<4x8xf32> -> vector<4x8xf32>
    %cst_101 = arith.constant dense<0.000000e+00> : vector<4x8xf32>
    %156 = tpu.matmul %154, %13, %cst_101 {dimension_numbers = #tpu.dot_dimension_numbers<[1], [0], [0], [1], [0, 0, 1, 1], [], []>} : vector<4x16xf32>, vector<16x8xf32>, vector<4x8xf32> -> vector<4x8xf32>
    %157 = arith.maximumf %155, %156 : vector<4x8xf32>
    %c1_102 = arith.constant 1 : index
    %c0_103 = arith.constant 0 : index
    %c17_104 = arith.constant 17 : index
    %158 = vector.load %arg7[%c1_102, %c0_103, %c17_104] : memref<2x4x82xf32, #tpu.memory_space<vmem>>, vector<1x4x8xf32>
    %159 = vector.shape_cast %158 : vector<1x4x8xf32> to vector<4x8xf32>
    %160 = vector.shape_cast %157 : vector<4x8xf32> to vector<1x4x8xf32>
    tpu.vector_store %arg7[%c1_102, %c0_103, %c17_104], %160 {strides = array<i32>} : memref<2x4x82xf32, #tpu.memory_space<vmem>>, vector<1x4x8xf32>,
    %c1_105 = arith.constant 1 : index
    %c0_106 = arith.constant 0 : index
    %c64_107 = arith.constant 64 : index
    %161 = vector.load %arg1[%c1_105, %c0_106, %c64_107] : memref<2x4x256xf32, #tpu.memory_space<vmem>>, vector<1x4x16xf32>
    %162 = vector.shape_cast %161 : vector<1x4x16xf32> to vector<4x16xf32>
    %c1_108 = arith.constant 1 : index
    %c0_109 = arith.constant 0 : index
    %c80_110 = arith.constant 80 : index
    %163 = vector.load %arg1[%c1_108, %c0_109, %c80_110] : memref<2x4x256xf32, #tpu.memory_space<vmem>>, vector<1x4x16xf32>
    %164 = vector.shape_cast %163 : vector<1x4x16xf32> to vector<4x16xf32>
    %165 = arith.maximumf %162, %164 : vector<4x16xf32>
    %cst_111 = arith.constant dense<0.000000e+00> : vector<4x8xf32>
    %166 = tpu.matmul %165, %6, %cst_111 {dimension_numbers = #tpu.dot_dimension_numbers<[1], [0], [0], [1], [0, 0, 1, 1], [], []>} : vector<4x16xf32>, vector<16x8xf32>, vector<4x8xf32> -> vector<4x8xf32>
    %cst_112 = arith.constant dense<0.000000e+00> : vector<4x8xf32>
    %167 = tpu.matmul %165, %13, %cst_112 {dimension_numbers = #tpu.dot_dimension_numbers<[1], [0], [0], [1], [0, 0, 1, 1], [], []>} : vector<4x16xf32>, vector<16x8xf32>, vector<4x8xf32> -> vector<4x8xf32>
    %168 = arith.maximumf %166, %167 : vector<4x8xf32>
    %c1_113 = arith.constant 1 : index
    %c0_114 = arith.constant 0 : index
    %c25_115 = arith.constant 25 : index
    %169 = vector.load %arg7[%c1_113, %c0_114, %c25_115] : memref<2x4x82xf32, #tpu.memory_space<vmem>>, vector<1x4x8xf32>
    %170 = vector.shape_cast %169 : vector<1x4x8xf32> to vector<4x8xf32>
    %171 = vector.shape_cast %168 : vector<4x8xf32> to vector<1x4x8xf32>
    tpu.vector_store %arg7[%c1_113, %c0_114, %c25_115], %171 {strides = array<i32>} : memref<2x4x82xf32, #tpu.memory_space<vmem>>, vector<1x4x8xf32>,
    %c1_116 = arith.constant 1 : index
    %c0_117 = arith.constant 0 : index
    %c96_118 = arith.constant 96 : index
    %172 = vector.load %arg1[%c1_116, %c0_117, %c96_118] : memref<2x4x256xf32, #tpu.memory_space<vmem>>, vector<1x4x16xf32>
    %173 = vector.shape_cast %172 : vector<1x4x16xf32> to vector<4x16xf32>
    %c1_119 = arith.constant 1 : index
    %c0_120 = arith.constant 0 : index
    %c112_121 = arith.constant 112 : index
    %174 = vector.load %arg1[%c1_119, %c0_120, %c112_121] : memref<2x4x256xf32, #tpu.memory_space<vmem>>, vector<1x4x16xf32>
    %175 = vector.shape_cast %174 : vector<1x4x16xf32> to vector<4x16xf32>
    %176 = arith.maximumf %173, %175 : vector<4x16xf32>
    %cst_122 = arith.constant dense<0.000000e+00> : vector<4x8xf32>
    %177 = tpu.matmul %176, %6, %cst_122 {dimension_numbers = #tpu.dot_dimension_numbers<[1], [0], [0], [1], [0, 0, 1, 1], [], []>} : vector<4x16xf32>, vector<16x8xf32>, vector<4x8xf32> -> vector<4x8xf32>
    %cst_123 = arith.constant dense<0.000000e+00> : vector<4x8xf32>
    %178 = tpu.matmul %176, %13, %cst_123 {dimension_numbers = #tpu.dot_dimension_numbers<[1], [0], [0], [1], [0, 0, 1, 1], [], []>} : vector<4x16xf32>, vector<16x8xf32>, vector<4x8xf32> -> vector<4x8xf32>
    %179 = arith.maximumf %177, %178 : vector<4x8xf32>
    %c1_124 = arith.constant 1 : index
    %c0_125 = arith.constant 0 : index
    %c33_126 = arith.constant 33 : index
    %180 = vector.load %arg7[%c1_124, %c0_125, %c33_126] : memref<2x4x82xf32, #tpu.memory_space<vmem>>, vector<1x4x8xf32>
    %181 = vector.shape_cast %180 : vector<1x4x8xf32> to vector<4x8xf32>
    %182 = vector.shape_cast %179 : vector<4x8xf32> to vector<1x4x8xf32>
    tpu.vector_store %arg7[%c1_124, %c0_125, %c33_126], %182 {strides = array<i32>} : memref<2x4x82xf32, #tpu.memory_space<vmem>>, vector<1x4x8xf32>,
    %c1_127 = arith.constant 1 : index
    %c0_128 = arith.constant 0 : index
    %c128_129 = arith.constant 128 : index
    %183 = vector.load %arg1[%c1_127, %c0_128, %c128_129] : memref<2x4x256xf32, #tpu.memory_space<vmem>>, vector<1x4x16xf32>
    %184 = vector.shape_cast %183 : vector<1x4x16xf32> to vector<4x16xf32>
    %c1_130 = arith.constant 1 : index
    %c0_131 = arith.constant 0 : index
    %c144_132 = arith.constant 144 : index
    %185 = vector.load %arg1[%c1_130, %c0_131, %c144_132] : memref<2x4x256xf32, #tpu.memory_space<vmem>>, vector<1x4x16xf32>
    %186 = vector.shape_cast %185 : vector<1x4x16xf32> to vector<4x16xf32>
    %187 = arith.maximumf %184, %186 : vector<4x16xf32>
    %cst_133 = arith.constant dense<0.000000e+00> : vector<4x8xf32>
    %188 = tpu.matmul %187, %6, %cst_133 {dimension_numbers = #tpu.dot_dimension_numbers<[1], [0], [0], [1], [0, 0, 1, 1], [], []>} : vector<4x16xf32>, vector<16x8xf32>, vector<4x8xf32> -> vector<4x8xf32>
    %cst_134 = arith.constant dense<0.000000e+00> : vector<4x8xf32>
    %189 = tpu.matmul %187, %13, %cst_134 {dimension_numbers = #tpu.dot_dimension_numbers<[1], [0], [0], [1], [0, 0, 1, 1], [], []>} : vector<4x16xf32>, vector<16x8xf32>, vector<4x8xf32> -> vector<4x8xf32>
    %190 = arith.maximumf %188, %189 : vector<4x8xf32>
    %c1_135 = arith.constant 1 : index
    %c0_136 = arith.constant 0 : index
    %c41_137 = arith.constant 41 : index
    %191 = vector.load %arg7[%c1_135, %c0_136, %c41_137] : memref<2x4x82xf32, #tpu.memory_space<vmem>>, vector<1x4x8xf32>
    %192 = vector.shape_cast %191 : vector<1x4x8xf32> to vector<4x8xf32>
    %193 = vector.shape_cast %190 : vector<4x8xf32> to vector<1x4x8xf32>
    tpu.vector_store %arg7[%c1_135, %c0_136, %c41_137], %193 {strides = array<i32>} : memref<2x4x82xf32, #tpu.memory_space<vmem>>, vector<1x4x8xf32>,
    %c1_138 = arith.constant 1 : index
    %c0_139 = arith.constant 0 : index
    %c160_140 = arith.constant 160 : index
    %194 = vector.load %arg1[%c1_138, %c0_139, %c160_140] : memref<2x4x256xf32, #tpu.memory_space<vmem>>, vector<1x4x16xf32>
    %195 = vector.shape_cast %194 : vector<1x4x16xf32> to vector<4x16xf32>
    %c1_141 = arith.constant 1 : index
    %c0_142 = arith.constant 0 : index
    %c176_143 = arith.constant 176 : index
    %196 = vector.load %arg1[%c1_141, %c0_142, %c176_143] : memref<2x4x256xf32, #tpu.memory_space<vmem>>, vector<1x4x16xf32>
    %197 = vector.shape_cast %196 : vector<1x4x16xf32> to vector<4x16xf32>
    %198 = arith.maximumf %195, %197 : vector<4x16xf32>
    %cst_144 = arith.constant dense<0.000000e+00> : vector<4x8xf32>
    %199 = tpu.matmul %198, %6, %cst_144 {dimension_numbers = #tpu.dot_dimension_numbers<[1], [0], [0], [1], [0, 0, 1, 1], [], []>} : vector<4x16xf32>, vector<16x8xf32>, vector<4x8xf32> -> vector<4x8xf32>
    %cst_145 = arith.constant dense<0.000000e+00> : vector<4x8xf32>
    %200 = tpu.matmul %198, %13, %cst_145 {dimension_numbers = #tpu.dot_dimension_numbers<[1], [0], [0], [1], [0, 0, 1, 1], [], []>} : vector<4x16xf32>, vector<16x8xf32>, vector<4x8xf32> -> vector<4x8xf32>
    %201 = arith.maximumf %199, %200 : vector<4x8xf32>
    %c1_146 = arith.constant 1 : index
    %c0_147 = arith.constant 0 : index
    %c49_148 = arith.constant 49 : index
    %202 = vector.load %arg7[%c1_146, %c0_147, %c49_148] : memref<2x4x82xf32, #tpu.memory_space<vmem>>, vector<1x4x8xf32>
    %203 = vector.shape_cast %202 : vector<1x4x8xf32> to vector<4x8xf32>
    %204 = vector.shape_cast %201 : vector<4x8xf32> to vector<1x4x8xf32>
    tpu.vector_store %arg7[%c1_146, %c0_147, %c49_148], %204 {strides = array<i32>} : memref<2x4x82xf32, #tpu.memory_space<vmem>>, vector<1x4x8xf32>,
    %c1_149 = arith.constant 1 : index
    %c0_150 = arith.constant 0 : index
    %c192_151 = arith.constant 192 : index
    %205 = vector.load %arg1[%c1_149, %c0_150, %c192_151] : memref<2x4x256xf32, #tpu.memory_space<vmem>>, vector<1x4x16xf32>
    %206 = vector.shape_cast %205 : vector<1x4x16xf32> to vector<4x16xf32>
    %c1_152 = arith.constant 1 : index
    %c0_153 = arith.constant 0 : index
    %c208_154 = arith.constant 208 : index
    %207 = vector.load %arg1[%c1_152, %c0_153, %c208_154] : memref<2x4x256xf32, #tpu.memory_space<vmem>>, vector<1x4x16xf32>
    %208 = vector.shape_cast %207 : vector<1x4x16xf32> to vector<4x16xf32>
    %209 = arith.maximumf %206, %208 : vector<4x16xf32>
    %cst_155 = arith.constant dense<0.000000e+00> : vector<4x8xf32>
    %210 = tpu.matmul %209, %6, %cst_155 {dimension_numbers = #tpu.dot_dimension_numbers<[1], [0], [0], [1], [0, 0, 1, 1], [], []>} : vector<4x16xf32>, vector<16x8xf32>, vector<4x8xf32> -> vector<4x8xf32>
    %cst_156 = arith.constant dense<0.000000e+00> : vector<4x8xf32>
    %211 = tpu.matmul %209, %13, %cst_156 {dimension_numbers = #tpu.dot_dimension_numbers<[1], [0], [0], [1], [0, 0, 1, 1], [], []>} : vector<4x16xf32>, vector<16x8xf32>, vector<4x8xf32> -> vector<4x8xf32>
    %212 = arith.maximumf %210, %211 : vector<4x8xf32>
    %c1_157 = arith.constant 1 : index
    %c0_158 = arith.constant 0 : index
    %c57_159 = arith.constant 57 : index
    %213 = vector.load %arg7[%c1_157, %c0_158, %c57_159] : memref<2x4x82xf32, #tpu.memory_space<vmem>>, vector<1x4x8xf32>
    %214 = vector.shape_cast %213 : vector<1x4x8xf32> to vector<4x8xf32>
    %215 = vector.shape_cast %212 : vector<4x8xf32> to vector<1x4x8xf32>
    tpu.vector_store %arg7[%c1_157, %c0_158, %c57_159], %215 {strides = array<i32>} : memref<2x4x82xf32, #tpu.memory_space<vmem>>, vector<1x4x8xf32>,
    %c1_160 = arith.constant 1 : index
    %c0_161 = arith.constant 0 : index
    %c224_162 = arith.constant 224 : index
    %216 = vector.load %arg1[%c1_160, %c0_161, %c224_162] : memref<2x4x256xf32, #tpu.memory_space<vmem>>, vector<1x4x16xf32>
    %217 = vector.shape_cast %216 : vector<1x4x16xf32> to vector<4x16xf32>
    %c1_163 = arith.constant 1 : index
    %c0_164 = arith.constant 0 : index
    %c240_165 = arith.constant 240 : index
    %218 = vector.load %arg1[%c1_163, %c0_164, %c240_165] : memref<2x4x256xf32, #tpu.memory_space<vmem>>, vector<1x4x16xf32>
    %219 = vector.shape_cast %218 : vector<1x4x16xf32> to vector<4x16xf32>
    %220 = arith.maximumf %217, %219 : vector<4x16xf32>
    %cst_166 = arith.constant dense<0.000000e+00> : vector<4x8xf32>
    %221 = tpu.matmul %220, %6, %cst_166 {dimension_numbers = #tpu.dot_dimension_numbers<[1], [0], [0], [1], [0, 0, 1, 1], [], []>} : vector<4x16xf32>, vector<16x8xf32>, vector<4x8xf32> -> vector<4x8xf32>
    %cst_167 = arith.constant dense<0.000000e+00> : vector<4x8xf32>
    %222 = tpu.matmul %220, %13, %cst_167 {dimension_numbers = #tpu.dot_dimension_numbers<[1], [0], [0], [1], [0, 0, 1, 1], [], []>} : vector<4x16xf32>, vector<16x8xf32>, vector<4x8xf32> -> vector<4x8xf32>
    %223 = arith.maximumf %221, %222 : vector<4x8xf32>
    %c1_168 = arith.constant 1 : index
    %c0_169 = arith.constant 0 : index
    %c65_170 = arith.constant 65 : index
    %224 = vector.load %arg7[%c1_168, %c0_169, %c65_170] : memref<2x4x82xf32, #tpu.memory_space<vmem>>, vector<1x4x8xf32>
    %225 = vector.shape_cast %224 : vector<1x4x8xf32> to vector<4x8xf32>
    %226 = vector.shape_cast %223 : vector<4x8xf32> to vector<1x4x8xf32>
    tpu.vector_store %arg7[%c1_168, %c0_169, %c65_170], %226 {strides = array<i32>} : memref<2x4x82xf32, #tpu.memory_space<vmem>>, vector<1x4x8xf32>,
    %c0_171 = arith.constant 0 : index
    %c0_172 = arith.constant 0 : index
    %c0_173 = arith.constant 0 : index
    %227 = vector.load %arg7[%c0_171, %c0_172, %c0_173] : memref<2x4x82xf32, #tpu.memory_space<vmem>>, vector<1x4x64xf32>
    %228 = vector.shape_cast %227 : vector<1x4x64xf32> to vector<4x64xf32>
    %cst_174 = arith.constant 0.000000e+00 : f32
    %229 = vector.shape_cast %32 : vector<1x64xi1> to vector<1x64xi1>
    %230 = vector.broadcast %229 : vector<1x64xi1> to vector<4x64xi1>
    %231 = vector.broadcast %cst_174 : f32 to vector<4x64xf32>
    %232 = arith.select %230, %228, %231 : vector<4x64xi1>, vector<4x64xf32>
    %c0_175 = arith.constant 0 : index
    %c0_176 = arith.constant 0 : index
    %233 = vector.load %arg8[%c0_175, %c0_176] : memref<36x128xf32, #tpu.memory_space<vmem>>, vector<4x64xf32>
    tpu.vector_store %arg8[%c0_175, %c0_176], %232 {strides = array<i32>} : memref<36x128xf32, #tpu.memory_space<vmem>>, vector<4x64xf32>,
    %c0_177 = arith.constant 0 : index
    %c0_178 = arith.constant 0 : index
    %c1_179 = arith.constant 1 : index
    %234 = vector.load %arg7[%c0_177, %c0_178, %c1_179] : memref<2x4x82xf32, #tpu.memory_space<vmem>>, vector<1x4x64xf32>
    %235 = vector.shape_cast %234 : vector<1x4x64xf32> to vector<4x64xf32>
    %c4 = arith.constant 4 : index
    %c0_180 = arith.constant 0 : index
    %236 = vector.load %arg8[%c4, %c0_180] : memref<36x128xf32, #tpu.memory_space<vmem>>, vector<4x64xf32>
    tpu.vector_store %arg8[%c4, %c0_180], %235 {strides = array<i32>} : memref<36x128xf32, #tpu.memory_space<vmem>>, vector<4x64xf32>,
    %c0_181 = arith.constant 0 : index
    %c0_182 = arith.constant 0 : index
    %c2 = arith.constant 2 : index
    %237 = vector.load %arg7[%c0_181, %c0_182, %c2] : memref<2x4x82xf32, #tpu.memory_space<vmem>>, vector<1x4x64xf32>
    %238 = vector.shape_cast %237 : vector<1x4x64xf32> to vector<4x64xf32>
    %cst_183 = arith.constant 0.000000e+00 : f32
    %239 = vector.shape_cast %34 : vector<1x64xi1> to vector<1x64xi1>
    %240 = vector.broadcast %239 : vector<1x64xi1> to vector<4x64xi1>
    %241 = vector.broadcast %cst_183 : f32 to vector<4x64xf32>
    %242 = arith.select %240, %238, %241 : vector<4x64xi1>, vector<4x64xf32>
    %c8 = arith.constant 8 : index
    %c0_184 = arith.constant 0 : index
    %243 = vector.load %arg8[%c8, %c0_184] : memref<36x128xf32, #tpu.memory_space<vmem>>, vector<4x64xf32>
    tpu.vector_store %arg8[%c8, %c0_184], %242 {strides = array<i32>} : memref<36x128xf32, #tpu.memory_space<vmem>>, vector<4x64xf32>,
    %c0_185 = arith.constant 0 : index
    %c0_186 = arith.constant 0 : index
    %c8_187 = arith.constant 8 : index
    %244 = vector.load %arg7[%c0_185, %c0_186, %c8_187] : memref<2x4x82xf32, #tpu.memory_space<vmem>>, vector<1x4x64xf32>
    %245 = vector.shape_cast %244 : vector<1x4x64xf32> to vector<4x64xf32>
    %cst_188 = arith.constant 0.000000e+00 : f32
    %246 = vector.shape_cast %32 : vector<1x64xi1> to vector<1x64xi1>
    %247 = vector.broadcast %246 : vector<1x64xi1> to vector<4x64xi1>
    %248 = vector.broadcast %cst_188 : f32 to vector<4x64xf32>
    %249 = arith.select %247, %245, %248 : vector<4x64xi1>, vector<4x64xf32>
    %c12 = arith.constant 12 : index
    %c0_189 = arith.constant 0 : index
    %250 = vector.load %arg8[%c12, %c0_189] : memref<36x128xf32, #tpu.memory_space<vmem>>, vector<4x64xf32>
    tpu.vector_store %arg8[%c12, %c0_189], %249 {strides = array<i32>} : memref<36x128xf32, #tpu.memory_space<vmem>>, vector<4x64xf32>,
    %c0_190 = arith.constant 0 : index
    %c0_191 = arith.constant 0 : index
    %c9_192 = arith.constant 9 : index
    %251 = vector.load %arg7[%c0_190, %c0_191, %c9_192] : memref<2x4x82xf32, #tpu.memory_space<vmem>>, vector<1x4x64xf32>
    %252 = vector.shape_cast %251 : vector<1x4x64xf32> to vector<4x64xf32>
    %c16_193 = arith.constant 16 : index
    %c0_194 = arith.constant 0 : index
    %253 = vector.load %arg8[%c16_193, %c0_194] : memref<36x128xf32, #tpu.memory_space<vmem>>, vector<4x64xf32>
    tpu.vector_store %arg8[%c16_193, %c0_194], %252 {strides = array<i32>} : memref<36x128xf32, #tpu.memory_space<vmem>>, vector<4x64xf32>,
    %c0_195 = arith.constant 0 : index
    %c0_196 = arith.constant 0 : index
    %c10 = arith.constant 10 : index
    %254 = vector.load %arg7[%c0_195, %c0_196, %c10] : memref<2x4x82xf32, #tpu.memory_space<vmem>>, vector<1x4x64xf32>
    %255 = vector.shape_cast %254 : vector<1x4x64xf32> to vector<4x64xf32>
    %cst_197 = arith.constant 0.000000e+00 : f32
    %256 = vector.shape_cast %34 : vector<1x64xi1> to vector<1x64xi1>
    %257 = vector.broadcast %256 : vector<1x64xi1> to vector<4x64xi1>
    %258 = vector.broadcast %cst_197 : f32 to vector<4x64xf32>
    %259 = arith.select %257, %255, %258 : vector<4x64xi1>, vector<4x64xf32>
    %c20 = arith.constant 20 : index
    %c0_198 = arith.constant 0 : index
    %260 = vector.load %arg8[%c20, %c0_198] : memref<36x128xf32, #tpu.memory_space<vmem>>, vector<4x64xf32>
    tpu.vector_store %arg8[%c20, %c0_198], %259 {strides = array<i32>} : memref<36x128xf32, #tpu.memory_space<vmem>>, vector<4x64xf32>,
    %c0_199 = arith.constant 0 : index
    %c0_200 = arith.constant 0 : index
    %c16_201 = arith.constant 16 : index
    %261 = vector.load %arg7[%c0_199, %c0_200, %c16_201] : memref<2x4x82xf32, #tpu.memory_space<vmem>>, vector<1x4x64xf32>
    %262 = vector.shape_cast %261 : vector<1x4x64xf32> to vector<4x64xf32>
    %cst_202 = arith.constant 0.000000e+00 : f32
    %263 = vector.shape_cast %32 : vector<1x64xi1> to vector<1x64xi1>
    %264 = vector.broadcast %263 : vector<1x64xi1> to vector<4x64xi1>
    %265 = vector.broadcast %cst_202 : f32 to vector<4x64xf32>
    %266 = arith.select %264, %262, %265 : vector<4x64xi1>, vector<4x64xf32>
    %c24 = arith.constant 24 : index
    %c0_203 = arith.constant 0 : index
    %267 = vector.load %arg8[%c24, %c0_203] : memref<36x128xf32, #tpu.memory_space<vmem>>, vector<4x64xf32>
    tpu.vector_store %arg8[%c24, %c0_203], %266 {strides = array<i32>} : memref<36x128xf32, #tpu.memory_space<vmem>>, vector<4x64xf32>,
    %c0_204 = arith.constant 0 : index
    %c0_205 = arith.constant 0 : index
    %c17_206 = arith.constant 17 : index
    %268 = vector.load %arg7[%c0_204, %c0_205, %c17_206] : memref<2x4x82xf32, #tpu.memory_space<vmem>>, vector<1x4x64xf32>
    %269 = vector.shape_cast %268 : vector<1x4x64xf32> to vector<4x64xf32>
    %c28 = arith.constant 28 : index
    %c0_207 = arith.constant 0 : index
    %270 = vector.load %arg8[%c28, %c0_207] : memref<36x128xf32, #tpu.memory_space<vmem>>, vector<4x64xf32>
    tpu.vector_store %arg8[%c28, %c0_207], %269 {strides = array<i32>} : memref<36x128xf32, #tpu.memory_space<vmem>>, vector<4x64xf32>,
    %c0_208 = arith.constant 0 : index
    %c0_209 = arith.constant 0 : index
    %c18 = arith.constant 18 : index
    %271 = vector.load %arg7[%c0_208, %c0_209, %c18] : memref<2x4x82xf32, #tpu.memory_space<vmem>>, vector<1x4x64xf32>
    %272 = vector.shape_cast %271 : vector<1x4x64xf32> to vector<4x64xf32>
    %cst_210 = arith.constant 0.000000e+00 : f32
    %273 = vector.shape_cast %34 : vector<1x64xi1> to vector<1x64xi1>
    %274 = vector.broadcast %273 : vector<1x64xi1> to vector<4x64xi1>
    %275 = vector.broadcast %cst_210 : f32 to vector<4x64xf32>
    %276 = arith.select %274, %272, %275 : vector<4x64xi1>, vector<4x64xf32>
    %c32_211 = arith.constant 32 : index
    %c0_212 = arith.constant 0 : index
    %277 = vector.load %arg8[%c32_211, %c0_212] : memref<36x128xf32, #tpu.memory_space<vmem>>, vector<4x64xf32>
    tpu.vector_store %arg8[%c32_211, %c0_212], %276 {strides = array<i32>} : memref<36x128xf32, #tpu.memory_space<vmem>>, vector<4x64xf32>,
    %c1_213 = arith.constant 1 : index
    %c0_214 = arith.constant 0 : index
    %c0_215 = arith.constant 0 : index
    %278 = vector.load %arg7[%c1_213, %c0_214, %c0_215] : memref<2x4x82xf32, #tpu.memory_space<vmem>>, vector<1x4x64xf32>
    %279 = vector.shape_cast %278 : vector<1x4x64xf32> to vector<4x64xf32>
    %cst_216 = arith.constant 0.000000e+00 : f32
    %280 = vector.shape_cast %32 : vector<1x64xi1> to vector<1x64xi1>
    %281 = vector.broadcast %280 : vector<1x64xi1> to vector<4x64xi1>
    %282 = vector.broadcast %cst_216 : f32 to vector<4x64xf32>
    %283 = arith.select %281, %279, %282 : vector<4x64xi1>, vector<4x64xf32>
    %c0_217 = arith.constant 0 : index
    %c64_218 = arith.constant 64 : index
    %284 = vector.load %arg8[%c0_217, %c64_218] : memref<36x128xf32, #tpu.memory_space<vmem>>, vector<4x64xf32>
    tpu.vector_store %arg8[%c0_217, %c64_218], %283 {strides = array<i32>} : memref<36x128xf32, #tpu.memory_space<vmem>>, vector<4x64xf32>,
    %c1_219 = arith.constant 1 : index
    %c0_220 = arith.constant 0 : index
    %c1_221 = arith.constant 1 : index
    %285 = vector.load %arg7[%c1_219, %c0_220, %c1_221] : memref<2x4x82xf32, #tpu.memory_space<vmem>>, vector<1x4x64xf32>
    %286 = vector.shape_cast %285 : vector<1x4x64xf32> to vector<4x64xf32>
    %c4_222 = arith.constant 4 : index
    %c64_223 = arith.constant 64 : index
    %287 = vector.load %arg8[%c4_222, %c64_223] : memref<36x128xf32, #tpu.memory_space<vmem>>, vector<4x64xf32>
    tpu.vector_store %arg8[%c4_222, %c64_223], %286 {strides = array<i32>} : memref<36x128xf32, #tpu.memory_space<vmem>>, vector<4x64xf32>,
    %c1_224 = arith.constant 1 : index
    %c0_225 = arith.constant 0 : index
    %c2_226 = arith.constant 2 : index
    %288 = vector.load %arg7[%c1_224, %c0_225, %c2_226] : memref<2x4x82xf32, #tpu.memory_space<vmem>>, vector<1x4x64xf32>
    %289 = vector.shape_cast %288 : vector<1x4x64xf32> to vector<4x64xf32>
    %cst_227 = arith.constant 0.000000e+00 : f32
    %290 = vector.shape_cast %34 : vector<1x64xi1> to vector<1x64xi1>
    %291 = vector.broadcast %290 : vector<1x64xi1> to vector<4x64xi1>
    %292 = vector.broadcast %cst_227 : f32 to vector<4x64xf32>
    %293 = arith.select %291, %289, %292 : vector<4x64xi1>, vector<4x64xf32>
    %c8_228 = arith.constant 8 : index
    %c64_229 = arith.constant 64 : index
    %294 = vector.load %arg8[%c8_228, %c64_229] : memref<36x128xf32, #tpu.memory_space<vmem>>, vector<4x64xf32>
    tpu.vector_store %arg8[%c8_228, %c64_229], %293 {strides = array<i32>} : memref<36x128xf32, #tpu.memory_space<vmem>>, vector<4x64xf32>,
    %c1_230 = arith.constant 1 : index
    %c0_231 = arith.constant 0 : index
    %c8_232 = arith.constant 8 : index
    %295 = vector.load %arg7[%c1_230, %c0_231, %c8_232] : memref<2x4x82xf32, #tpu.memory_space<vmem>>, vector<1x4x64xf32>
    %296 = vector.shape_cast %295 : vector<1x4x64xf32> to vector<4x64xf32>
    %cst_233 = arith.constant 0.000000e+00 : f32
    %297 = vector.shape_cast %32 : vector<1x64xi1> to vector<1x64xi1>
    %298 = vector.broadcast %297 : vector<1x64xi1> to vector<4x64xi1>
    %299 = vector.broadcast %cst_233 : f32 to vector<4x64xf32>
    %300 = arith.select %298, %296, %299 : vector<4x64xi1>, vector<4x64xf32>
    %c12_234 = arith.constant 12 : index
    %c64_235 = arith.constant 64 : index
    %301 = vector.load %arg8[%c12_234, %c64_235] : memref<36x128xf32, #tpu.memory_space<vmem>>, vector<4x64xf32>
    tpu.vector_store %arg8[%c12_234, %c64_235], %300 {strides = array<i32>} : memref<36x128xf32, #tpu.memory_space<vmem>>, vector<4x64xf32>,
    %c1_236 = arith.constant 1 : index
    %c0_237 = arith.constant 0 : index
    %c9_238 = arith.constant 9 : index
    %302 = vector.load %arg7[%c1_236, %c0_237, %c9_238] : memref<2x4x82xf32, #tpu.memory_space<vmem>>, vector<1x4x64xf32>
    %303 = vector.shape_cast %302 : vector<1x4x64xf32> to vector<4x64xf32>
    %c16_239 = arith.constant 16 : index
    %c64_240 = arith.constant 64 : index
    %304 = vector.load %arg8[%c16_239, %c64_240] : memref<36x128xf32, #tpu.memory_space<vmem>>, vector<4x64xf32>
    tpu.vector_store %arg8[%c16_239, %c64_240], %303 {strides = array<i32>} : memref<36x128xf32, #tpu.memory_space<vmem>>, vector<4x64xf32>,
    %c1_241 = arith.constant 1 : index
    %c0_242 = arith.constant 0 : index
    %c10_243 = arith.constant 10 : index
    %305 = vector.load %arg7[%c1_241, %c0_242, %c10_243] : memref<2x4x82xf32, #tpu.memory_space<vmem>>, vector<1x4x64xf32>
    %306 = vector.shape_cast %305 : vector<1x4x64xf32> to vector<4x64xf32>
    %cst_244 = arith.constant 0.000000e+00 : f32
    %307 = vector.shape_cast %34 : vector<1x64xi1> to vector<1x64xi1>
    %308 = vector.broadcast %307 : vector<1x64xi1> to vector<4x64xi1>
    %309 = vector.broadcast %cst_244 : f32 to vector<4x64xf32>
    %310 = arith.select %308, %306, %309 : vector<4x64xi1>, vector<4x64xf32>
    %c20_245 = arith.constant 20 : index
    %c64_246 = arith.constant 64 : index
    %311 = vector.load %arg8[%c20_245, %c64_246] : memref<36x128xf32, #tpu.memory_space<vmem>>, vector<4x64xf32>
    tpu.vector_store %arg8[%c20_245, %c64_246], %310 {strides = array<i32>} : memref<36x128xf32, #tpu.memory_space<vmem>>, vector<4x64xf32>,
    %c1_247 = arith.constant 1 : index
    %c0_248 = arith.constant 0 : index
    %c16_249 = arith.constant 16 : index
    %312 = vector.load %arg7[%c1_247, %c0_248, %c16_249] : memref<2x4x82xf32, #tpu.memory_space<vmem>>, vector<1x4x64xf32>
    %313 = vector.shape_cast %312 : vector<1x4x64xf32> to vector<4x64xf32>
    %cst_250 = arith.constant 0.000000e+00 : f32
    %314 = vector.shape_cast %32 : vector<1x64xi1> to vector<1x64xi1>
    %315 = vector.broadcast %314 : vector<1x64xi1> to vector<4x64xi1>
    %316 = vector.broadcast %cst_250 : f32 to vector<4x64xf32>
    %317 = arith.select %315, %313, %316 : vector<4x64xi1>, vector<4x64xf32>
    %c24_251 = arith.constant 24 : index
    %c64_252 = arith.constant 64 : index
    %318 = vector.load %arg8[%c24_251, %c64_252] : memref<36x128xf32, #tpu.memory_space<vmem>>, vector<4x64xf32>
    tpu.vector_store %arg8[%c24_251, %c64_252], %317 {strides = array<i32>} : memref<36x128xf32, #tpu.memory_space<vmem>>, vector<4x64xf32>,
    %c1_253 = arith.constant 1 : index
    %c0_254 = arith.constant 0 : index
    %c17_255 = arith.constant 17 : index
    %319 = vector.load %arg7[%c1_253, %c0_254, %c17_255] : memref<2x4x82xf32, #tpu.memory_space<vmem>>, vector<1x4x64xf32>
    %320 = vector.shape_cast %319 : vector<1x4x64xf32> to vector<4x64xf32>
    %c28_256 = arith.constant 28 : index
    %c64_257 = arith.constant 64 : index
    %321 = vector.load %arg8[%c28_256, %c64_257] : memref<36x128xf32, #tpu.memory_space<vmem>>, vector<4x64xf32>
    tpu.vector_store %arg8[%c28_256, %c64_257], %320 {strides = array<i32>} : memref<36x128xf32, #tpu.memory_space<vmem>>, vector<4x64xf32>,
    %c1_258 = arith.constant 1 : index
    %c0_259 = arith.constant 0 : index
    %c18_260 = arith.constant 18 : index
    %322 = vector.load %arg7[%c1_258, %c0_259, %c18_260] : memref<2x4x82xf32, #tpu.memory_space<vmem>>, vector<1x4x64xf32>
    %323 = vector.shape_cast %322 : vector<1x4x64xf32> to vector<4x64xf32>
    %cst_261 = arith.constant 0.000000e+00 : f32
    %324 = vector.shape_cast %34 : vector<1x64xi1> to vector<1x64xi1>
    %325 = vector.broadcast %324 : vector<1x64xi1> to vector<4x64xi1>
    %326 = vector.broadcast %cst_261 : f32 to vector<4x64xf32>
    %327 = arith.select %325, %323, %326 : vector<4x64xi1>, vector<4x64xf32>
    %c32_262 = arith.constant 32 : index
    %c64_263 = arith.constant 64 : index
    %328 = vector.load %arg8[%c32_262, %c64_263] : memref<36x128xf32, #tpu.memory_space<vmem>>, vector<4x64xf32>
    tpu.vector_store %arg8[%c32_262, %c64_263], %327 {strides = array<i32>} : memref<36x128xf32, #tpu.memory_space<vmem>>, vector<4x64xf32>,
    %c0_264 = arith.constant 0 : index
    %c0_265 = arith.constant 0 : index
    %329 = vector.load %arg2[%c0_264, %c0_265] : memref<8x36xf32, #tpu.memory_space<vmem>>, vector<8x36xf32>
    %c0_266 = arith.constant 0 : index
    %c0_267 = arith.constant 0 : index
    %330 = vector.load %arg8[%c0_266, %c0_267] : memref<36x128xf32, #tpu.memory_space<vmem>>, vector<36x128xf32>
    %cst_268 = arith.constant dense<0.000000e+00> : vector<8x128xf32>
    %331 = tpu.matmul %329, %330, %cst_268 {dimension_numbers = #tpu.dot_dimension_numbers<[1], [0], [0], [1], [0, 0, 1, 1], [], []>} : vector<8x36xf32>, vector<36x128xf32>, vector<8x128xf32> -> vector<8x128xf32>
    %c0_269 = arith.constant 0 : index
    %c0_270 = arith.constant 0 : index
    %332 = vector.load %arg3[%c0_269, %c0_270] : memref<8x1xf32, #tpu.memory_space<vmem>>, vector<8x1xf32>
    %333 = vector.broadcast %332 : vector<8x1xf32> to vector<8x128xf32>
    %334 = arith.addf %331, %333 : vector<8x128xf32>
    %cst_271 = arith.constant 0.000000e+00 : f32
    %335 = vector.broadcast %cst_271 : f32 to vector<8x128xf32>
    %336 = arith.maximumf %334, %335 : vector<8x128xf32>
    %cst_272 = arith.constant 0.000000e+00 : f32
    %337 = vector.broadcast %cst_272 : f32 to vector<8x9xf32>
    %c0_273 = arith.constant 0 : index
    %c0_274 = arith.constant 0 : index
    %c0_275 = arith.constant 0 : index
    %338 = vector.load %arg9[%c0_273, %c0_274, %c0_275] : memref<2x8x82xf32, #tpu.memory_space<vmem>>, vector<1x8x9xf32>
    %339 = vector.shape_cast %338 : vector<1x8x9xf32> to vector<8x9xf32>
    %340 = vector.shape_cast %337 : vector<8x9xf32> to vector<1x8x9xf32>
    tpu.vector_store %arg9[%c0_273, %c0_274, %c0_275], %340 {strides = array<i32>} : memref<2x8x82xf32, #tpu.memory_space<vmem>>, vector<1x8x9xf32>,
    %cst_276 = arith.constant 0.000000e+00 : f32
    %341 = vector.broadcast %cst_276 : f32 to vector<8x9xf32>
    %c0_277 = arith.constant 0 : index
    %c0_278 = arith.constant 0 : index
    %c73_279 = arith.constant 73 : index
    %342 = vector.load %arg9[%c0_277, %c0_278, %c73_279] : memref<2x8x82xf32, #tpu.memory_space<vmem>>, vector<1x8x9xf32>
    %343 = vector.shape_cast %342 : vector<1x8x9xf32> to vector<8x9xf32>
    %344 = vector.shape_cast %341 : vector<8x9xf32> to vector<1x8x9xf32>
    tpu.vector_store %arg9[%c0_277, %c0_278, %c73_279], %344 {strides = array<i32>} : memref<2x8x82xf32, #tpu.memory_space<vmem>>, vector<1x8x9xf32>,
    %345 = vector.extract_strided_slice %336 {offsets = [0, 0], sizes = [8, 64], strides = [1, 1]} : vector<8x128xf32> to vector<8x64xf32>
    %c0_280 = arith.constant 0 : index
    %c0_281 = arith.constant 0 : index
    %c9_282 = arith.constant 9 : index
    %346 = vector.load %arg9[%c0_280, %c0_281, %c9_282] : memref<2x8x82xf32, #tpu.memory_space<vmem>>, vector<1x8x64xf32>
    %347 = vector.shape_cast %346 : vector<1x8x64xf32> to vector<8x64xf32>
    %348 = vector.shape_cast %345 : vector<8x64xf32> to vector<1x8x64xf32>
    tpu.vector_store %arg9[%c0_280, %c0_281, %c9_282], %348 {strides = array<i32>} : memref<2x8x82xf32, #tpu.memory_space<vmem>>, vector<1x8x64xf32>,
    %cst_283 = arith.constant 0.000000e+00 : f32
    %349 = vector.broadcast %cst_283 : f32 to vector<8x9xf32>
    %c1_284 = arith.constant 1 : index
    %c0_285 = arith.constant 0 : index
    %c0_286 = arith.constant 0 : index
    %350 = vector.load %arg9[%c1_284, %c0_285, %c0_286] : memref<2x8x82xf32, #tpu.memory_space<vmem>>, vector<1x8x9xf32>
    %351 = vector.shape_cast %350 : vector<1x8x9xf32> to vector<8x9xf32>
    %352 = vector.shape_cast %349 : vector<8x9xf32> to vector<1x8x9xf32>
    tpu.vector_store %arg9[%c1_284, %c0_285, %c0_286], %352 {strides = array<i32>} : memref<2x8x82xf32, #tpu.memory_space<vmem>>, vector<1x8x9xf32>,
    %cst_287 = arith.constant 0.000000e+00 : f32
    %353 = vector.broadcast %cst_287 : f32 to vector<8x9xf32>
    %c1_288 = arith.constant 1 : index
    %c0_289 = arith.constant 0 : index
    %c73_290 = arith.constant 73 : index
    %354 = vector.load %arg9[%c1_288, %c0_289, %c73_290] : memref<2x8x82xf32, #tpu.memory_space<vmem>>, vector<1x8x9xf32>
    %355 = vector.shape_cast %354 : vector<1x8x9xf32> to vector<8x9xf32>
    %356 = vector.shape_cast %353 : vector<8x9xf32> to vector<1x8x9xf32>
    tpu.vector_store %arg9[%c1_288, %c0_289, %c73_290], %356 {strides = array<i32>} : memref<2x8x82xf32, #tpu.memory_space<vmem>>, vector<1x8x9xf32>,
    %357 = vector.extract_strided_slice %336 {offsets = [0, 64], sizes = [8, 64], strides = [1, 1]} : vector<8x128xf32> to vector<8x64xf32>
    %c1_291 = arith.constant 1 : index
    %c0_292 = arith.constant 0 : index
    %c9_293 = arith.constant 9 : index
    %358 = vector.load %arg9[%c1_291, %c0_292, %c9_293] : memref<2x8x82xf32, #tpu.memory_space<vmem>>, vector<1x8x64xf32>
    %359 = vector.shape_cast %358 : vector<1x8x64xf32> to vector<8x64xf32>
    %360 = vector.shape_cast %357 : vector<8x64xf32> to vector<1x8x64xf32>
    tpu.vector_store %arg9[%c1_291, %c0_292, %c9_293], %360 {strides = array<i32>} : memref<2x8x82xf32, #tpu.memory_space<vmem>>, vector<1x8x64xf32>,
    %c0_294 = arith.constant 0 : index
    %c0_295 = arith.constant 0 : index
    %c0_296 = arith.constant 0 : index
    %361 = vector.load %arg9[%c0_294, %c0_295, %c0_296] : memref<2x8x82xf32, #tpu.memory_space<vmem>>, vector<1x8x64xf32>
    %362 = vector.shape_cast %361 : vector<1x8x64xf32> to vector<8x64xf32>
    %cst_297 = arith.constant 0.000000e+00 : f32
    %363 = vector.shape_cast %32 : vector<1x64xi1> to vector<1x64xi1>
    %364 = vector.broadcast %363 : vector<1x64xi1> to vector<8x64xi1>
    %365 = vector.broadcast %cst_297 : f32 to vector<8x64xf32>
    %366 = arith.select %364, %362, %365 : vector<8x64xi1>, vector<8x64xf32>
    %c0_298 = arith.constant 0 : index
    %c0_299 = arith.constant 0 : index
    %367 = vector.load %arg10[%c0_298, %c0_299] : memref<72x128xf32, #tpu.memory_space<vmem>>, vector<8x64xf32>
    tpu.vector_store %arg10[%c0_298, %c0_299], %366 {strides = array<i32>} : memref<72x128xf32, #tpu.memory_space<vmem>>, vector<8x64xf32>,
    %c0_300 = arith.constant 0 : index
    %c0_301 = arith.constant 0 : index
    %c1_302 = arith.constant 1 : index
    %368 = vector.load %arg9[%c0_300, %c0_301, %c1_302] : memref<2x8x82xf32, #tpu.memory_space<vmem>>, vector<1x8x64xf32>
    %369 = vector.shape_cast %368 : vector<1x8x64xf32> to vector<8x64xf32>
    %c8_303 = arith.constant 8 : index
    %c0_304 = arith.constant 0 : index
    %370 = vector.load %arg10[%c8_303, %c0_304] : memref<72x128xf32, #tpu.memory_space<vmem>>, vector<8x64xf32>
    tpu.vector_store %arg10[%c8_303, %c0_304], %369 {strides = array<i32>} : memref<72x128xf32, #tpu.memory_space<vmem>>, vector<8x64xf32>,
    %c0_305 = arith.constant 0 : index
    %c0_306 = arith.constant 0 : index
    %c2_307 = arith.constant 2 : index
    %371 = vector.load %arg9[%c0_305, %c0_306, %c2_307] : memref<2x8x82xf32, #tpu.memory_space<vmem>>, vector<1x8x64xf32>
    %372 = vector.shape_cast %371 : vector<1x8x64xf32> to vector<8x64xf32>
    %cst_308 = arith.constant 0.000000e+00 : f32
    %373 = vector.shape_cast %34 : vector<1x64xi1> to vector<1x64xi1>
    %374 = vector.broadcast %373 : vector<1x64xi1> to vector<8x64xi1>
    %375 = vector.broadcast %cst_308 : f32 to vector<8x64xf32>
    %376 = arith.select %374, %372, %375 : vector<8x64xi1>, vector<8x64xf32>
    %c16_309 = arith.constant 16 : index
    %c0_310 = arith.constant 0 : index
    %377 = vector.load %arg10[%c16_309, %c0_310] : memref<72x128xf32, #tpu.memory_space<vmem>>, vector<8x64xf32>
    tpu.vector_store %arg10[%c16_309, %c0_310], %376 {strides = array<i32>} : memref<72x128xf32, #tpu.memory_space<vmem>>, vector<8x64xf32>,
    %c0_311 = arith.constant 0 : index
    %c0_312 = arith.constant 0 : index
    %c8_313 = arith.constant 8 : index
    %378 = vector.load %arg9[%c0_311, %c0_312, %c8_313] : memref<2x8x82xf32, #tpu.memory_space<vmem>>, vector<1x8x64xf32>
    %379 = vector.shape_cast %378 : vector<1x8x64xf32> to vector<8x64xf32>
    %cst_314 = arith.constant 0.000000e+00 : f32
    %380 = vector.shape_cast %32 : vector<1x64xi1> to vector<1x64xi1>
    %381 = vector.broadcast %380 : vector<1x64xi1> to vector<8x64xi1>
    %382 = vector.broadcast %cst_314 : f32 to vector<8x64xf32>
    %383 = arith.select %381, %379, %382 : vector<8x64xi1>, vector<8x64xf32>
    %c24_315 = arith.constant 24 : index
    %c0_316 = arith.constant 0 : index
    %384 = vector.load %arg10[%c24_315, %c0_316] : memref<72x128xf32, #tpu.memory_space<vmem>>, vector<8x64xf32>
    tpu.vector_store %arg10[%c24_315, %c0_316], %383 {strides = array<i32>} : memref<72x128xf32, #tpu.memory_space<vmem>>, vector<8x64xf32>,
    %c0_317 = arith.constant 0 : index
    %c0_318 = arith.constant 0 : index
    %c9_319 = arith.constant 9 : index
    %385 = vector.load %arg9[%c0_317, %c0_318, %c9_319] : memref<2x8x82xf32, #tpu.memory_space<vmem>>, vector<1x8x64xf32>
    %386 = vector.shape_cast %385 : vector<1x8x64xf32> to vector<8x64xf32>
    %c32_320 = arith.constant 32 : index
    %c0_321 = arith.constant 0 : index
    %387 = vector.load %arg10[%c32_320, %c0_321] : memref<72x128xf32, #tpu.memory_space<vmem>>, vector<8x64xf32>
    tpu.vector_store %arg10[%c32_320, %c0_321], %386 {strides = array<i32>} : memref<72x128xf32, #tpu.memory_space<vmem>>, vector<8x64xf32>,
    %c0_322 = arith.constant 0 : index
    %c0_323 = arith.constant 0 : index
    %c10_324 = arith.constant 10 : index
    %388 = vector.load %arg9[%c0_322, %c0_323, %c10_324] : memref<2x8x82xf32, #tpu.memory_space<vmem>>, vector<1x8x64xf32>
    %389 = vector.shape_cast %388 : vector<1x8x64xf32> to vector<8x64xf32>
    %cst_325 = arith.constant 0.000000e+00 : f32
    %390 = vector.shape_cast %34 : vector<1x64xi1> to vector<1x64xi1>
    %391 = vector.broadcast %390 : vector<1x64xi1> to vector<8x64xi1>
    %392 = vector.broadcast %cst_325 : f32 to vector<8x64xf32>
    %393 = arith.select %391, %389, %392 : vector<8x64xi1>, vector<8x64xf32>
    %c40 = arith.constant 40 : index
    %c0_326 = arith.constant 0 : index
    %394 = vector.load %arg10[%c40, %c0_326] : memref<72x128xf32, #tpu.memory_space<vmem>>, vector<8x64xf32>
    tpu.vector_store %arg10[%c40, %c0_326], %393 {strides = array<i32>} : memref<72x128xf32, #tpu.memory_space<vmem>>, vector<8x64xf32>,
    %c0_327 = arith.constant 0 : index
    %c0_328 = arith.constant 0 : index
    %c16_329 = arith.constant 16 : index
    %395 = vector.load %arg9[%c0_327, %c0_328, %c16_329] : memref<2x8x82xf32, #tpu.memory_space<vmem>>, vector<1x8x64xf32>
    %396 = vector.shape_cast %395 : vector<1x8x64xf32> to vector<8x64xf32>
    %cst_330 = arith.constant 0.000000e+00 : f32
    %397 = vector.shape_cast %32 : vector<1x64xi1> to vector<1x64xi1>
    %398 = vector.broadcast %397 : vector<1x64xi1> to vector<8x64xi1>
    %399 = vector.broadcast %cst_330 : f32 to vector<8x64xf32>
    %400 = arith.select %398, %396, %399 : vector<8x64xi1>, vector<8x64xf32>
    %c48_331 = arith.constant 48 : index
    %c0_332 = arith.constant 0 : index
    %401 = vector.load %arg10[%c48_331, %c0_332] : memref<72x128xf32, #tpu.memory_space<vmem>>, vector<8x64xf32>
    tpu.vector_store %arg10[%c48_331, %c0_332], %400 {strides = array<i32>} : memref<72x128xf32, #tpu.memory_space<vmem>>, vector<8x64xf32>,
    %c0_333 = arith.constant 0 : index
    %c0_334 = arith.constant 0 : index
    %c17_335 = arith.constant 17 : index
    %402 = vector.load %arg9[%c0_333, %c0_334, %c17_335] : memref<2x8x82xf32, #tpu.memory_space<vmem>>, vector<1x8x64xf32>
    %403 = vector.shape_cast %402 : vector<1x8x64xf32> to vector<8x64xf32>
    %c56 = arith.constant 56 : index
    %c0_336 = arith.constant 0 : index
    %404 = vector.load %arg10[%c56, %c0_336] : memref<72x128xf32, #tpu.memory_space<vmem>>, vector<8x64xf32>
    tpu.vector_store %arg10[%c56, %c0_336], %403 {strides = array<i32>} : memref<72x128xf32, #tpu.memory_space<vmem>>, vector<8x64xf32>,
    %c0_337 = arith.constant 0 : index
    %c0_338 = arith.constant 0 : index
    %c18_339 = arith.constant 18 : index
    %405 = vector.load %arg9[%c0_337, %c0_338, %c18_339] : memref<2x8x82xf32, #tpu.memory_space<vmem>>, vector<1x8x64xf32>
    %406 = vector.shape_cast %405 : vector<1x8x64xf32> to vector<8x64xf32>
    %cst_340 = arith.constant 0.000000e+00 : f32
    %407 = vector.shape_cast %34 : vector<1x64xi1> to vector<1x64xi1>
    %408 = vector.broadcast %407 : vector<1x64xi1> to vector<8x64xi1>
    %409 = vector.broadcast %cst_340 : f32 to vector<8x64xf32>
    %410 = arith.select %408, %406, %409 : vector<8x64xi1>, vector<8x64xf32>
    %c64_341 = arith.constant 64 : index
    %c0_342 = arith.constant 0 : index
    %411 = vector.load %arg10[%c64_341, %c0_342] : memref<72x128xf32, #tpu.memory_space<vmem>>, vector<8x64xf32>
    tpu.vector_store %arg10[%c64_341, %c0_342], %410 {strides = array<i32>} : memref<72x128xf32, #tpu.memory_space<vmem>>, vector<8x64xf32>,
    %c1_343 = arith.constant 1 : index
    %c0_344 = arith.constant 0 : index
    %c0_345 = arith.constant 0 : index
    %412 = vector.load %arg9[%c1_343, %c0_344, %c0_345] : memref<2x8x82xf32, #tpu.memory_space<vmem>>, vector<1x8x64xf32>
    %413 = vector.shape_cast %412 : vector<1x8x64xf32> to vector<8x64xf32>
    %cst_346 = arith.constant 0.000000e+00 : f32
    %414 = vector.shape_cast %32 : vector<1x64xi1> to vector<1x64xi1>
    %415 = vector.broadcast %414 : vector<1x64xi1> to vector<8x64xi1>
    %416 = vector.broadcast %cst_346 : f32 to vector<8x64xf32>
    %417 = arith.select %415, %413, %416 : vector<8x64xi1>, vector<8x64xf32>
    %c0_347 = arith.constant 0 : index
    %c64_348 = arith.constant 64 : index
    %418 = vector.load %arg10[%c0_347, %c64_348] : memref<72x128xf32, #tpu.memory_space<vmem>>, vector<8x64xf32>
    tpu.vector_store %arg10[%c0_347, %c64_348], %417 {strides = array<i32>} : memref<72x128xf32, #tpu.memory_space<vmem>>, vector<8x64xf32>,
    %c1_349 = arith.constant 1 : index
    %c0_350 = arith.constant 0 : index
    %c1_351 = arith.constant 1 : index
    %419 = vector.load %arg9[%c1_349, %c0_350, %c1_351] : memref<2x8x82xf32, #tpu.memory_space<vmem>>, vector<1x8x64xf32>
    %420 = vector.shape_cast %419 : vector<1x8x64xf32> to vector<8x64xf32>
    %c8_352 = arith.constant 8 : index
    %c64_353 = arith.constant 64 : index
    %421 = vector.load %arg10[%c8_352, %c64_353] : memref<72x128xf32, #tpu.memory_space<vmem>>, vector<8x64xf32>
    tpu.vector_store %arg10[%c8_352, %c64_353], %420 {strides = array<i32>} : memref<72x128xf32, #tpu.memory_space<vmem>>, vector<8x64xf32>,
    %c1_354 = arith.constant 1 : index
    %c0_355 = arith.constant 0 : index
    %c2_356 = arith.constant 2 : index
    %422 = vector.load %arg9[%c1_354, %c0_355, %c2_356] : memref<2x8x82xf32, #tpu.memory_space<vmem>>, vector<1x8x64xf32>
    %423 = vector.shape_cast %422 : vector<1x8x64xf32> to vector<8x64xf32>
    %cst_357 = arith.constant 0.000000e+00 : f32
    %424 = vector.shape_cast %34 : vector<1x64xi1> to vector<1x64xi1>
    %425 = vector.broadcast %424 : vector<1x64xi1> to vector<8x64xi1>
    %426 = vector.broadcast %cst_357 : f32 to vector<8x64xf32>
    %427 = arith.select %425, %423, %426 : vector<8x64xi1>, vector<8x64xf32>
    %c16_358 = arith.constant 16 : index
    %c64_359 = arith.constant 64 : index
    %428 = vector.load %arg10[%c16_358, %c64_359] : memref<72x128xf32, #tpu.memory_space<vmem>>, vector<8x64xf32>
    tpu.vector_store %arg10[%c16_358, %c64_359], %427 {strides = array<i32>} : memref<72x128xf32, #tpu.memory_space<vmem>>, vector<8x64xf32>,
    %c1_360 = arith.constant 1 : index
    %c0_361 = arith.constant 0 : index
    %c8_362 = arith.constant 8 : index
    %429 = vector.load %arg9[%c1_360, %c0_361, %c8_362] : memref<2x8x82xf32, #tpu.memory_space<vmem>>, vector<1x8x64xf32>
    %430 = vector.shape_cast %429 : vector<1x8x64xf32> to vector<8x64xf32>
    %cst_363 = arith.constant 0.000000e+00 : f32
    %431 = vector.shape_cast %32 : vector<1x64xi1> to vector<1x64xi1>
    %432 = vector.broadcast %431 : vector<1x64xi1> to vector<8x64xi1>
    %433 = vector.broadcast %cst_363 : f32 to vector<8x64xf32>
    %434 = arith.select %432, %430, %433 : vector<8x64xi1>, vector<8x64xf32>
    %c24_364 = arith.constant 24 : index
    %c64_365 = arith.constant 64 : index
    %435 = vector.load %arg10[%c24_364, %c64_365] : memref<72x128xf32, #tpu.memory_space<vmem>>, vector<8x64xf32>
    tpu.vector_store %arg10[%c24_364, %c64_365], %434 {strides = array<i32>} : memref<72x128xf32, #tpu.memory_space<vmem>>, vector<8x64xf32>,
    %c1_366 = arith.constant 1 : index
    %c0_367 = arith.constant 0 : index
    %c9_368 = arith.constant 9 : index
    %436 = vector.load %arg9[%c1_366, %c0_367, %c9_368] : memref<2x8x82xf32, #tpu.memory_space<vmem>>, vector<1x8x64xf32>
    %437 = vector.shape_cast %436 : vector<1x8x64xf32> to vector<8x64xf32>
    %c32_369 = arith.constant 32 : index
    %c64_370 = arith.constant 64 : index
    %438 = vector.load %arg10[%c32_369, %c64_370] : memref<72x128xf32, #tpu.memory_space<vmem>>, vector<8x64xf32>
    tpu.vector_store %arg10[%c32_369, %c64_370], %437 {strides = array<i32>} : memref<72x128xf32, #tpu.memory_space<vmem>>, vector<8x64xf32>,
    %c1_371 = arith.constant 1 : index
    %c0_372 = arith.constant 0 : index
    %c10_373 = arith.constant 10 : index
    %439 = vector.load %arg9[%c1_371, %c0_372, %c10_373] : memref<2x8x82xf32, #tpu.memory_space<vmem>>, vector<1x8x64xf32>
    %440 = vector.shape_cast %439 : vector<1x8x64xf32> to vector<8x64xf32>
    %cst_374 = arith.constant 0.000000e+00 : f32
    %441 = vector.shape_cast %34 : vector<1x64xi1> to vector<1x64xi1>
    %442 = vector.broadcast %441 : vector<1x64xi1> to vector<8x64xi1>
    %443 = vector.broadcast %cst_374 : f32 to vector<8x64xf32>
    %444 = arith.select %442, %440, %443 : vector<8x64xi1>, vector<8x64xf32>
    %c40_375 = arith.constant 40 : index
    %c64_376 = arith.constant 64 : index
    %445 = vector.load %arg10[%c40_375, %c64_376] : memref<72x128xf32, #tpu.memory_space<vmem>>, vector<8x64xf32>
    tpu.vector_store %arg10[%c40_375, %c64_376], %444 {strides = array<i32>} : memref<72x128xf32, #tpu.memory_space<vmem>>, vector<8x64xf32>,
    %c1_377 = arith.constant 1 : index
    %c0_378 = arith.constant 0 : index
    %c16_379 = arith.constant 16 : index
    %446 = vector.load %arg9[%c1_377, %c0_378, %c16_379] : memref<2x8x82xf32, #tpu.memory_space<vmem>>, vector<1x8x64xf32>
    %447 = vector.shape_cast %446 : vector<1x8x64xf32> to vector<8x64xf32>
    %cst_380 = arith.constant 0.000000e+00 : f32
    %448 = vector.shape_cast %32 : vector<1x64xi1> to vector<1x64xi1>
    %449 = vector.broadcast %448 : vector<1x64xi1> to vector<8x64xi1>
    %450 = vector.broadcast %cst_380 : f32 to vector<8x64xf32>
    %451 = arith.select %449, %447, %450 : vector<8x64xi1>, vector<8x64xf32>
    %c48_381 = arith.constant 48 : index
    %c64_382 = arith.constant 64 : index
    %452 = vector.load %arg10[%c48_381, %c64_382] : memref<72x128xf32, #tpu.memory_space<vmem>>, vector<8x64xf32>
    tpu.vector_store %arg10[%c48_381, %c64_382], %451 {strides = array<i32>} : memref<72x128xf32, #tpu.memory_space<vmem>>, vector<8x64xf32>,
    %c1_383 = arith.constant 1 : index
    %c0_384 = arith.constant 0 : index
    %c17_385 = arith.constant 17 : index
    %453 = vector.load %arg9[%c1_383, %c0_384, %c17_385] : memref<2x8x82xf32, #tpu.memory_space<vmem>>, vector<1x8x64xf32>
    %454 = vector.shape_cast %453 : vector<1x8x64xf32> to vector<8x64xf32>
    %c56_386 = arith.constant 56 : index
    %c64_387 = arith.constant 64 : index
    %455 = vector.load %arg10[%c56_386, %c64_387] : memref<72x128xf32, #tpu.memory_space<vmem>>, vector<8x64xf32>
    tpu.vector_store %arg10[%c56_386, %c64_387], %454 {strides = array<i32>} : memref<72x128xf32, #tpu.memory_space<vmem>>, vector<8x64xf32>,
    %c1_388 = arith.constant 1 : index
    %c0_389 = arith.constant 0 : index
    %c18_390 = arith.constant 18 : index
    %456 = vector.load %arg9[%c1_388, %c0_389, %c18_390] : memref<2x8x82xf32, #tpu.memory_space<vmem>>, vector<1x8x64xf32>
    %457 = vector.shape_cast %456 : vector<1x8x64xf32> to vector<8x64xf32>
    %cst_391 = arith.constant 0.000000e+00 : f32
    %458 = vector.shape_cast %34 : vector<1x64xi1> to vector<1x64xi1>
    %459 = vector.broadcast %458 : vector<1x64xi1> to vector<8x64xi1>
    %460 = vector.broadcast %cst_391 : f32 to vector<8x64xf32>
    %461 = arith.select %459, %457, %460 : vector<8x64xi1>, vector<8x64xf32>
    %c64_392 = arith.constant 64 : index
    %c64_393 = arith.constant 64 : index
    %462 = vector.load %arg10[%c64_392, %c64_393] : memref<72x128xf32, #tpu.memory_space<vmem>>, vector<8x64xf32>
    tpu.vector_store %arg10[%c64_392, %c64_393], %461 {strides = array<i32>} : memref<72x128xf32, #tpu.memory_space<vmem>>, vector<8x64xf32>,
    %c0_394 = arith.constant 0 : index
    %c0_395 = arith.constant 0 : index
    %463 = vector.load %arg4[%c0_394, %c0_395] : memref<8x72xf32, #tpu.memory_space<vmem>>, vector<8x72xf32>
    %c0_396 = arith.constant 0 : index
    %c0_397 = arith.constant 0 : index
    %464 = vector.load %arg10[%c0_396, %c0_397] : memref<72x128xf32, #tpu.memory_space<vmem>>, vector<72x128xf32>
    %cst_398 = arith.constant dense<0.000000e+00> : vector<8x128xf32>
    %465 = tpu.matmul %463, %464, %cst_398 {dimension_numbers = #tpu.dot_dimension_numbers<[1], [0], [0], [1], [0, 0, 1, 1], [], []>} : vector<8x72xf32>, vector<72x128xf32>, vector<8x128xf32> -> vector<8x128xf32>
    %c0_399 = arith.constant 0 : index
    %c0_400 = arith.constant 0 : index
    %466 = vector.load %arg5[%c0_399, %c0_400] : memref<8x1xf32, #tpu.memory_space<vmem>>, vector<8x1xf32>
    %467 = vector.broadcast %466 : vector<8x1xf32> to vector<8x128xf32>
    %468 = arith.addf %465, %467 : vector<8x128xf32>
    %cst_401 = arith.constant 0.000000e+00 : f32
    %469 = vector.broadcast %cst_401 : f32 to vector<8x128xf32>
    %470 = arith.maximumf %468, %469 : vector<8x128xf32>
    %c0_402 = arith.constant 0 : index
    %c0_403 = arith.constant 0 : index
    %c0_404 = arith.constant 0 : index
    %471 = vector.load %arg6[%c0_402, %c0_403, %c0_404] : memref<1x8x128xf32, #tpu.memory_space<vmem>>, vector<1x8x128xf32>
    %472 = vector.shape_cast %471 : vector<1x8x128xf32> to vector<8x128xf32>
    %473 = vector.shape_cast %470 : vector<8x128xf32> to vector<1x8x128xf32>
    tpu.vector_store %arg6[%c0_402, %c0_403, %c0_404], %473 {strides = array<i32>} : memref<1x8x128xf32, #tpu.memory_space<vmem>>, vector<1x8x128xf32>,
    return
  }
  func.func @transform_0(%arg0: i32) -> (i32, i32, i32) {
    %c0_i32 = arith.constant 0 : i32
    %c0_i32_0 = arith.constant 0 : i32
    %c0_i32_1 = arith.constant 0 : i32
    return %arg0, %c0_i32, %c0_i32_0 : i32, i32, i32
  }
  func.func @transform_1(%arg0: i32) -> (i32, i32) {
    %c0_i32 = arith.constant 0 : i32
    %c0_i32_0 = arith.constant 0 : i32
    %c0_i32_1 = arith.constant 0 : i32
    return %c0_i32, %c0_i32_0 : i32, i32
  }
  func.func @transform_2(%arg0: i32) -> (i32, i32) {
    %c0_i32 = arith.constant 0 : i32
    %c0_i32_0 = arith.constant 0 : i32
    %c0_i32_1 = arith.constant 0 : i32
    return %c0_i32, %c0_i32_0 : i32, i32
  }
  func.func @transform_3(%arg0: i32) -> (i32, i32) {
    %c0_i32 = arith.constant 0 : i32
    %c0_i32_0 = arith.constant 0 : i32
    %c0_i32_1 = arith.constant 0 : i32
    return %c0_i32, %c0_i32_0 : i32, i32
  }
  func.func @transform_4(%arg0: i32) -> (i32, i32) {
    %c0_i32 = arith.constant 0 : i32
    %c0_i32_0 = arith.constant 0 : i32
    %c0_i32_1 = arith.constant 0 : i32
    return %c0_i32, %c0_i32_0 : i32, i32
  }
  func.func @transform_5(%arg0: i32) -> (i32, i32, i32) {
    %c0_i32 = arith.constant 0 : i32
    %c0_i32_0 = arith.constant 0 : i32
    %c0_i32_1 = arith.constant 0 : i32
    return %arg0, %c0_i32, %c0_i32_0 : i32, i32, i32
  }
}

</mosaic_0001>

<llo_original>
// kernel: down_forward.1
$region0: #{down_forward.1}
  #allocation0 [shape = 'u32[]', space=smem, size = 0x4, offset = 0x4, fixed_abs, tag = 'smem constant byte address 0x4 - core index']
  #allocation1 [shape = 'u32[144,128]{1,0:T(1,128)}', space=vmem, size = 0x12000, scoped, tag = 'internal scratch']
  #allocation2 [shape = 'f32[2,4,82]{2,1,0:T(4,128)}', space=vmem, size = 0x1000, scoped, tag = 'scratch operand']
  #allocation3 [shape = 'f32[36,128]{1,0:T(8,128)}', space=vmem, size = 0x5000, scoped, tag = 'scratch operand']
  #allocation4 [shape = 'f32[2,8,82]{2,1,0:T(8,128)}', space=vmem, size = 0x2000, scoped, tag = 'scratch operand']
  #allocation5 [shape = 'f32[72,128]{1,0:T(8,128)}', space=vmem, size = 0x9000, scoped, tag = 'scratch operand']
  %s0 = inlined_call_operand.vmem [shape: f32[2,4,256], index: 0, kind: input, shape index: {}]
  %s1 = inlined_call_operand.vmem [shape: f32[8,36], index: 1, kind: input, shape index: {}]
  %s2 = inlined_call_operand.vmem [shape: f32[8,1], index: 2, kind: input, shape index: {}]
  %s3 = inlined_call_operand.vmem [shape: f32[8,72], index: 3, kind: input, shape index: {}]
  %s4 = inlined_call_operand.vmem [shape: f32[8,1], index: 4, kind: input, shape index: {}]
  %s5 = inlined_call_operand.vmem [shape: f32[1,8,128], index: 5, kind: output, shape index: {}]
  %s6 = sld [smem:[#allocation0]]
  $region30: #{down_forward.1} parent=0
    _
  %s8 = ssub.s32 1, %s6
  %s9 = scalar_select 0, %s8, %s6
  // Predicated region
  $region2: #{down_forward.1} parent=0 // pred_check
    _
  $region3: #{down_forward.1} parent=0 // pred_check_branch
    %11 = sbr.rel (0) target = $region5
  $region4: #{down_forward.1} parent=0 // pred_region
    _
  $region5: #{down_forward.1} parent=0 // pred_fallthru
    _
  // Predicated region
  $region6: #{down_forward.1} parent=0 // pred_check
    _
  $region7: #{down_forward.1} parent=0 // pred_check_branch
    %13 = sbr.rel (0) target = $region9
  $region8: #{down_forward.1} parent=0 // pred_region
    _
  $region9: #{down_forward.1} parent=0 // pred_fallthru
    _
  // Predicated region
  $region10: #{down_forward.1} parent=0 // pred_check
    _
  $region11: #{down_forward.1} parent=0 // pred_check_branch
    %15 = sbr.rel (0) target = $region13
  $region12: #{down_forward.1} parent=0 // pred_region
    _
  $region13: #{down_forward.1} parent=0 // pred_fallthru
    _
  // Predicated region
  $region14: #{down_forward.1} parent=0 // pred_check
    _
  $region15: #{down_forward.1} parent=0 // pred_check_branch
    %17 = sbr.rel (0) target = $region17
  $region16: #{down_forward.1} parent=0 // pred_region
    _
  $region17: #{down_forward.1} parent=0 // pred_fallthru
    _
  // Predicated region
  $region18: #{down_forward.1} parent=0 // pred_check
    _
  $region19: #{down_forward.1} parent=0 // pred_check_branch
    %19 = sbr.rel (0) target = $region21
  $region20: #{down_forward.1} parent=0 // pred_region
    _
  $region21: #{down_forward.1} parent=0 // pred_fallthru
    _
  %v20 = vlaneseq
  %v21 = vshrl.u32 %v20, 7
  %v22 = vadd.s32 %v21, 8
  %v23 = vlaneseq
  %v24 = vand.u32 %v23, 127
  %v25 = vmul.u32 %v24, 2
  %vm26 = vcmp.eq.s32.totalorder %v21, %v25
  %vm27 = vcmp.eq.s32.totalorder %v22, %v25
  %v28 = vsel %vm26, 1, 0
  %v29 = vsel %vm27, 1, 0
  %v30 = vcvt.s32.f32 %v28
  %v31 = vcvt.s32.f32 %v29
  %v32 = vadd.s32 %v25, 1
  %vm33 = vcmp.eq.s32.totalorder %v21, %v32
  %vm34 = vcmp.eq.s32.totalorder %v22, %v32
  %v35 = vsel %vm33, 1, 0
  %v36 = vsel %vm34, 1, 0
  %v37 = vcvt.s32.f32 %v35
  %v38 = vcvt.s32.f32 %v36
  %vm39 = vcmp.lt.s32.totalorder %v24, 0
  %v40 = vsub.s32 0, %v24
  %v41 = vsel %vm39, %v40, %v24
  %v42 = vshrl.u32 %v41, 3
  %v43 = vand.u32 %v41, 7
  %v44 = vsub.s32 0, %v43
  %v45 = vsel %vm39, %v44, %v43
  %vm46 = vcmp.ne.s32.totalorder %v45, 0
  %vm47 = vcmp.lt.s32.totalorder %v45, 0
  %vm48 = vmand %vm47, %vm46
  %v49 = vadd.s32 %v45, 8
  %v50 = vsel %vm48, %v49, %v45
  %vm51 = vcmp.ge.s32.totalorder %v50, 1
  %vm52 = vcmp.le.s32.totalorder %v50, 6
  %vm53 = vcmask 68608
  %54 = vst.msk [vmem:[#allocation2] sm:$0xf] %vm53, 0.0
  %vm55 = vcmask 667208
  %56 = vst.msk [vmem:[#allocation2] sm:$0xf] %vm55, 0.0
  %v57 = vld [vmem:[%s0] sm:$0xf]
  %59 = vrot.lane.b32.xlu0 %v57, 112
  %v60 = vpop.permute.xlu0 %59
  %v62 = vmax.f32 %v57, %v60
  %vm63 = vcmask 130048
  %v65 = vsel %vm63, %v62, 0
  %67 = vmatprep.subr.mxu0 0.0
  %68 = vmatpush1.msra.mxu0 %v30
  %69 = vmatprep.subr.mxu0 0.0
  %70 = vmatpush1.msra.mxu0 %v31
  %71 = vmatprep.subr.mxu0 0.0
  %72 = vmatpush1.msra.mxu0 0.0
  %73 = vmatprep.subr.mxu0 0.0
  %74 = vmatpush1.msra.mxu0 0.0
  %75 = vmatprep.subr.mxu0 0.0
  %76 = vmatpush1.msra.mxu0 0.0
  %77 = vmatprep.subr.mxu0 0.0
  %78 = vmatpush1.msra.mxu0 0.0
  %79 = vmatprep.subr.mxu0 0.0
  %80 = vmatpush1.msra.mxu0 0.0
  %81 = vmatprep.subr.mxu0 0.0
  %82 = vmatpush1.msra.mxu0 0.0
  %83 = vmatprep.subr.mxu0 0.0
  %84 = vmatpush1.msra.mxu0 0.0
  %85 = vmatprep.subr.mxu0 0.0
  %86 = vmatpush1.msra.mxu0 0.0
  %87 = vmatprep.subr.mxu0 0.0
  %88 = vmatpush1.msra.mxu0 0.0
  %89 = vmatprep.subr.mxu0 0.0
  %90 = vmatpush1.msra.mxu0 0.0
  %91 = vmatprep.subr.mxu0 0.0
  %92 = vmatpush1.msra.mxu0 0.0
  %93 = vmatprep.subr.mxu0 0.0
  %94 = vmatpush1.msra.mxu0 0.0
  %95 = vmatprep.subr.mxu0 0.0
  %96 = vmatpush1.msra.mxu0 0.0
  %97 = vmatprep.subr.mxu0 0.0
  %98 = vmatpush1.msra.mxu0 0.0
  %99 = vmatprep.subr.mxu0 0.0
  %100 = vmatpush1.msra.mxu0 0.0
  %101 = vmatprep.subr.mxu0 0.0
  %102 = vmatpush1.msra.mxu0 0.0
  %103 = vmatprep.subr.mxu0 0.0
  %104 = vmatpush1.msra.mxu0 0.0
  %105 = vmatprep.subr.mxu0 0.0
  %106 = vmatpush1.msra.mxu0 0.0
  %107 = vmatprep.subr.mxu0 0.0
  %108 = vmatpush1.msra.mxu0 0.0
  %109 = vmatprep.subr.mxu0 0.0
  %110 = vmatpush1.msra.mxu0 0.0
  %111 = vmatprep.subr.mxu0 0.0
  %112 = vmatpush1.msra.mxu0 0.0
  %113 = vmatprep.subr.mxu0 0.0
  %114 = vmatpush1.msra.mxu0 0.0
  %115 = vmatprep.subr.mxu0 0.0
  %116 = vmatpush1.msra.mxu0 0.0
  %117 = vmatprep.subr.mxu0 0.0
  %118 = vmatpush1.msra.mxu0 0.0
  %119 = vmatprep.subr.mxu0 0.0
  %120 = vmatpush1.msra.mxu0 0.0
  %121 = vmatprep.subr.mxu0 0.0
  %122 = vmatpush1.msra.mxu0 0.0
  %123 = vmatprep.subr.mxu0 0.0
  %124 = vmatpush1.msra.mxu0 0.0
  %125 = vmatprep.subr.mxu0 0.0
  %126 = vmatpush1.msra.mxu0 0.0
  %127 = vmatprep.subr.mxu0 0.0
  %128 = vmatpush1.msra.mxu0 0.0
  %129 = vmatprep.subr.mxu0 0.0
  %130 = vmatpush1.msra.mxu0 0.0
  %131 = vmatprep.mubr.f32.mxu0 0.0
  %132 = vmatmul.mubr.f32.gmra.mrb[0].mxu0 %v65
  %v133 = vpop.f32.mrb[0].mxu0
  %v134 = vadd.f32 0.0, %v133
  %v135 = vpop.f32.mrb[0].mxu0
  %136 = vdwg.mxu0
  %137 = vmatprep.subr.mxu0 0.0
  %138 = vmatpush1.msra.mxu0 %v37
  %139 = vmatprep.subr.mxu0 0.0
  %140 = vmatpush1.msra.mxu0 %v38
  %141 = vmatprep.subr.mxu0 0.0
  %142 = vmatpush1.msra.mxu0 0.0
  %143 = vmatprep.subr.mxu0 0.0
  %144 = vmatpush1.msra.mxu0 0.0
  %145 = vmatprep.subr.mxu0 0.0
  %146 = vmatpush1.msra.mxu0 0.0
  %147 = vmatprep.subr.mxu0 0.0
  %148 = vmatpush1.msra.mxu0 0.0
  %149 = vmatprep.subr.mxu0 0.0
  %150 = vmatpush1.msra.mxu0 0.0
  %151 = vmatprep.subr.mxu0 0.0
  %152 = vmatpush1.msra.mxu0 0.0
  %153 = vmatprep.subr.mxu0 0.0
  %154 = vmatpush1.msra.mxu0 0.0
  %155 = vmatprep.subr.mxu0 0.0
  %156 = vmatpush1.msra.mxu0 0.0
  %157 = vmatprep.subr.mxu0 0.0
  %158 = vmatpush1.msra.mxu0 0.0
  %159 = vmatprep.subr.mxu0 0.0
  %160 = vmatpush1.msra.mxu0 0.0
  %161 = vmatprep.subr.mxu0 0.0
  %162 = vmatpush1.msra.mxu0 0.0
  %163 = vmatprep.subr.mxu0 0.0
  %164 = vmatpush1.msra.mxu0 0.0
  %165 = vmatprep.subr.mxu0 0.0
  %166 = vmatpush1.msra.mxu0 0.0
  %167 = vmatprep.subr.mxu0 0.0
  %168 = vmatpush1.msra.mxu0 0.0
  %169 = vmatprep.subr.mxu0 0.0
  %170 = vmatpush1.msra.mxu0 0.0
  %171 = vmatprep.subr.mxu0 0.0
  %172 = vmatpush1.msra.mxu0 0.0
  %173 = vmatprep.subr.mxu0 0.0
  %174 = vmatpush1.msra.mxu0 0.0
  %175 = vmatprep.subr.mxu0 0.0
  %176 = vmatpush1.msra.mxu0 0.0
  %177 = vmatprep.subr.mxu0 0.0
  %178 = vmatpush1.msra.mxu0 0.0
  %179 = vmatprep.subr.mxu0 0.0
  %180 = vmatpush1.msra.mxu0 0.0
  %181 = vmatprep.subr.mxu0 0.0
  %182 = vmatpush1.msra.mxu0 0.0
  %183 = vmatprep.subr.mxu0 0.0
  %184 = vmatpush1.msra.mxu0 0.0
  %185 = vmatprep.subr.mxu0 0.0
  %186 = vmatpush1.msra.mxu0 0.0
  %187 = vmatprep.subr.mxu0 0.0
  %188 = vmatpush1.msra.mxu0 0.0
  %189 = vmatprep.subr.mxu0 0.0
  %190 = vmatpush1.msra.mxu0 0.0
  %191 = vmatprep.subr.mxu0 0.0
  %192 = vmatpush1.msra.mxu0 0.0
  %193 = vmatprep.subr.mxu0 0.0
  %194 = vmatpush1.msra.mxu0 0.0
  %195 = vmatprep.subr.mxu0 0.0
  %196 = vmatpush1.msra.mxu0 0.0
  %197 = vmatprep.subr.mxu0 0.0
  %198 = vmatpush1.msra.mxu0 0.0
  %199 = vmatprep.subr.mxu0 0.0
  %200 = vmatpush1.msra.mxu0 0.0
  %201 = vmatprep.mubr.f32.mxu0 0.0
  %202 = vmatmul.mubr.f32.gmra.mrb[0].mxu0 %v65
  %v203 = vpop.f32.mrb[0].mxu0
  %v204 = vadd.f32 0.0, %v203
  %v205 = vpop.f32.mrb[0].mxu0
  %206 = vdwg.mxu0
  %v207 = vmax.f32 %v134, %v204
  %209 = vrot.lane.b32.xlu0 %v207, 9
  %v210 = vpop.permute.xlu0 %209
  %vm212 = vcmask 134216
  %213 = vst.msk [vmem:[#allocation2] sm:$0xf] %vm212, %v210
  %v214 = vld [vmem:[%s0] sm:$0xf]
  %216 = vrot.lane.b32.xlu0 %v214, 112
  %v217 = vpop.permute.xlu0 %216
  %v219 = vmax.f32 %v214, %v217
  %221 = vrot.lane.b32.xlu0 %v219, 96
  %v222 = vpop.permute.xlu0 %221
  %v223 = vsel %vm63, %v222, 0
  %225 = vmatprep.subr.mxu0 0.0
  %226 = vmatpush1.msra.mxu0 %v30
  %227 = vmatprep.subr.mxu0 0.0
  %228 = vmatpush1.msra.mxu0 %v31
  %229 = vmatprep.subr.mxu0 0.0
  %230 = vmatpush1.msra.mxu0 0.0
  %231 = vmatprep.subr.mxu0 0.0
  %232 = vmatpush1.msra.mxu0 0.0
  %233 = vmatprep.subr.mxu0 0.0
  %234 = vmatpush1.msra.mxu0 0.0
  %235 = vmatprep.subr.mxu0 0.0
  %236 = vmatpush1.msra.mxu0 0.0
  %237 = vmatprep.subr.mxu0 0.0
  %238 = vmatpush1.msra.mxu0 0.0
  %239 = vmatprep.subr.mxu0 0.0
  %240 = vmatpush1.msra.mxu0 0.0
  %241 = vmatprep.subr.mxu0 0.0
  %242 = vmatpush1.msra.mxu0 0.0
  %243 = vmatprep.subr.mxu0 0.0
  %244 = vmatpush1.msra.mxu0 0.0
  %245 = vmatprep.subr.mxu0 0.0
  %246 = vmatpush1.msra.mxu0 0.0
  %247 = vmatprep.subr.mxu0 0.0
  %248 = vmatpush1.msra.mxu0 0.0
  %249 = vmatprep.subr.mxu0 0.0
  %250 = vmatpush1.msra.mxu0 0.0
  %251 = vmatprep.subr.mxu0 0.0
  %252 = vmatpush1.msra.mxu0 0.0
  %253 = vmatprep.subr.mxu0 0.0
  %254 = vmatpush1.msra.mxu0 0.0
  %255 = vmatprep.subr.mxu0 0.0
  %256 = vmatpush1.msra.mxu0 0.0
  %257 = vmatprep.subr.mxu0 0.0
  %258 = vmatpush1.msra.mxu0 0.0
  %259 = vmatprep.subr.mxu0 0.0
  %260 = vmatpush1.msra.mxu0 0.0
  %261 = vmatprep.subr.mxu0 0.0
  %262 = vmatpush1.msra.mxu0 0.0
  %263 = vmatprep.subr.mxu0 0.0
  %264 = vmatpush1.msra.mxu0 0.0
  %265 = vmatprep.subr.mxu0 0.0
  %266 = vmatpush1.msra.mxu0 0.0
  %267 = vmatprep.subr.mxu0 0.0
  %268 = vmatpush1.msra.mxu0 0.0
  %269 = vmatprep.subr.mxu0 0.0
  %270 = vmatpush1.msra.mxu0 0.0
  %271 = vmatprep.subr.mxu0 0.0
  %272 = vmatpush1.msra.mxu0 0.0
  %273 = vmatprep.subr.mxu0 0.0
  %274 = vmatpush1.msra.mxu0 0.0
  %275 = vmatprep.subr.mxu0 0.0
  %276 = vmatpush1.msra.mxu0 0.0
  %277 = vmatprep.subr.mxu0 0.0
  %278 = vmatpush1.msra.mxu0 0.0
  %279 = vmatprep.subr.mxu0 0.0
  %280 = vmatpush1.msra.mxu0 0.0
  %281 = vmatprep.subr.mxu0 0.0
  %282 = vmatpush1.msra.mxu0 0.0
  %283 = vmatprep.subr.mxu0 0.0
  %284 = vmatpush1.msra.mxu0 0.0
  %285 = vmatprep.subr.mxu0 0.0
  %286 = vmatpush1.msra.mxu0 0.0
  %287 = vmatprep.subr.mxu0 0.0
  %288 = vmatpush1.msra.mxu0 0.0
  %289 = vmatprep.mubr.f32.mxu0 0.0
  %290 = vmatmul.mubr.f32.gmra.mrb[0].mxu0 %v223
  %v291 = vpop.f32.mrb[0].mxu0
  %v292 = vadd.f32 0.0, %v291
  %v293 = vpop.f32.mrb[0].mxu0
  %294 = vdwg.mxu0
  %295 = vmatprep.subr.mxu0 0.0
  %296 = vmatpush1.msra.mxu0 %v37
  %297 = vmatprep.subr.mxu0 0.0
  %298 = vmatpush1.msra.mxu0 %v38
  %299 = vmatprep.subr.mxu0 0.0
  %300 = vmatpush1.msra.mxu0 0.0
  %301 = vmatprep.subr.mxu0 0.0
  %302 = vmatpush1.msra.mxu0 0.0
  %303 = vmatprep.subr.mxu0 0.0
  %304 = vmatpush1.msra.mxu0 0.0
  %305 = vmatprep.subr.mxu0 0.0
  %306 = vmatpush1.msra.mxu0 0.0
  %307 = vmatprep.subr.mxu0 0.0
  %308 = vmatpush1.msra.mxu0 0.0
  %309 = vmatprep.subr.mxu0 0.0
  %310 = vmatpush1.msra.mxu0 0.0
  %311 = vmatprep.subr.mxu0 0.0
  %312 = vmatpush1.msra.mxu0 0.0
  %313 = vmatprep.subr.mxu0 0.0
  %314 = vmatpush1.msra.mxu0 0.0
  %315 = vmatprep.subr.mxu0 0.0
  %316 = vmatpush1.msra.mxu0 0.0
  %317 = vmatprep.subr.mxu0 0.0
  %318 = vmatpush1.msra.mxu0 0.0
  %319 = vmatprep.subr.mxu0 0.0
  %320 = vmatpush1.msra.mxu0 0.0
  %321 = vmatprep.subr.mxu0 0.0
  %322 = vmatpush1.msra.mxu0 0.0
  %323 = vmatprep.subr.mxu0 0.0
  %324 = vmatpush1.msra.mxu0 0.0
  %325 = vmatprep.subr.mxu0 0.0
  %326 = vmatpush1.msra.mxu0 0.0
  %327 = vmatprep.subr.mxu0 0.0
  %328 = vmatpush1.msra.mxu0 0.0
  %329 = vmatprep.subr.mxu0 0.0
  %330 = vmatpush1.msra.mxu0 0.0
  %331 = vmatprep.subr.mxu0 0.0
  %332 = vmatpush1.msra.mxu0 0.0
  %333 = vmatprep.subr.mxu0 0.0
  %334 = vmatpush1.msra.mxu0 0.0
  %335 = vmatprep.subr.mxu0 0.0
  %336 = vmatpush1.msra.mxu0 0.0
  %337 = vmatprep.subr.mxu0 0.0
  %338 = vmatpush1.msra.mxu0 0.0
  %339 = vmatprep.subr.mxu0 0.0
  %340 = vmatpush1.msra.mxu0 0.0
  %341 = vmatprep.subr.mxu0 0.0
  %342 = vmatpush1.msra.mxu0 0.0
  %343 = vmatprep.subr.mxu0 0.0
  %344 = vmatpush1.msra.mxu0 0.0
  %345 = vmatprep.subr.mxu0 0.0
  %346 = vmatpush1.msra.mxu0 0.0
  %347 = vmatprep.subr.mxu0 0.0
  %348 = vmatpush1.msra.mxu0 0.0
  %349 = vmatprep.subr.mxu0 0.0
  %350 = vmatpush1.msra.mxu0 0.0
  %351 = vmatprep.subr.mxu0 0.0
  %352 = vmatpush1.msra.mxu0 0.0
  %353 = vmatprep.subr.mxu0 0.0
  %354 = vmatpush1.msra.mxu0 0.0
  %355 = vmatprep.subr.mxu0 0.0
  %356 = vmatpush1.msra.mxu0 0.0
  %357 = vmatprep.subr.mxu0 0.0
  %358 = vmatpush1.msra.mxu0 0.0
  %359 = vmatprep.mubr.f32.mxu0 0.0
  %360 = vmatmul.mubr.f32.gmra.mrb[0].mxu0 %v223
  %v361 = vpop.f32.mrb[0].mxu0
  %v362 = vadd.f32 0.0, %v361
  %v363 = vpop.f32.mrb[0].mxu0
  %364 = vdwg.mxu0
  %v365 = vmax.f32 %v292, %v362
  %367 = vrot.lane.b32.xlu0 %v365, 17
  %v368 = vpop.permute.xlu0 %367
  %vm370 = vcmask 199816
  %371 = vst.msk [vmem:[#allocation2] sm:$0xf] %vm370, %v368
  %v372 = vld [vmem:[%s0] sm:$0xf]
  %374 = vrot.lane.b32.xlu0 %v372, 112
  %v375 = vpop.permute.xlu0 %374
  %v377 = vmax.f32 %v372, %v375
  %379 = vrot.lane.b32.xlu0 %v377, 64
  %v380 = vpop.permute.xlu0 %379
  %v381 = vsel %vm63, %v380, 0
  %383 = vmatprep.subr.mxu0 0.0
  %384 = vmatpush1.msra.mxu0 %v30
  %385 = vmatprep.subr.mxu0 0.0
  %386 = vmatpush1.msra.mxu0 %v31
  %387 = vmatprep.subr.mxu0 0.0
  %388 = vmatpush1.msra.mxu0 0.0
  %389 = vmatprep.subr.mxu0 0.0
  %390 = vmatpush1.msra.mxu0 0.0
  %391 = vmatprep.subr.mxu0 0.0
  %392 = vmatpush1.msra.mxu0 0.0
  %393 = vmatprep.subr.mxu0 0.0
  %394 = vmatpush1.msra.mxu0 0.0
  %395 = vmatprep.subr.mxu0 0.0
  %396 = vmatpush1.msra.mxu0 0.0
  %397 = vmatprep.subr.mxu0 0.0
  %398 = vmatpush1.msra.mxu0 0.0
  %399 = vmatprep.subr.mxu0 0.0
  %400 = vmatpush1.msra.mxu0 0.0
  %401 = vmatprep.subr.mxu0 0.0
  %402 = vmatpush1.msra.mxu0 0.0
  %403 = vmatprep.subr.mxu0 0.0
  %404 = vmatpush1.msra.mxu0 0.0
  %405 = vmatprep.subr.mxu0 0.0
  %406 = vmatpush1.msra.mxu0 0.0
  %407 = vmatprep.subr.mxu0 0.0
  %408 = vmatpush1.msra.mxu0 0.0
  %409 = vmatprep.subr.mxu0 0.0
  %410 = vmatpush1.msra.mxu0 0.0
  %411 = vmatprep.subr.mxu0 0.0
  %412 = vmatpush1.msra.mxu0 0.0
  %413 = vmatprep.subr.mxu0 0.0
  %414 = vmatpush1.msra.mxu0 0.0
  %415 = vmatprep.subr.mxu0 0.0
  %416 = vmatpush1.msra.mxu0 0.0
  %417 = vmatprep.subr.mxu0 0.0
  %418 = vmatpush1.msra.mxu0 0.0
  %419 = vmatprep.subr.mxu0 0.0
  %420 = vmatpush1.msra.mxu0 0.0
  %421 = vmatprep.subr.mxu0 0.0
  %422 = vmatpush1.msra.mxu0 0.0
  %423 = vmatprep.subr.mxu0 0.0
  %424 = vmatpush1.msra.mxu0 0.0
  %425 = vmatprep.subr.mxu0 0.0
  %426 = vmatpush1.msra.mxu0 0.0
  %427 = vmatprep.subr.mxu0 0.0
  %428 = vmatpush1.msra.mxu0 0.0
  %429 = vmatprep.subr.mxu0 0.0
  %430 = vmatpush1.msra.mxu0 0.0
  %431 = vmatprep.subr.mxu0 0.0
  %432 = vmatpush1.msra.mxu0 0.0
  %433 = vmatprep.subr.mxu0 0.0
  %434 = vmatpush1.msra.mxu0 0.0
  %435 = vmatprep.subr.mxu0 0.0
  %436 = vmatpush1.msra.mxu0 0.0
  %437 = vmatprep.subr.mxu0 0.0
  %438 = vmatpush1.msra.mxu0 0.0
  %439 = vmatprep.subr.mxu0 0.0
  %440 = vmatpush1.msra.mxu0 0.0
  %441 = vmatprep.subr.mxu0 0.0
  %442 = vmatpush1.msra.mxu0 0.0
  %443 = vmatprep.subr.mxu0 0.0
  %444 = vmatpush1.msra.mxu0 0.0
  %445 = vmatprep.subr.mxu0 0.0
  %446 = vmatpush1.msra.mxu0 0.0
  %447 = vmatprep.mubr.f32.mxu0 0.0
  %448 = vmatmul.mubr.f32.gmra.mrb[0].mxu0 %v381
  %v449 = vpop.f32.mrb[0].mxu0
  %v450 = vadd.f32 0.0, %v449
  %v451 = vpop.f32.mrb[0].mxu0
  %452 = vdwg.mxu0
  %453 = vmatprep.subr.mxu0 0.0
  %454 = vmatpush1.msra.mxu0 %v37
  %455 = vmatprep.subr.mxu0 0.0
  %456 = vmatpush1.msra.mxu0 %v38
  %457 = vmatprep.subr.mxu0 0.0
  %458 = vmatpush1.msra.mxu0 0.0
  %459 = vmatprep.subr.mxu0 0.0
  %460 = vmatpush1.msra.mxu0 0.0
  %461 = vmatprep.subr.mxu0 0.0
  %462 = vmatpush1.msra.mxu0 0.0
  %463 = vmatprep.subr.mxu0 0.0
  %464 = vmatpush1.msra.mxu0 0.0
  %465 = vmatprep.subr.mxu0 0.0
  %466 = vmatpush1.msra.mxu0 0.0
  %467 = vmatprep.subr.mxu0 0.0
  %468 = vmatpush1.msra.mxu0 0.0
  %469 = vmatprep.subr.mxu0 0.0
  %470 = vmatpush1.msra.mxu0 0.0
  %471 = vmatprep.subr.mxu0 0.0
  %472 = vmatpush1.msra.mxu0 0.0
  %473 = vmatprep.subr.mxu0 0.0
  %474 = vmatpush1.msra.mxu0 0.0
  %475 = vmatprep.subr.mxu0 0.0
  %476 = vmatpush1.msra.mxu0 0.0
  %477 = vmatprep.subr.mxu0 0.0
  %478 = vmatpush1.msra.mxu0 0.0
  %479 = vmatprep.subr.mxu0 0.0
  %480 = vmatpush1.msra.mxu0 0.0
  %481 = vmatprep.subr.mxu0 0.0
  %482 = vmatpush1.msra.mxu0 0.0
  %483 = vmatprep.subr.mxu0 0.0
  %484 = vmatpush1.msra.mxu0 0.0
  %485 = vmatprep.subr.mxu0 0.0
  %486 = vmatpush1.msra.mxu0 0.0
  %487 = vmatprep.subr.mxu0 0.0
  %488 = vmatpush1.msra.mxu0 0.0
  %489 = vmatprep.subr.mxu0 0.0
  %490 = vmatpush1.msra.mxu0 0.0
  %491 = vmatprep.subr.mxu0 0.0
  %492 = vmatpush1.msra.mxu0 0.0
  %493 = vmatprep.subr.mxu0 0.0
  %494 = vmatpush1.msra.mxu0 0.0
  %495 = vmatprep.subr.mxu0 0.0
  %496 = vmatpush1.msra.mxu0 0.0
  %497 = vmatprep.subr.mxu0 0.0
  %498 = vmatpush1.msra.mxu0 0.0
  %499 = vmatprep.subr.mxu0 0.0
  %500 = vmatpush1.msra.mxu0 0.0
  %501 = vmatprep.subr.mxu0 0.0
  %502 = vmatpush1.msra.mxu0 0.0
  %503 = vmatprep.subr.mxu0 0.0
  %504 = vmatpush1.msra.mxu0 0.0
  %505 = vmatprep.subr.mxu0 0.0
  %506 = vmatpush1.msra.mxu0 0.0
  %507 = vmatprep.subr.mxu0 0.0
  %508 = vmatpush1.msra.mxu0 0.0
  %509 = vmatprep.subr.mxu0 0.0
  %510 = vmatpush1.msra.mxu0 0.0
  %511 = vmatprep.subr.mxu0 0.0
  %512 = vmatpush1.msra.mxu0 0.0
  %513 = vmatprep.subr.mxu0 0.0
  %514 = vmatpush1.msra.mxu0 0.0
  %515 = vmatprep.subr.mxu0 0.0
  %516 = vmatpush1.msra.mxu0 0.0
  %517 = vmatprep.mubr.f32.mxu0 0.0
  %518 = vmatmul.mubr.f32.gmra.mrb[0].mxu0 %v381
  %v519 = vpop.f32.mrb[0].mxu0
  %v520 = vadd.f32 0.0, %v519
  %v521 = vpop.f32.mrb[0].mxu0
  %522 = vdwg.mxu0
  %v523 = vmax.f32 %v450, %v520
  %525 = vrot.lane.b32.xlu0 %v523, 25
  %v526 = vpop.permute.xlu0 %525
  %vm528 = vcmask 265416
  %529 = vst.msk [vmem:[#allocation2] sm:$0xf] %vm528, %v526
  %v530 = vld [vmem:[%s0] sm:$0xf]
  %532 = vrot.lane.b32.xlu0 %v530, 112
  %v533 = vpop.permute.xlu0 %532
  %v535 = vmax.f32 %v530, %v533
  %537 = vrot.lane.b32.xlu0 %v535, 32
  %v538 = vpop.permute.xlu0 %537
  %v539 = vsel %vm63, %v538, 0
  %541 = vmatprep.subr.mxu0 0.0
  %542 = vmatpush1.msra.mxu0 %v30
  %543 = vmatprep.subr.mxu0 0.0
  %544 = vmatpush1.msra.mxu0 %v31
  %545 = vmatprep.subr.mxu0 0.0
  %546 = vmatpush1.msra.mxu0 0.0
  %547 = vmatprep.subr.mxu0 0.0
  %548 = vmatpush1.msra.mxu0 0.0
  %549 = vmatprep.subr.mxu0 0.0
  %550 = vmatpush1.msra.mxu0 0.0
  %551 = vmatprep.subr.mxu0 0.0
  %552 = vmatpush1.msra.mxu0 0.0
  %553 = vmatprep.subr.mxu0 0.0
  %554 = vmatpush1.msra.mxu0 0.0
  %555 = vmatprep.subr.mxu0 0.0
  %556 = vmatpush1.msra.mxu0 0.0
  %557 = vmatprep.subr.mxu0 0.0
  %558 = vmatpush1.msra.mxu0 0.0
  %559 = vmatprep.subr.mxu0 0.0
  %560 = vmatpush1.msra.mxu0 0.0
  %561 = vmatprep.subr.mxu0 0.0
  %562 = vmatpush1.msra.mxu0 0.0
  %563 = vmatprep.subr.mxu0 0.0
  %564 = vmatpush1.msra.mxu0 0.0
  %565 = vmatprep.subr.mxu0 0.0
  %566 = vmatpush1.msra.mxu0 0.0
  %567 = vmatprep.subr.mxu0 0.0
  %568 = vmatpush1.msra.mxu0 0.0
  %569 = vmatprep.subr.mxu0 0.0
  %570 = vmatpush1.msra.mxu0 0.0
  %571 = vmatprep.subr.mxu0 0.0
  %572 = vmatpush1.msra.mxu0 0.0
  %573 = vmatprep.subr.mxu0 0.0
  %574 = vmatpush1.msra.mxu0 0.0
  %575 = vmatprep.subr.mxu0 0.0
  %576 = vmatpush1.msra.mxu0 0.0
  %577 = vmatprep.subr.mxu0 0.0
  %578 = vmatpush1.msra.mxu0 0.0
  %579 = vmatprep.subr.mxu0 0.0
  %580 = vmatpush1.msra.mxu0 0.0
  %581 = vmatprep.subr.mxu0 0.0
  %582 = vmatpush1.msra.mxu0 0.0
  %583 = vmatprep.subr.mxu0 0.0
  %584 = vmatpush1.msra.mxu0 0.0
  %585 = vmatprep.subr.mxu0 0.0
  %586 = vmatpush1.msra.mxu0 0.0
  %587 = vmatprep.subr.mxu0 0.0
  %588 = vmatpush1.msra.mxu0 0.0
  %589 = vmatprep.subr.mxu0 0.0
  %590 = vmatpush1.msra.mxu0 0.0
  %591 = vmatprep.subr.mxu0 0.0
  %592 = vmatpush1.msra.mxu0 0.0
  %593 = vmatprep.subr.mxu0 0.0
  %594 = vmatpush1.msra.mxu0 0.0
  %595 = vmatprep.subr.mxu0 0.0
  %596 = vmatpush1.msra.mxu0 0.0
  %597 = vmatprep.subr.mxu0 0.0
  %598 = vmatpush1.msra.mxu0 0.0
  %599 = vmatprep.subr.mxu0 0.0
  %600 = vmatpush1.msra.mxu0 0.0
  %601 = vmatprep.subr.mxu0 0.0
  %602 = vmatpush1.msra.mxu0 0.0
  %603 = vmatprep.subr.mxu0 0.0
  %604 = vmatpush1.msra.mxu0 0.0
  %605 = vmatprep.mubr.f32.mxu0 0.0
  %606 = vmatmul.mubr.f32.gmra.mrb[0].mxu0 %v539
  %v607 = vpop.f32.mrb[0].mxu0
  %v608 = vadd.f32 0.0, %v607
  %v609 = vpop.f32.mrb[0].mxu0
  %610 = vdwg.mxu0
  %611 = vmatprep.subr.mxu0 0.0
  %612 = vmatpush1.msra.mxu0 %v37
  %613 = vmatprep.subr.mxu0 0.0
  %614 = vmatpush1.msra.mxu0 %v38
  %615 = vmatprep.subr.mxu0 0.0
  %616 = vmatpush1.msra.mxu0 0.0
  %617 = vmatprep.subr.mxu0 0.0
  %618 = vmatpush1.msra.mxu0 0.0
  %619 = vmatprep.subr.mxu0 0.0
  %620 = vmatpush1.msra.mxu0 0.0
  %621 = vmatprep.subr.mxu0 0.0
  %622 = vmatpush1.msra.mxu0 0.0
  %623 = vmatprep.subr.mxu0 0.0
  %624 = vmatpush1.msra.mxu0 0.0
  %625 = vmatprep.subr.mxu0 0.0
  %626 = vmatpush1.msra.mxu0 0.0
  %627 = vmatprep.subr.mxu0 0.0
  %628 = vmatpush1.msra.mxu0 0.0
  %629 = vmatprep.subr.mxu0 0.0
  %630 = vmatpush1.msra.mxu0 0.0
  %631 = vmatprep.subr.mxu0 0.0
  %632 = vmatpush1.msra.mxu0 0.0
  %633 = vmatprep.subr.mxu0 0.0
  %634 = vmatpush1.msra.mxu0 0.0
  %635 = vmatprep.subr.mxu0 0.0
  %636 = vmatpush1.msra.mxu0 0.0
  %637 = vmatprep.subr.mxu0 0.0
  %638 = vmatpush1.msra.mxu0 0.0
  %639 = vmatprep.subr.mxu0 0.0
  %640 = vmatpush1.msra.mxu0 0.0
  %641 = vmatprep.subr.mxu0 0.0
  %642 = vmatpush1.msra.mxu0 0.0
  %643 = vmatprep.subr.mxu0 0.0
  %644 = vmatpush1.msra.mxu0 0.0
  %645 = vmatprep.subr.mxu0 0.0
  %646 = vmatpush1.msra.mxu0 0.0
  %647 = vmatprep.subr.mxu0 0.0
  %648 = vmatpush1.msra.mxu0 0.0
  %649 = vmatprep.subr.mxu0 0.0
  %650 = vmatpush1.msra.mxu0 0.0
  %651 = vmatprep.subr.mxu0 0.0
  %652 = vmatpush1.msra.mxu0 0.0
  %653 = vmatprep.subr.mxu0 0.0
  %654 = vmatpush1.msra.mxu0 0.0
  %655 = vmatprep.subr.mxu0 0.0
  %656 = vmatpush1.msra.mxu0 0.0
  %657 = vmatprep.subr.mxu0 0.0
  %658 = vmatpush1.msra.mxu0 0.0
  %659 = vmatprep.subr.mxu0 0.0
  %660 = vmatpush1.msra.mxu0 0.0
  %661 = vmatprep.subr.mxu0 0.0
  %662 = vmatpush1.msra.mxu0 0.0
  %663 = vmatprep.subr.mxu0 0.0
  %664 = vmatpush1.msra.mxu0 0.0
  %665 = vmatprep.subr.mxu0 0.0
  %666 = vmatpush1.msra.mxu0 0.0
  %667 = vmatprep.subr.mxu0 0.0
  %668 = vmatpush1.msra.mxu0 0.0
  %669 = vmatprep.subr.mxu0 0.0
  %670 = vmatpush1.msra.mxu0 0.0
  %671 = vmatprep.subr.mxu0 0.0
  %672 = vmatpush1.msra.mxu0 0.0
  %673 = vmatprep.subr.mxu0 0.0
  %674 = vmatpush1.msra.mxu0 0.0
  %675 = vmatprep.mubr.f32.mxu0 0.0
  %676 = vmatmul.mubr.f32.gmra.mrb[0].mxu0 %v539
  %v677 = vpop.f32.mrb[0].mxu0
  %v678 = vadd.f32 0.0, %v677
  %v679 = vpop.f32.mrb[0].mxu0
  %680 = vdwg.mxu0
  %v681 = vmax.f32 %v608, %v678
  %683 = vrot.lane.b32.xlu0 %v681, 33
  %v684 = vpop.permute.xlu0 %683
  %vm686 = vcmask 331016
  %687 = vst.msk [vmem:[#allocation2] sm:$0xf] %vm686, %v684
  %v688 = vld [vmem:[%s0 + $0x4] sm:$0xf]
  %690 = vrot.lane.b32.xlu0 %v688, 112
  %v691 = vpop.permute.xlu0 %690
  %v693 = vmax.f32 %v688, %v691
  %v695 = vsel %vm63, %v693, 0
  %697 = vmatprep.subr.mxu0 0.0
  %698 = vmatpush1.msra.mxu0 %v30
  %699 = vmatprep.subr.mxu0 0.0
  %700 = vmatpush1.msra.mxu0 %v31
  %701 = vmatprep.subr.mxu0 0.0
  %702 = vmatpush1.msra.mxu0 0.0
  %703 = vmatprep.subr.mxu0 0.0
  %704 = vmatpush1.msra.mxu0 0.0
  %705 = vmatprep.subr.mxu0 0.0
  %706 = vmatpush1.msra.mxu0 0.0
  %707 = vmatprep.subr.mxu0 0.0
  %708 = vmatpush1.msra.mxu0 0.0
  %709 = vmatprep.subr.mxu0 0.0
  %710 = vmatpush1.msra.mxu0 0.0
  %711 = vmatprep.subr.mxu0 0.0
  %712 = vmatpush1.msra.mxu0 0.0
  %713 = vmatprep.subr.mxu0 0.0
  %714 = vmatpush1.msra.mxu0 0.0
  %715 = vmatprep.subr.mxu0 0.0
  %716 = vmatpush1.msra.mxu0 0.0
  %717 = vmatprep.subr.mxu0 0.0
  %718 = vmatpush1.msra.mxu0 0.0
  %719 = vmatprep.subr.mxu0 0.0
  %720 = vmatpush1.msra.mxu0 0.0
  %721 = vmatprep.subr.mxu0 0.0
  %722 = vmatpush1.msra.mxu0 0.0
  %723 = vmatprep.subr.mxu0 0.0
  %724 = vmatpush1.msra.mxu0 0.0
  %725 = vmatprep.subr.mxu0 0.0
  %726 = vmatpush1.msra.mxu0 0.0
  %727 = vmatprep.subr.mxu0 0.0
  %728 = vmatpush1.msra.mxu0 0.0
  %729 = vmatprep.subr.mxu0 0.0
  %730 = vmatpush1.msra.mxu0 0.0
  %731 = vmatprep.subr.mxu0 0.0
  %732 = vmatpush1.msra.mxu0 0.0
  %733 = vmatprep.subr.mxu0 0.0
  %734 = vmatpush1.msra.mxu0 0.0
  %735 = vmatprep.subr.mxu0 0.0
  %736 = vmatpush1.msra.mxu0 0.0
  %737 = vmatprep.subr.mxu0 0.0
  %738 = vmatpush1.msra.mxu0 0.0
  %739 = vmatprep.subr.mxu0 0.0
  %740 = vmatpush1.msra.mxu0 0.0
  %741 = vmatprep.subr.mxu0 0.0
  %742 = vmatpush1.msra.mxu0 0.0
  %743 = vmatprep.subr.mxu0 0.0
  %744 = vmatpush1.msra.mxu0 0.0
  %745 = vmatprep.subr.mxu0 0.0
  %746 = vmatpush1.msra.mxu0 0.0
  %747 = vmatprep.subr.mxu0 0.0
  %748 = vmatpush1.msra.mxu0 0.0
  %749 = vmatprep.subr.mxu0 0.0
  %750 = vmatpush1.msra.mxu0 0.0
  %751 = vmatprep.subr.mxu0 0.0
  %752 = vmatpush1.msra.mxu0 0.0
  %753 = vmatprep.subr.mxu0 0.0
  %754 = vmatpush1.msra.mxu0 0.0
  %755 = vmatprep.subr.mxu0 0.0
  %756 = vmatpush1.msra.mxu0 0.0
  %757 = vmatprep.subr.mxu0 0.0
  %758 = vmatpush1.msra.mxu0 0.0
  %759 = vmatprep.subr.mxu0 0.0
  %760 = vmatpush1.msra.mxu0 0.0
  %761 = vmatprep.mubr.f32.mxu0 0.0
  %762 = vmatmul.mubr.f32.gmra.mrb[0].mxu0 %v695
  %v763 = vpop.f32.mrb[0].mxu0
  %v764 = vadd.f32 0.0, %v763
  %v765 = vpop.f32.mrb[0].mxu0
  %766 = vdwg.mxu0
  %767 = vmatprep.subr.mxu0 0.0
  %768 = vmatpush1.msra.mxu0 %v37
  %769 = vmatprep.subr.mxu0 0.0
  %770 = vmatpush1.msra.mxu0 %v38
  %771 = vmatprep.subr.mxu0 0.0
  %772 = vmatpush1.msra.mxu0 0.0
  %773 = vmatprep.subr.mxu0 0.0
  %774 = vmatpush1.msra.mxu0 0.0
  %775 = vmatprep.subr.mxu0 0.0
  %776 = vmatpush1.msra.mxu0 0.0
  %777 = vmatprep.subr.mxu0 0.0
  %778 = vmatpush1.msra.mxu0 0.0
  %779 = vmatprep.subr.mxu0 0.0
  %780 = vmatpush1.msra.mxu0 0.0
  %781 = vmatprep.subr.mxu0 0.0
  %782 = vmatpush1.msra.mxu0 0.0
  %783 = vmatprep.subr.mxu0 0.0
  %784 = vmatpush1.msra.mxu0 0.0
  %785 = vmatprep.subr.mxu0 0.0
  %786 = vmatpush1.msra.mxu0 0.0
  %787 = vmatprep.subr.mxu0 0.0
  %788 = vmatpush1.msra.mxu0 0.0
  %789 = vmatprep.subr.mxu0 0.0
  %790 = vmatpush1.msra.mxu0 0.0
  %791 = vmatprep.subr.mxu0 0.0
  %792 = vmatpush1.msra.mxu0 0.0
  %793 = vmatprep.subr.mxu0 0.0
  %794 = vmatpush1.msra.mxu0 0.0
  %795 = vmatprep.subr.mxu0 0.0
  %796 = vmatpush1.msra.mxu0 0.0
  %797 = vmatprep.subr.mxu0 0.0
  %798 = vmatpush1.msra.mxu0 0.0
  %799 = vmatprep.subr.mxu0 0.0
  %800 = vmatpush1.msra.mxu0 0.0
  %801 = vmatprep.subr.mxu0 0.0
  %802 = vmatpush1.msra.mxu0 0.0
  %803 = vmatprep.subr.mxu0 0.0
  %804 = vmatpush1.msra.mxu0 0.0
  %805 = vmatprep.subr.mxu0 0.0
  %806 = vmatpush1.msra.mxu0 0.0
  %807 = vmatprep.subr.mxu0 0.0
  %808 = vmatpush1.msra.mxu0 0.0
  %809 = vmatprep.subr.mxu0 0.0
  %810 = vmatpush1.msra.mxu0 0.0
  %811 = vmatprep.subr.mxu0 0.0
  %812 = vmatpush1.msra.mxu0 0.0
  %813 = vmatprep.subr.mxu0 0.0
  %814 = vmatpush1.msra.mxu0 0.0
  %815 = vmatprep.subr.mxu0 0.0
  %816 = vmatpush1.msra.mxu0 0.0
  %817 = vmatprep.subr.mxu0 0.0
  %818 = vmatpush1.msra.mxu0 0.0
  %819 = vmatprep.subr.mxu0 0.0
  %820 = vmatpush1.msra.mxu0 0.0
  %821 = vmatprep.subr.mxu0 0.0
  %822 = vmatpush1.msra.mxu0 0.0
  %823 = vmatprep.subr.mxu0 0.0
  %824 = vmatpush1.msra.mxu0 0.0
  %825 = vmatprep.subr.mxu0 0.0
  %826 = vmatpush1.msra.mxu0 0.0
  %827 = vmatprep.subr.mxu0 0.0
  %828 = vmatpush1.msra.mxu0 0.0
  %829 = vmatprep.subr.mxu0 0.0
  %830 = vmatpush1.msra.mxu0 0.0
  %831 = vmatprep.mubr.f32.mxu0 0.0
  %832 = vmatmul.mubr.f32.gmra.mrb[0].mxu0 %v695
  %v833 = vpop.f32.mrb[0].mxu0
  %v834 = vadd.f32 0.0, %v833
  %v835 = vpop.f32.mrb[0].mxu0
  %836 = vdwg.mxu0
  %v837 = vmax.f32 %v764, %v834
  %839 = vrot.lane.b32.xlu0 %v837, 41
  %v840 = vpop.permute.xlu0 %839
  %vm842 = vcmask 396616
  %843 = vst.msk [vmem:[#allocation2] sm:$0xf] %vm842, %v840
  %v844 = vld [vmem:[%s0 + $0x4] sm:$0xf]
  %846 = vrot.lane.b32.xlu0 %v844, 112
  %v847 = vpop.permute.xlu0 %846
  %v849 = vmax.f32 %v844, %v847
  %851 = vrot.lane.b32.xlu0 %v849, 96
  %v852 = vpop.permute.xlu0 %851
  %v853 = vsel %vm63, %v852, 0
  %855 = vmatprep.subr.mxu0 0.0
  %856 = vmatpush1.msra.mxu0 %v30
  %857 = vmatprep.subr.mxu0 0.0
  %858 = vmatpush1.msra.mxu0 %v31
  %859 = vmatprep.subr.mxu0 0.0
  %860 = vmatpush1.msra.mxu0 0.0
  %861 = vmatprep.subr.mxu0 0.0
  %862 = vmatpush1.msra.mxu0 0.0
  %863 = vmatprep.subr.mxu0 0.0
  %864 = vmatpush1.msra.mxu0 0.0
  %865 = vmatprep.subr.mxu0 0.0
  %866 = vmatpush1.msra.mxu0 0.0
  %867 = vmatprep.subr.mxu0 0.0
  %868 = vmatpush1.msra.mxu0 0.0
  %869 = vmatprep.subr.mxu0 0.0
  %870 = vmatpush1.msra.mxu0 0.0
  %871 = vmatprep.subr.mxu0 0.0
  %872 = vmatpush1.msra.mxu0 0.0
  %873 = vmatprep.subr.mxu0 0.0
  %874 = vmatpush1.msra.mxu0 0.0
  %875 = vmatprep.subr.mxu0 0.0
  %876 = vmatpush1.msra.mxu0 0.0
  %877 = vmatprep.subr.mxu0 0.0
  %878 = vmatpush1.msra.mxu0 0.0
  %879 = vmatprep.subr.mxu0 0.0
  %880 = vmatpush1.msra.mxu0 0.0
  %881 = vmatprep.subr.mxu0 0.0
  %882 = vmatpush1.msra.mxu0 0.0
  %883 = vmatprep.subr.mxu0 0.0
  %884 = vmatpush1.msra.mxu0 0.0
  %885 = vmatprep.subr.mxu0 0.0
  %886 = vmatpush1.msra.mxu0 0.0
  %887 = vmatprep.subr.mxu0 0.0
  %888 = vmatpush1.msra.mxu0 0.0
  %889 = vmatprep.subr.mxu0 0.0
  %890 = vmatpush1.msra.mxu0 0.0
  %891 = vmatprep.subr.mxu0 0.0
  %892 = vmatpush1.msra.mxu0 0.0
  %893 = vmatprep.subr.mxu0 0.0
  %894 = vmatpush1.msra.mxu0 0.0
  %895 = vmatprep.subr.mxu0 0.0
  %896 = vmatpush1.msra.mxu0 0.0
  %897 = vmatprep.subr.mxu0 0.0
  %898 = vmatpush1.msra.mxu0 0.0
  %899 = vmatprep.subr.mxu0 0.0
  %900 = vmatpush1.msra.mxu0 0.0
  %901 = vmatprep.subr.mxu0 0.0
  %902 = vmatpush1.msra.mxu0 0.0
  %903 = vmatprep.subr.mxu0 0.0
  %904 = vmatpush1.msra.mxu0 0.0
  %905 = vmatprep.subr.mxu0 0.0
  %906 = vmatpush1.msra.mxu0 0.0
  %907 = vmatprep.subr.mxu0 0.0
  %908 = vmatpush1.msra.mxu0 0.0
  %909 = vmatprep.subr.mxu0 0.0
  %910 = vmatpush1.msra.mxu0 0.0
  %911 = vmatprep.subr.mxu0 0.0
  %912 = vmatpush1.msra.mxu0 0.0
  %913 = vmatprep.subr.mxu0 0.0
  %914 = vmatpush1.msra.mxu0 0.0
  %915 = vmatprep.subr.mxu0 0.0
  %916 = vmatpush1.msra.mxu0 0.0
  %917 = vmatprep.subr.mxu0 0.0
  %918 = vmatpush1.msra.mxu0 0.0
  %919 = vmatprep.mubr.f32.mxu0 0.0
  %920 = vmatmul.mubr.f32.gmra.mrb[0].mxu0 %v853
  %v921 = vpop.f32.mrb[0].mxu0
  %v922 = vadd.f32 0.0, %v921
  %v923 = vpop.f32.mrb[0].mxu0
  %924 = vdwg.mxu0
  %925 = vmatprep.subr.mxu0 0.0
  %926 = vmatpush1.msra.mxu0 %v37
  %927 = vmatprep.subr.mxu0 0.0
  %928 = vmatpush1.msra.mxu0 %v38
  %929 = vmatprep.subr.mxu0 0.0
  %930 = vmatpush1.msra.mxu0 0.0
  %931 = vmatprep.subr.mxu0 0.0
  %932 = vmatpush1.msra.mxu0 0.0
  %933 = vmatprep.subr.mxu0 0.0
  %934 = vmatpush1.msra.mxu0 0.0
  %935 = vmatprep.subr.mxu0 0.0
  %936 = vmatpush1.msra.mxu0 0.0
  %937 = vmatprep.subr.mxu0 0.0
  %938 = vmatpush1.msra.mxu0 0.0
  %939 = vmatprep.subr.mxu0 0.0
  %940 = vmatpush1.msra.mxu0 0.0
  %941 = vmatprep.subr.mxu0 0.0
  %942 = vmatpush1.msra.mxu0 0.0
  %943 = vmatprep.subr.mxu0 0.0
  %944 = vmatpush1.msra.mxu0 0.0
  %945 = vmatprep.subr.mxu0 0.0
  %946 = vmatpush1.msra.mxu0 0.0
  %947 = vmatprep.subr.mxu0 0.0
  %948 = vmatpush1.msra.mxu0 0.0
  %949 = vmatprep.subr.mxu0 0.0
  %950 = vmatpush1.msra.mxu0 0.0
  %951 = vmatprep.subr.mxu0 0.0
  %952 = vmatpush1.msra.mxu0 0.0
  %953 = vmatprep.subr.mxu0 0.0
  %954 = vmatpush1.msra.mxu0 0.0
  %955 = vmatprep.subr.mxu0 0.0
  %956 = vmatpush1.msra.mxu0 0.0
  %957 = vmatprep.subr.mxu0 0.0
  %958 = vmatpush1.msra.mxu0 0.0
  %959 = vmatprep.subr.mxu0 0.0
  %960 = vmatpush1.msra.mxu0 0.0
  %961 = vmatprep.subr.mxu0 0.0
  %962 = vmatpush1.msra.mxu0 0.0
  %963 = vmatprep.subr.mxu0 0.0
  %964 = vmatpush1.msra.mxu0 0.0
  %965 = vmatprep.subr.mxu0 0.0
  %966 = vmatpush1.msra.mxu0 0.0
  %967 = vmatprep.subr.mxu0 0.0
  %968 = vmatpush1.msra.mxu0 0.0
  %969 = vmatprep.subr.mxu0 0.0
  %970 = vmatpush1.msra.mxu0 0.0
  %971 = vmatprep.subr.mxu0 0.0
  %972 = vmatpush1.msra.mxu0 0.0
  %973 = vmatprep.subr.mxu0 0.0
  %974 = vmatpush1.msra.mxu0 0.0
  %975 = vmatprep.subr.mxu0 0.0
  %976 = vmatpush1.msra.mxu0 0.0
  %977 = vmatprep.subr.mxu0 0.0
  %978 = vmatpush1.msra.mxu0 0.0
  %979 = vmatprep.subr.mxu0 0.0
  %980 = vmatpush1.msra.mxu0 0.0
  %981 = vmatprep.subr.mxu0 0.0
  %982 = vmatpush1.msra.mxu0 0.0
  %983 = vmatprep.subr.mxu0 0.0
  %984 = vmatpush1.msra.mxu0 0.0
  %985 = vmatprep.subr.mxu0 0.0
  %986 = vmatpush1.msra.mxu0 0.0
  %987 = vmatprep.subr.mxu0 0.0
  %988 = vmatpush1.msra.mxu0 0.0
  %989 = vmatprep.mubr.f32.mxu0 0.0
  %990 = vmatmul.mubr.f32.gmra.mrb[0].mxu0 %v853
  %v991 = vpop.f32.mrb[0].mxu0
  %v992 = vadd.f32 0.0, %v991
  %v993 = vpop.f32.mrb[0].mxu0
  %994 = vdwg.mxu0
  %v995 = vmax.f32 %v922, %v992
  %997 = vrot.lane.b32.xlu0 %v995, 49
  %v998 = vpop.permute.xlu0 %997
  %vm1000 = vcmask 462216
  %1001 = vst.msk [vmem:[#allocation2] sm:$0xf] %vm1000, %v998
  %v1002 = vld [vmem:[%s0 + $0x4] sm:$0xf]
  %1004 = vrot.lane.b32.xlu0 %v1002, 112
  %v1005 = vpop.permute.xlu0 %1004
  %v1007 = vmax.f32 %v1002, %v1005
  %1009 = vrot.lane.b32.xlu0 %v1007, 64
  %v1010 = vpop.permute.xlu0 %1009
  %v1011 = vsel %vm63, %v1010, 0
  %1013 = vmatprep.subr.mxu0 0.0
  %1014 = vmatpush1.msra.mxu0 %v30
  %1015 = vmatprep.subr.mxu0 0.0
  %1016 = vmatpush1.msra.mxu0 %v31
  %1017 = vmatprep.subr.mxu0 0.0
  %1018 = vmatpush1.msra.mxu0 0.0
  %1019 = vmatprep.subr.mxu0 0.0
  %1020 = vmatpush1.msra.mxu0 0.0
  %1021 = vmatprep.subr.mxu0 0.0
  %1022 = vmatpush1.msra.mxu0 0.0
  %1023 = vmatprep.subr.mxu0 0.0
  %1024 = vmatpush1.msra.mxu0 0.0
  %1025 = vmatprep.subr.mxu0 0.0
  %1026 = vmatpush1.msra.mxu0 0.0
  %1027 = vmatprep.subr.mxu0 0.0
  %1028 = vmatpush1.msra.mxu0 0.0
  %1029 = vmatprep.subr.mxu0 0.0
  %1030 = vmatpush1.msra.mxu0 0.0
  %1031 = vmatprep.subr.mxu0 0.0
  %1032 = vmatpush1.msra.mxu0 0.0
  %1033 = vmatprep.subr.mxu0 0.0
  %1034 = vmatpush1.msra.mxu0 0.0
  %1035 = vmatprep.subr.mxu0 0.0
  %1036 = vmatpush1.msra.mxu0 0.0
  %1037 = vmatprep.subr.mxu0 0.0
  %1038 = vmatpush1.msra.mxu0 0.0
  %1039 = vmatprep.subr.mxu0 0.0
  %1040 = vmatpush1.msra.mxu0 0.0
  %1041 = vmatprep.subr.mxu0 0.0
  %1042 = vmatpush1.msra.mxu0 0.0
  %1043 = vmatprep.subr.mxu0 0.0
  %1044 = vmatpush1.msra.mxu0 0.0
  %1045 = vmatprep.subr.mxu0 0.0
  %1046 = vmatpush1.msra.mxu0 0.0
  %1047 = vmatprep.subr.mxu0 0.0
  %1048 = vmatpush1.msra.mxu0 0.0
  %1049 = vmatprep.subr.mxu0 0.0
  %1050 = vmatpush1.msra.mxu0 0.0
  %1051 = vmatprep.subr.mxu0 0.0
  %1052 = vmatpush1.msra.mxu0 0.0
  %1053 = vmatprep.subr.mxu0 0.0
  %1054 = vmatpush1.msra.mxu0 0.0
  %1055 = vmatprep.subr.mxu0 0.0
  %1056 = vmatpush1.msra.mxu0 0.0
  %1057 = vmatprep.subr.mxu0 0.0
  %1058 = vmatpush1.msra.mxu0 0.0
  %1059 = vmatprep.subr.mxu0 0.0
  %1060 = vmatpush1.msra.mxu0 0.0
  %1061 = vmatprep.subr.mxu0 0.0
  %1062 = vmatpush1.msra.mxu0 0.0
  %1063 = vmatprep.subr.mxu0 0.0
  %1064 = vmatpush1.msra.mxu0 0.0
  %1065 = vmatprep.subr.mxu0 0.0
  %1066 = vmatpush1.msra.mxu0 0.0
  %1067 = vmatprep.subr.mxu0 0.0
  %1068 = vmatpush1.msra.mxu0 0.0
  %1069 = vmatprep.subr.mxu0 0.0
  %1070 = vmatpush1.msra.mxu0 0.0
  %1071 = vmatprep.subr.mxu0 0.0
  %1072 = vmatpush1.msra.mxu0 0.0
  %1073 = vmatprep.subr.mxu0 0.0
  %1074 = vmatpush1.msra.mxu0 0.0
  %1075 = vmatprep.subr.mxu0 0.0
  %1076 = vmatpush1.msra.mxu0 0.0
  %1077 = vmatprep.mubr.f32.mxu0 0.0
  %1078 = vmatmul.mubr.f32.gmra.mrb[0].mxu0 %v1011
  %v1079 = vpop.f32.mrb[0].mxu0
  %v1080 = vadd.f32 0.0, %v1079
  %v1081 = vpop.f32.mrb[0].mxu0
  %1082 = vdwg.mxu0
  %1083 = vmatprep.subr.mxu0 0.0
  %1084 = vmatpush1.msra.mxu0 %v37
  %1085 = vmatprep.subr.mxu0 0.0
  %1086 = vmatpush1.msra.mxu0 %v38
  %1087 = vmatprep.subr.mxu0 0.0
  %1088 = vmatpush1.msra.mxu0 0.0
  %1089 = vmatprep.subr.mxu0 0.0
  %1090 = vmatpush1.msra.mxu0 0.0
  %1091 = vmatprep.subr.mxu0 0.0
  %1092 = vmatpush1.msra.mxu0 0.0
  %1093 = vmatprep.subr.mxu0 0.0
  %1094 = vmatpush1.msra.mxu0 0.0
  %1095 = vmatprep.subr.mxu0 0.0
  %1096 = vmatpush1.msra.mxu0 0.0
  %1097 = vmatprep.subr.mxu0 0.0
  %1098 = vmatpush1.msra.mxu0 0.0
  %1099 = vmatprep.subr.mxu0 0.0
  %1100 = vmatpush1.msra.mxu0 0.0
  %1101 = vmatprep.subr.mxu0 0.0
  %1102 = vmatpush1.msra.mxu0 0.0
  %1103 = vmatprep.subr.mxu0 0.0
  %1104 = vmatpush1.msra.mxu0 0.0
  %1105 = vmatprep.subr.mxu0 0.0
  %1106 = vmatpush1.msra.mxu0 0.0
  %1107 = vmatprep.subr.mxu0 0.0
  %1108 = vmatpush1.msra.mxu0 0.0
  %1109 = vmatprep.subr.mxu0 0.0
  %1110 = vmatpush1.msra.mxu0 0.0
  %1111 = vmatprep.subr.mxu0 0.0
  %1112 = vmatpush1.msra.mxu0 0.0
  %1113 = vmatprep.subr.mxu0 0.0
  %1114 = vmatpush1.msra.mxu0 0.0
  %1115 = vmatprep.subr.mxu0 0.0
  %1116 = vmatpush1.msra.mxu0 0.0
  %1117 = vmatprep.subr.mxu0 0.0
  %1118 = vmatpush1.msra.mxu0 0.0
  %1119 = vmatprep.subr.mxu0 0.0
  %1120 = vmatpush1.msra.mxu0 0.0
  %1121 = vmatprep.subr.mxu0 0.0
  %1122 = vmatpush1.msra.mxu0 0.0
  %1123 = vmatprep.subr.mxu0 0.0
  %1124 = vmatpush1.msra.mxu0 0.0
  %1125 = vmatprep.subr.mxu0 0.0
  %1126 = vmatpush1.msra.mxu0 0.0
  %1127 = vmatprep.subr.mxu0 0.0
  %1128 = vmatpush1.msra.mxu0 0.0
  %1129 = vmatprep.subr.mxu0 0.0
  %1130 = vmatpush1.msra.mxu0 0.0
  %1131 = vmatprep.subr.mxu0 0.0
  %1132 = vmatpush1.msra.mxu0 0.0
  %1133 = vmatprep.subr.mxu0 0.0
  %1134 = vmatpush1.msra.mxu0 0.0
  %1135 = vmatprep.subr.mxu0 0.0
  %1136 = vmatpush1.msra.mxu0 0.0
  %1137 = vmatprep.subr.mxu0 0.0
  %1138 = vmatpush1.msra.mxu0 0.0
  %1139 = vmatprep.subr.mxu0 0.0
  %1140 = vmatpush1.msra.mxu0 0.0
  %1141 = vmatprep.subr.mxu0 0.0
  %1142 = vmatpush1.msra.mxu0 0.0
  %1143 = vmatprep.subr.mxu0 0.0
  %1144 = vmatpush1.msra.mxu0 0.0
  %1145 = vmatprep.subr.mxu0 0.0
  %1146 = vmatpush1.msra.mxu0 0.0
  %1147 = vmatprep.mubr.f32.mxu0 0.0
  %1148 = vmatmul.mubr.f32.gmra.mrb[0].mxu0 %v1011
  %v1149 = vpop.f32.mrb[0].mxu0
  %v1150 = vadd.f32 0.0, %v1149
  %v1151 = vpop.f32.mrb[0].mxu0
  %1152 = vdwg.mxu0
  %v1153 = vmax.f32 %v1080, %v1150
  %1155 = vrot.lane.b32.xlu0 %v1153, 57
  %v1156 = vpop.permute.xlu0 %1155
  %vm1158 = vcmask 527816
  %1159 = vst.msk [vmem:[#allocation2] sm:$0xf] %vm1158, %v1156
  %v1160 = vld [vmem:[%s0 + $0x4] sm:$0xf]
  %1162 = vrot.lane.b32.xlu0 %v1160, 112
  %v1163 = vpop.permute.xlu0 %1162
  %v1165 = vmax.f32 %v1160, %v1163
  %1167 = vrot.lane.b32.xlu0 %v1165, 32
  %v1168 = vpop.permute.xlu0 %1167
  %v1169 = vsel %vm63, %v1168, 0
  %1171 = vmatprep.subr.mxu0 0.0
  %1172 = vmatpush1.msra.mxu0 %v30
  %1173 = vmatprep.subr.mxu0 0.0
  %1174 = vmatpush1.msra.mxu0 %v31
  %1175 = vmatprep.subr.mxu0 0.0
  %1176 = vmatpush1.msra.mxu0 0.0
  %1177 = vmatprep.subr.mxu0 0.0
  %1178 = vmatpush1.msra.mxu0 0.0
  %1179 = vmatprep.subr.mxu0 0.0
  %1180 = vmatpush1.msra.mxu0 0.0
  %1181 = vmatprep.subr.mxu0 0.0
  %1182 = vmatpush1.msra.mxu0 0.0
  %1183 = vmatprep.subr.mxu0 0.0
  %1184 = vmatpush1.msra.mxu0 0.0
  %1185 = vmatprep.subr.mxu0 0.0
  %1186 = vmatpush1.msra.mxu0 0.0
  %1187 = vmatprep.subr.mxu0 0.0
  %1188 = vmatpush1.msra.mxu0 0.0
  %1189 = vmatprep.subr.mxu0 0.0
  %1190 = vmatpush1.msra.mxu0 0.0
  %1191 = vmatprep.subr.mxu0 0.0
  %1192 = vmatpush1.msra.mxu0 0.0
  %1193 = vmatprep.subr.mxu0 0.0
  %1194 = vmatpush1.msra.mxu0 0.0
  %1195 = vmatprep.subr.mxu0 0.0
  %1196 = vmatpush1.msra.mxu0 0.0
  %1197 = vmatprep.subr.mxu0 0.0
  %1198 = vmatpush1.msra.mxu0 0.0
  %1199 = vmatprep.subr.mxu0 0.0
  %1200 = vmatpush1.msra.mxu0 0.0
  %1201 = vmatprep.subr.mxu0 0.0
  %1202 = vmatpush1.msra.mxu0 0.0
  %1203 = vmatprep.subr.mxu0 0.0
  %1204 = vmatpush1.msra.mxu0 0.0
  %1205 = vmatprep.subr.mxu0 0.0
  %1206 = vmatpush1.msra.mxu0 0.0
  %1207 = vmatprep.subr.mxu0 0.0
  %1208 = vmatpush1.msra.mxu0 0.0
  %1209 = vmatprep.subr.mxu0 0.0
  %1210 = vmatpush1.msra.mxu0 0.0
  %1211 = vmatprep.subr.mxu0 0.0
  %1212 = vmatpush1.msra.mxu0 0.0
  %1213 = vmatprep.subr.mxu0 0.0
  %1214 = vmatpush1.msra.mxu0 0.0
  %1215 = vmatprep.subr.mxu0 0.0
  %1216 = vmatpush1.msra.mxu0 0.0
  %1217 = vmatprep.subr.mxu0 0.0
  %1218 = vmatpush1.msra.mxu0 0.0
  %1219 = vmatprep.subr.mxu0 0.0
  %1220 = vmatpush1.msra.mxu0 0.0
  %1221 = vmatprep.subr.mxu0 0.0
  %1222 = vmatpush1.msra.mxu0 0.0
  %1223 = vmatprep.subr.mxu0 0.0
  %1224 = vmatpush1.msra.mxu0 0.0
  %1225 = vmatprep.subr.mxu0 0.0
  %1226 = vmatpush1.msra.mxu0 0.0
  %1227 = vmatprep.subr.mxu0 0.0
  %1228 = vmatpush1.msra.mxu0 0.0
  %1229 = vmatprep.subr.mxu0 0.0
  %1230 = vmatpush1.msra.mxu0 0.0
  %1231 = vmatprep.subr.mxu0 0.0
  %1232 = vmatpush1.msra.mxu0 0.0
  %1233 = vmatprep.subr.mxu0 0.0
  %1234 = vmatpush1.msra.mxu0 0.0
  %1235 = vmatprep.mubr.f32.mxu0 0.0
  %1236 = vmatmul.mubr.f32.gmra.mrb[0].mxu0 %v1169
  %v1237 = vpop.f32.mrb[0].mxu0
  %v1238 = vadd.f32 0.0, %v1237
  %v1239 = vpop.f32.mrb[0].mxu0
  %1240 = vdwg.mxu0
  %1241 = vmatprep.subr.mxu0 0.0
  %1242 = vmatpush1.msra.mxu0 %v37
  %1243 = vmatprep.subr.mxu0 0.0
  %1244 = vmatpush1.msra.mxu0 %v38
  %1245 = vmatprep.subr.mxu0 0.0
  %1246 = vmatpush1.msra.mxu0 0.0
  %1247 = vmatprep.subr.mxu0 0.0
  %1248 = vmatpush1.msra.mxu0 0.0
  %1249 = vmatprep.subr.mxu0 0.0
  %1250 = vmatpush1.msra.mxu0 0.0
  %1251 = vmatprep.subr.mxu0 0.0
  %1252 = vmatpush1.msra.mxu0 0.0
  %1253 = vmatprep.subr.mxu0 0.0
  %1254 = vmatpush1.msra.mxu0 0.0
  %1255 = vmatprep.subr.mxu0 0.0
  %1256 = vmatpush1.msra.mxu0 0.0
  %1257 = vmatprep.subr.mxu0 0.0
  %1258 = vmatpush1.msra.mxu0 0.0
  %1259 = vmatprep.subr.mxu0 0.0
  %1260 = vmatpush1.msra.mxu0 0.0
  %1261 = vmatprep.subr.mxu0 0.0
  %1262 = vmatpush1.msra.mxu0 0.0
  %1263 = vmatprep.subr.mxu0 0.0
  %1264 = vmatpush1.msra.mxu0 0.0
  %1265 = vmatprep.subr.mxu0 0.0
  %1266 = vmatpush1.msra.mxu0 0.0
  %1267 = vmatprep.subr.mxu0 0.0
  %1268 = vmatpush1.msra.mxu0 0.0
  %1269 = vmatprep.subr.mxu0 0.0
  %1270 = vmatpush1.msra.mxu0 0.0
  %1271 = vmatprep.subr.mxu0 0.0
  %1272 = vmatpush1.msra.mxu0 0.0
  %1273 = vmatprep.subr.mxu0 0.0
  %1274 = vmatpush1.msra.mxu0 0.0
  %1275 = vmatprep.subr.mxu0 0.0
  %1276 = vmatpush1.msra.mxu0 0.0
  %1277 = vmatprep.subr.mxu0 0.0
  %1278 = vmatpush1.msra.mxu0 0.0
  %1279 = vmatprep.subr.mxu0 0.0
  %1280 = vmatpush1.msra.mxu0 0.0
  %1281 = vmatprep.subr.mxu0 0.0
  %1282 = vmatpush1.msra.mxu0 0.0
  %1283 = vmatprep.subr.mxu0 0.0
  %1284 = vmatpush1.msra.mxu0 0.0
  %1285 = vmatprep.subr.mxu0 0.0
  %1286 = vmatpush1.msra.mxu0 0.0
  %1287 = vmatprep.subr.mxu0 0.0
  %1288 = vmatpush1.msra.mxu0 0.0
  %1289 = vmatprep.subr.mxu0 0.0
  %1290 = vmatpush1.msra.mxu0 0.0
  %1291 = vmatprep.subr.mxu0 0.0
  %1292 = vmatpush1.msra.mxu0 0.0
  %1293 = vmatprep.subr.mxu0 0.0
  %1294 = vmatpush1.msra.mxu0 0.0
  %1295 = vmatprep.subr.mxu0 0.0
  %1296 = vmatpush1.msra.mxu0 0.0
  %1297 = vmatprep.subr.mxu0 0.0
  %1298 = vmatpush1.msra.mxu0 0.0
  %1299 = vmatprep.subr.mxu0 0.0
  %1300 = vmatpush1.msra.mxu0 0.0
  %1301 = vmatprep.subr.mxu0 0.0
  %1302 = vmatpush1.msra.mxu0 0.0
  %1303 = vmatprep.subr.mxu0 0.0
  %1304 = vmatpush1.msra.mxu0 0.0
  %1305 = vmatprep.mubr.f32.mxu0 0.0
  %1306 = vmatmul.mubr.f32.gmra.mrb[0].mxu0 %v1169
  %v1307 = vpop.f32.mrb[0].mxu0
  %v1308 = vadd.f32 0.0, %v1307
  %v1309 = vpop.f32.mrb[0].mxu0
  %1310 = vdwg.mxu0
  %v1311 = vmax.f32 %v1238, %v1308
  %1313 = vrot.lane.b32.xlu0 %v1311, 65
  %v1314 = vpop.permute.xlu0 %1313
  %vm1316 = vcmask 593416
  %1317 = vst.msk [vmem:[#allocation2] sm:$0xf] %vm1316, %v1314
  %s1318 = scalar_lea.vmem [#allocation2], 4
  %1319 = vst.msk [vmem:[%s1318] sm:$0xf] %vm53, 0.0
  %1320 = vst.msk [vmem:[%s1318] sm:$0xf] %vm55, 0.0
  %s1321 = scalar_lea.vmem %s0, 8
  %v1322 = vld [vmem:[%s1321] sm:$0xf]
  %1324 = vrot.lane.b32.xlu0 %v1322, 112
  %v1325 = vpop.permute.xlu0 %1324
  %v1327 = vmax.f32 %v1322, %v1325
  %v1329 = vsel %vm63, %v1327, 0
  %1331 = vmatprep.subr.mxu0 0.0
  %1332 = vmatpush1.msra.mxu0 %v30
  %1333 = vmatprep.subr.mxu0 0.0
  %1334 = vmatpush1.msra.mxu0 %v31
  %1335 = vmatprep.subr.mxu0 0.0
  %1336 = vmatpush1.msra.mxu0 0.0
  %1337 = vmatprep.subr.mxu0 0.0
  %1338 = vmatpush1.msra.mxu0 0.0
  %1339 = vmatprep.subr.mxu0 0.0
  %1340 = vmatpush1.msra.mxu0 0.0
  %1341 = vmatprep.subr.mxu0 0.0
  %1342 = vmatpush1.msra.mxu0 0.0
  %1343 = vmatprep.subr.mxu0 0.0
  %1344 = vmatpush1.msra.mxu0 0.0
  %1345 = vmatprep.subr.mxu0 0.0
  %1346 = vmatpush1.msra.mxu0 0.0
  %1347 = vmatprep.subr.mxu0 0.0
  %1348 = vmatpush1.msra.mxu0 0.0
  %1349 = vmatprep.subr.mxu0 0.0
  %1350 = vmatpush1.msra.mxu0 0.0
  %1351 = vmatprep.subr.mxu0 0.0
  %1352 = vmatpush1.msra.mxu0 0.0
  %1353 = vmatprep.subr.mxu0 0.0
  %1354 = vmatpush1.msra.mxu0 0.0
  %1355 = vmatprep.subr.mxu0 0.0
  %1356 = vmatpush1.msra.mxu0 0.0
  %1357 = vmatprep.subr.mxu0 0.0
  %1358 = vmatpush1.msra.mxu0 0.0
  %1359 = vmatprep.subr.mxu0 0.0
  %1360 = vmatpush1.msra.mxu0 0.0
  %1361 = vmatprep.subr.mxu0 0.0
  %1362 = vmatpush1.msra.mxu0 0.0
  %1363 = vmatprep.subr.mxu0 0.0
  %1364 = vmatpush1.msra.mxu0 0.0
  %1365 = vmatprep.subr.mxu0 0.0
  %1366 = vmatpush1.msra.mxu0 0.0
  %1367 = vmatprep.subr.mxu0 0.0
  %1368 = vmatpush1.msra.mxu0 0.0
  %1369 = vmatprep.subr.mxu0 0.0
  %1370 = vmatpush1.msra.mxu0 0.0
  %1371 = vmatprep.subr.mxu0 0.0
  %1372 = vmatpush1.msra.mxu0 0.0
  %1373 = vmatprep.subr.mxu0 0.0
  %1374 = vmatpush1.msra.mxu0 0.0
  %1375 = vmatprep.subr.mxu0 0.0
  %1376 = vmatpush1.msra.mxu0 0.0
  %1377 = vmatprep.subr.mxu0 0.0
  %1378 = vmatpush1.msra.mxu0 0.0
  %1379 = vmatprep.subr.mxu0 0.0
  %1380 = vmatpush1.msra.mxu0 0.0
  %1381 = vmatprep.subr.mxu0 0.0
  %1382 = vmatpush1.msra.mxu0 0.0
  %1383 = vmatprep.subr.mxu0 0.0
  %1384 = vmatpush1.msra.mxu0 0.0
  %1385 = vmatprep.subr.mxu0 0.0
  %1386 = vmatpush1.msra.mxu0 0.0
  %1387 = vmatprep.subr.mxu0 0.0
  %1388 = vmatpush1.msra.mxu0 0.0
  %1389 = vmatprep.subr.mxu0 0.0
  %1390 = vmatpush1.msra.mxu0 0.0
  %1391 = vmatprep.subr.mxu0 0.0
  %1392 = vmatpush1.msra.mxu0 0.0
  %1393 = vmatprep.subr.mxu0 0.0
  %1394 = vmatpush1.msra.mxu0 0.0
  %1395 = vmatprep.mubr.f32.mxu0 0.0
  %1396 = vmatmul.mubr.f32.gmra.mrb[0].mxu0 %v1329
  %v1397 = vpop.f32.mrb[0].mxu0
  %v1398 = vadd.f32 0.0, %v1397
  %v1399 = vpop.f32.mrb[0].mxu0
  %1400 = vdwg.mxu0
  %1401 = vmatprep.subr.mxu0 0.0
  %1402 = vmatpush1.msra.mxu0 %v37
  %1403 = vmatprep.subr.mxu0 0.0
  %1404 = vmatpush1.msra.mxu0 %v38
  %1405 = vmatprep.subr.mxu0 0.0
  %1406 = vmatpush1.msra.mxu0 0.0
  %1407 = vmatprep.subr.mxu0 0.0
  %1408 = vmatpush1.msra.mxu0 0.0
  %1409 = vmatprep.subr.mxu0 0.0
  %1410 = vmatpush1.msra.mxu0 0.0
  %1411 = vmatprep.subr.mxu0 0.0
  %1412 = vmatpush1.msra.mxu0 0.0
  %1413 = vmatprep.subr.mxu0 0.0
  %1414 = vmatpush1.msra.mxu0 0.0
  %1415 = vmatprep.subr.mxu0 0.0
  %1416 = vmatpush1.msra.mxu0 0.0
  %1417 = vmatprep.subr.mxu0 0.0
  %1418 = vmatpush1.msra.mxu0 0.0
  %1419 = vmatprep.subr.mxu0 0.0
  %1420 = vmatpush1.msra.mxu0 0.0
  %1421 = vmatprep.subr.mxu0 0.0
  %1422 = vmatpush1.msra.mxu0 0.0
  %1423 = vmatprep.subr.mxu0 0.0
  %1424 = vmatpush1.msra.mxu0 0.0
  %1425 = vmatprep.subr.mxu0 0.0
  %1426 = vmatpush1.msra.mxu0 0.0
  %1427 = vmatprep.subr.mxu0 0.0
  %1428 = vmatpush1.msra.mxu0 0.0
  %1429 = vmatprep.subr.mxu0 0.0
  %1430 = vmatpush1.msra.mxu0 0.0
  %1431 = vmatprep.subr.mxu0 0.0
  %1432 = vmatpush1.msra.mxu0 0.0
  %1433 = vmatprep.subr.mxu0 0.0
  %1434 = vmatpush1.msra.mxu0 0.0
  %1435 = vmatprep.subr.mxu0 0.0
  %1436 = vmatpush1.msra.mxu0 0.0
  %1437 = vmatprep.subr.mxu0 0.0
  %1438 = vmatpush1.msra.mxu0 0.0
  %1439 = vmatprep.subr.mxu0 0.0
  %1440 = vmatpush1.msra.mxu0 0.0
  %1441 = vmatprep.subr.mxu0 0.0
  %1442 = vmatpush1.msra.mxu0 0.0
  %1443 = vmatprep.subr.mxu0 0.0
  %1444 = vmatpush1.msra.mxu0 0.0
  %1445 = vmatprep.subr.mxu0 0.0
  %1446 = vmatpush1.msra.mxu0 0.0
  %1447 = vmatprep.subr.mxu0 0.0
  %1448 = vmatpush1.msra.mxu0 0.0
  %1449 = vmatprep.subr.mxu0 0.0
  %1450 = vmatpush1.msra.mxu0 0.0
  %1451 = vmatprep.subr.mxu0 0.0
  %1452 = vmatpush1.msra.mxu0 0.0
  %1453 = vmatprep.subr.mxu0 0.0
  %1454 = vmatpush1.msra.mxu0 0.0
  %1455 = vmatprep.subr.mxu0 0.0
  %1456 = vmatpush1.msra.mxu0 0.0
  %1457 = vmatprep.subr.mxu0 0.0
  %1458 = vmatpush1.msra.mxu0 0.0
  %1459 = vmatprep.subr.mxu0 0.0
  %1460 = vmatpush1.msra.mxu0 0.0
  %1461 = vmatprep.subr.mxu0 0.0
  %1462 = vmatpush1.msra.mxu0 0.0
  %1463 = vmatprep.subr.mxu0 0.0
  %1464 = vmatpush1.msra.mxu0 0.0
  %1465 = vmatprep.mubr.f32.mxu0 0.0
  %1466 = vmatmul.mubr.f32.gmra.mrb[0].mxu0 %v1329
  %v1467 = vpop.f32.mrb[0].mxu0
  %v1468 = vadd.f32 0.0, %v1467
  %v1469 = vpop.f32.mrb[0].mxu0
  %1470 = vdwg.mxu0
  %v1471 = vmax.f32 %v1398, %v1468
  %1473 = vrot.lane.b32.xlu0 %v1471, 9
  %v1474 = vpop.permute.xlu0 %1473
  %1476 = vst.msk [vmem:[%s1318] sm:$0xf] %vm212, %v1474
  %v1477 = vld [vmem:[%s1321] sm:$0xf]
  %1479 = vrot.lane.b32.xlu0 %v1477, 112
  %v1480 = vpop.permute.xlu0 %1479
  %v1482 = vmax.f32 %v1477, %v1480
  %1484 = vrot.lane.b32.xlu0 %v1482, 96
  %v1485 = vpop.permute.xlu0 %1484
  %v1486 = vsel %vm63, %v1485, 0
  %1488 = vmatprep.subr.mxu0 0.0
  %1489 = vmatpush1.msra.mxu0 %v30
  %1490 = vmatprep.subr.mxu0 0.0
  %1491 = vmatpush1.msra.mxu0 %v31
  %1492 = vmatprep.subr.mxu0 0.0
  %1493 = vmatpush1.msra.mxu0 0.0
  %1494 = vmatprep.subr.mxu0 0.0
  %1495 = vmatpush1.msra.mxu0 0.0
  %1496 = vmatprep.subr.mxu0 0.0
  %1497 = vmatpush1.msra.mxu0 0.0
  %1498 = vmatprep.subr.mxu0 0.0
  %1499 = vmatpush1.msra.mxu0 0.0
  %1500 = vmatprep.subr.mxu0 0.0
  %1501 = vmatpush1.msra.mxu0 0.0
  %1502 = vmatprep.subr.mxu0 0.0
  %1503 = vmatpush1.msra.mxu0 0.0
  %1504 = vmatprep.subr.mxu0 0.0
  %1505 = vmatpush1.msra.mxu0 0.0
  %1506 = vmatprep.subr.mxu0 0.0
  %1507 = vmatpush1.msra.mxu0 0.0
  %1508 = vmatprep.subr.mxu0 0.0
  %1509 = vmatpush1.msra.mxu0 0.0
  %1510 = vmatprep.subr.mxu0 0.0
  %1511 = vmatpush1.msra.mxu0 0.0
  %1512 = vmatprep.subr.mxu0 0.0
  %1513 = vmatpush1.msra.mxu0 0.0
  %1514 = vmatprep.subr.mxu0 0.0
  %1515 = vmatpush1.msra.mxu0 0.0
  %1516 = vmatprep.subr.mxu0 0.0
  %1517 = vmatpush1.msra.mxu0 0.0
  %1518 = vmatprep.subr.mxu0 0.0
  %1519 = vmatpush1.msra.mxu0 0.0
  %1520 = vmatprep.subr.mxu0 0.0
  %1521 = vmatpush1.msra.mxu0 0.0
  %1522 = vmatprep.subr.mxu0 0.0
  %1523 = vmatpush1.msra.mxu0 0.0
  %1524 = vmatprep.subr.mxu0 0.0
  %1525 = vmatpush1.msra.mxu0 0.0
  %1526 = vmatprep.subr.mxu0 0.0
  %1527 = vmatpush1.msra.mxu0 0.0
  %1528 = vmatprep.subr.mxu0 0.0
  %1529 = vmatpush1.msra.mxu0 0.0
  %1530 = vmatprep.subr.mxu0 0.0
  %1531 = vmatpush1.msra.mxu0 0.0
  %1532 = vmatprep.subr.mxu0 0.0
  %1533 = vmatpush1.msra.mxu0 0.0
  %1534 = vmatprep.subr.mxu0 0.0
  %1535 = vmatpush1.msra.mxu0 0.0
  %1536 = vmatprep.subr.mxu0 0.0
  %1537 = vmatpush1.msra.mxu0 0.0
  %1538 = vmatprep.subr.mxu0 0.0
  %1539 = vmatpush1.msra.mxu0 0.0
  %1540 = vmatprep.subr.mxu0 0.0
  %1541 = vmatpush1.msra.mxu0 0.0
  %1542 = vmatprep.subr.mxu0 0.0
  %1543 = vmatpush1.msra.mxu0 0.0
  %1544 = vmatprep.subr.mxu0 0.0
  %1545 = vmatpush1.msra.mxu0 0.0
  %1546 = vmatprep.subr.mxu0 0.0
  %1547 = vmatpush1.msra.mxu0 0.0
  %1548 = vmatprep.subr.mxu0 0.0
  %1549 = vmatpush1.msra.mxu0 0.0
  %1550 = vmatprep.subr.mxu0 0.0
  %1551 = vmatpush1.msra.mxu0 0.0
  %1552 = vmatprep.mubr.f32.mxu0 0.0
  %1553 = vmatmul.mubr.f32.gmra.mrb[0].mxu0 %v1486
  %v1554 = vpop.f32.mrb[0].mxu0
  %v1555 = vadd.f32 0.0, %v1554
  %v1556 = vpop.f32.mrb[0].mxu0
  %1557 = vdwg.mxu0
  %1558 = vmatprep.subr.mxu0 0.0
  %1559 = vmatpush1.msra.mxu0 %v37
  %1560 = vmatprep.subr.mxu0 0.0
  %1561 = vmatpush1.msra.mxu0 %v38
  %1562 = vmatprep.subr.mxu0 0.0
  %1563 = vmatpush1.msra.mxu0 0.0
  %1564 = vmatprep.subr.mxu0 0.0
  %1565 = vmatpush1.msra.mxu0 0.0
  %1566 = vmatprep.subr.mxu0 0.0
  %1567 = vmatpush1.msra.mxu0 0.0
  %1568 = vmatprep.subr.mxu0 0.0
  %1569 = vmatpush1.msra.mxu0 0.0
  %1570 = vmatprep.subr.mxu0 0.0
  %1571 = vmatpush1.msra.mxu0 0.0
  %1572 = vmatprep.subr.mxu0 0.0
  %1573 = vmatpush1.msra.mxu0 0.0
  %1574 = vmatprep.subr.mxu0 0.0
  %1575 = vmatpush1.msra.mxu0 0.0
  %1576 = vmatprep.subr.mxu0 0.0
  %1577 = vmatpush1.msra.mxu0 0.0
  %1578 = vmatprep.subr.mxu0 0.0
  %1579 = vmatpush1.msra.mxu0 0.0
  %1580 = vmatprep.subr.mxu0 0.0
  %1581 = vmatpush1.msra.mxu0 0.0
  %1582 = vmatprep.subr.mxu0 0.0
  %1583 = vmatpush1.msra.mxu0 0.0
  %1584 = vmatprep.subr.mxu0 0.0
  %1585 = vmatpush1.msra.mxu0 0.0
  %1586 = vmatprep.subr.mxu0 0.0
  %1587 = vmatpush1.msra.mxu0 0.0
  %1588 = vmatprep.subr.mxu0 0.0
  %1589 = vmatpush1.msra.mxu0 0.0
  %1590 = vmatprep.subr.mxu0 0.0
  %1591 = vmatpush1.msra.mxu0 0.0
  %1592 = vmatprep.subr.mxu0 0.0
  %1593 = vmatpush1.msra.mxu0 0.0
  %1594 = vmatprep.subr.mxu0 0.0
  %1595 = vmatpush1.msra.mxu0 0.0
  %1596 = vmatprep.subr.mxu0 0.0
  %1597 = vmatpush1.msra.mxu0 0.0
  %1598 = vmatprep.subr.mxu0 0.0
  %1599 = vmatpush1.msra.mxu0 0.0
  %1600 = vmatprep.subr.mxu0 0.0
  %1601 = vmatpush1.msra.mxu0 0.0
  %1602 = vmatprep.subr.mxu0 0.0
  %1603 = vmatpush1.msra.mxu0 0.0
  %1604 = vmatprep.subr.mxu0 0.0
  %1605 = vmatpush1.msra.mxu0 0.0
  %1606 = vmatprep.subr.mxu0 0.0
  %1607 = vmatpush1.msra.mxu0 0.0
  %1608 = vmatprep.subr.mxu0 0.0
  %1609 = vmatpush1.msra.mxu0 0.0
  %1610 = vmatprep.subr.mxu0 0.0
  %1611 = vmatpush1.msra.mxu0 0.0
  %1612 = vmatprep.subr.mxu0 0.0
  %1613 = vmatpush1.msra.mxu0 0.0
  %1614 = vmatprep.subr.mxu0 0.0
  %1615 = vmatpush1.msra.mxu0 0.0
  %1616 = vmatprep.subr.mxu0 0.0
  %1617 = vmatpush1.msra.mxu0 0.0
  %1618 = vmatprep.subr.mxu0 0.0
  %1619 = vmatpush1.msra.mxu0 0.0
  %1620 = vmatprep.subr.mxu0 0.0
  %1621 = vmatpush1.msra.mxu0 0.0
  %1622 = vmatprep.mubr.f32.mxu0 0.0
  %1623 = vmatmul.mubr.f32.gmra.mrb[0].mxu0 %v1486
  %v1624 = vpop.f32.mrb[0].mxu0
  %v1625 = vadd.f32 0.0, %v1624
  %v1626 = vpop.f32.mrb[0].mxu0
  %1627 = vdwg.mxu0
  %v1628 = vmax.f32 %v1555, %v1625
  %1630 = vrot.lane.b32.xlu0 %v1628, 17
  %v1631 = vpop.permute.xlu0 %1630
  %1633 = vst.msk [vmem:[%s1318] sm:$0xf] %vm370, %v1631
  %v1634 = vld [vmem:[%s1321] sm:$0xf]
  %1636 = vrot.lane.b32.xlu0 %v1634, 112
  %v1637 = vpop.permute.xlu0 %1636
  %v1639 = vmax.f32 %v1634, %v1637
  %1641 = vrot.lane.b32.xlu0 %v1639, 64
  %v1642 = vpop.permute.xlu0 %1641
  %v1643 = vsel %vm63, %v1642, 0
  %1645 = vmatprep.subr.mxu0 0.0
  %1646 = vmatpush1.msra.mxu0 %v30
  %1647 = vmatprep.subr.mxu0 0.0
  %1648 = vmatpush1.msra.mxu0 %v31
  %1649 = vmatprep.subr.mxu0 0.0
  %1650 = vmatpush1.msra.mxu0 0.0
  %1651 = vmatprep.subr.mxu0 0.0
  %1652 = vmatpush1.msra.mxu0 0.0
  %1653 = vmatprep.subr.mxu0 0.0
  %1654 = vmatpush1.msra.mxu0 0.0
  %1655 = vmatprep.subr.mxu0 0.0
  %1656 = vmatpush1.msra.mxu0 0.0
  %1657 = vmatprep.subr.mxu0 0.0
  %1658 = vmatpush1.msra.mxu0 0.0
  %1659 = vmatprep.subr.mxu0 0.0
  %1660 = vmatpush1.msra.mxu0 0.0
  %1661 = vmatprep.subr.mxu0 0.0
  %1662 = vmatpush1.msra.mxu0 0.0
  %1663 = vmatprep.subr.mxu0 0.0
  %1664 = vmatpush1.msra.mxu0 0.0
  %1665 = vmatprep.subr.mxu0 0.0
  %1666 = vmatpush1.msra.mxu0 0.0
  %1667 = vmatprep.subr.mxu0 0.0
  %1668 = vmatpush1.msra.mxu0 0.0
  %1669 = vmatprep.subr.mxu0 0.0
  %1670 = vmatpush1.msra.mxu0 0.0
  %1671 = vmatprep.subr.mxu0 0.0
  %1672 = vmatpush1.msra.mxu0 0.0
  %1673 = vmatprep.subr.mxu0 0.0
  %1674 = vmatpush1.msra.mxu0 0.0
  %1675 = vmatprep.subr.mxu0 0.0
  %1676 = vmatpush1.msra.mxu0 0.0
  %1677 = vmatprep.subr.mxu0 0.0
  %1678 = vmatpush1.msra.mxu0 0.0
  %1679 = vmatprep.subr.mxu0 0.0
  %1680 = vmatpush1.msra.mxu0 0.0
  %1681 = vmatprep.subr.mxu0 0.0
  %1682 = vmatpush1.msra.mxu0 0.0
  %1683 = vmatprep.subr.mxu0 0.0
  %1684 = vmatpush1.msra.mxu0 0.0
  %1685 = vmatprep.subr.mxu0 0.0
  %1686 = vmatpush1.msra.mxu0 0.0
  %1687 = vmatprep.subr.mxu0 0.0
  %1688 = vmatpush1.msra.mxu0 0.0
  %1689 = vmatprep.subr.mxu0 0.0
  %1690 = vmatpush1.msra.mxu0 0.0
  %1691 = vmatprep.subr.mxu0 0.0
  %1692 = vmatpush1.msra.mxu0 0.0
  %1693 = vmatprep.subr.mxu0 0.0
  %1694 = vmatpush1.msra.mxu0 0.0
  %1695 = vmatprep.subr.mxu0 0.0
  %1696 = vmatpush1.msra.mxu0 0.0
  %1697 = vmatprep.subr.mxu0 0.0
  %1698 = vmatpush1.msra.mxu0 0.0
  %1699 = vmatprep.subr.mxu0 0.0
  %1700 = vmatpush1.msra.mxu0 0.0
  %1701 = vmatprep.subr.mxu0 0.0
  %1702 = vmatpush1.msra.mxu0 0.0
  %1703 = vmatprep.subr.mxu0 0.0
  %1704 = vmatpush1.msra.mxu0 0.0
  %1705 = vmatprep.subr.mxu0 0.0
  %1706 = vmatpush1.msra.mxu0 0.0
  %1707 = vmatprep.subr.mxu0 0.0
  %1708 = vmatpush1.msra.mxu0 0.0
  %1709 = vmatprep.mubr.f32.mxu0 0.0
  %1710 = vmatmul.mubr.f32.gmra.mrb[0].mxu0 %v1643
  %v1711 = vpop.f32.mrb[0].mxu0
  %v1712 = vadd.f32 0.0, %v1711
  %v1713 = vpop.f32.mrb[0].mxu0
  %1714 = vdwg.mxu0
  %1715 = vmatprep.subr.mxu0 0.0
  %1716 = vmatpush1.msra.mxu0 %v37
  %1717 = vmatprep.subr.mxu0 0.0
  %1718 = vmatpush1.msra.mxu0 %v38
  %1719 = vmatprep.subr.mxu0 0.0
  %1720 = vmatpush1.msra.mxu0 0.0
  %1721 = vmatprep.subr.mxu0 0.0
  %1722 = vmatpush1.msra.mxu0 0.0
  %1723 = vmatprep.subr.mxu0 0.0
  %1724 = vmatpush1.msra.mxu0 0.0
  %1725 = vmatprep.subr.mxu0 0.0
  %1726 = vmatpush1.msra.mxu0 0.0
  %1727 = vmatprep.subr.mxu0 0.0
  %1728 = vmatpush1.msra.mxu0 0.0
  %1729 = vmatprep.subr.mxu0 0.0
  %1730 = vmatpush1.msra.mxu0 0.0
  %1731 = vmatprep.subr.mxu0 0.0
  %1732 = vmatpush1.msra.mxu0 0.0
  %1733 = vmatprep.subr.mxu0 0.0
  %1734 = vmatpush1.msra.mxu0 0.0
  %1735 = vmatprep.subr.mxu0 0.0
  %1736 = vmatpush1.msra.mxu0 0.0
  %1737 = vmatprep.subr.mxu0 0.0
  %1738 = vmatpush1.msra.mxu0 0.0
  %1739 = vmatprep.subr.mxu0 0.0
  %1740 = vmatpush1.msra.mxu0 0.0
  %1741 = vmatprep.subr.mxu0 0.0
  %1742 = vmatpush1.msra.mxu0 0.0
  %1743 = vmatprep.subr.mxu0 0.0
  %1744 = vmatpush1.msra.mxu0 0.0
  %1745 = vmatprep.subr.mxu0 0.0
  %1746 = vmatpush1.msra.mxu0 0.0
  %1747 = vmatprep.subr.mxu0 0.0
  %1748 = vmatpush1.msra.mxu0 0.0
  %1749 = vmatprep.subr.mxu0 0.0
  %1750 = vmatpush1.msra.mxu0 0.0
  %1751 = vmatprep.subr.mxu0 0.0
  %1752 = vmatpush1.msra.mxu0 0.0
  %1753 = vmatprep.subr.mxu0 0.0
  %1754 = vmatpush1.msra.mxu0 0.0
  %1755 = vmatprep.subr.mxu0 0.0
  %1756 = vmatpush1.msra.mxu0 0.0
  %1757 = vmatprep.subr.mxu0 0.0
  %1758 = vmatpush1.msra.mxu0 0.0
  %1759 = vmatprep.subr.mxu0 0.0
  %1760 = vmatpush1.msra.mxu0 0.0
  %1761 = vmatprep.subr.mxu0 0.0
  %1762 = vmatpush1.msra.mxu0 0.0
  %1763 = vmatprep.subr.mxu0 0.0
  %1764 = vmatpush1.msra.mxu0 0.0
  %1765 = vmatprep.subr.mxu0 0.0
  %1766 = vmatpush1.msra.mxu0 0.0
  %1767 = vmatprep.subr.mxu0 0.0
  %1768 = vmatpush1.msra.mxu0 0.0
  %1769 = vmatprep.subr.mxu0 0.0
  %1770 = vmatpush1.msra.mxu0 0.0
  %1771 = vmatprep.subr.mxu0 0.0
  %1772 = vmatpush1.msra.mxu0 0.0
  %1773 = vmatprep.subr.mxu0 0.0
  %1774 = vmatpush1.msra.mxu0 0.0
  %1775 = vmatprep.subr.mxu0 0.0
  %1776 = vmatpush1.msra.mxu0 0.0
  %1777 = vmatprep.subr.mxu0 0.0
  %1778 = vmatpush1.msra.mxu0 0.0
  %1779 = vmatprep.mubr.f32.mxu0 0.0
  %1780 = vmatmul.mubr.f32.gmra.mrb[0].mxu0 %v1643
  %v1781 = vpop.f32.mrb[0].mxu0
  %v1782 = vadd.f32 0.0, %v1781
  %v1783 = vpop.f32.mrb[0].mxu0
  %1784 = vdwg.mxu0
  %v1785 = vmax.f32 %v1712, %v1782
  %1787 = vrot.lane.b32.xlu0 %v1785, 25
  %v1788 = vpop.permute.xlu0 %1787
  %1790 = vst.msk [vmem:[%s1318] sm:$0xf] %vm528, %v1788
  %v1791 = vld [vmem:[%s1321] sm:$0xf]
  %1793 = vrot.lane.b32.xlu0 %v1791, 112
  %v1794 = vpop.permute.xlu0 %1793
  %v1796 = vmax.f32 %v1791, %v1794
  %1798 = vrot.lane.b32.xlu0 %v1796, 32
  %v1799 = vpop.permute.xlu0 %1798
  %v1800 = vsel %vm63, %v1799, 0
  %1802 = vmatprep.subr.mxu0 0.0
  %1803 = vmatpush1.msra.mxu0 %v30
  %1804 = vmatprep.subr.mxu0 0.0
  %1805 = vmatpush1.msra.mxu0 %v31
  %1806 = vmatprep.subr.mxu0 0.0
  %1807 = vmatpush1.msra.mxu0 0.0
  %1808 = vmatprep.subr.mxu0 0.0
  %1809 = vmatpush1.msra.mxu0 0.0
  %1810 = vmatprep.subr.mxu0 0.0
  %1811 = vmatpush1.msra.mxu0 0.0
  %1812 = vmatprep.subr.mxu0 0.0
  %1813 = vmatpush1.msra.mxu0 0.0
  %1814 = vmatprep.subr.mxu0 0.0
  %1815 = vmatpush1.msra.mxu0 0.0
  %1816 = vmatprep.subr.mxu0 0.0
  %1817 = vmatpush1.msra.mxu0 0.0
  %1818 = vmatprep.subr.mxu0 0.0
  %1819 = vmatpush1.msra.mxu0 0.0
  %1820 = vmatprep.subr.mxu0 0.0
  %1821 = vmatpush1.msra.mxu0 0.0
  %1822 = vmatprep.subr.mxu0 0.0
  %1823 = vmatpush1.msra.mxu0 0.0
  %1824 = vmatprep.subr.mxu0 0.0
  %1825 = vmatpush1.msra.mxu0 0.0
  %1826 = vmatprep.subr.mxu0 0.0
  %1827 = vmatpush1.msra.mxu0 0.0
  %1828 = vmatprep.subr.mxu0 0.0
  %1829 = vmatpush1.msra.mxu0 0.0
  %1830 = vmatprep.subr.mxu0 0.0
  %1831 = vmatpush1.msra.mxu0 0.0
  %1832 = vmatprep.subr.mxu0 0.0
  %1833 = vmatpush1.msra.mxu0 0.0
  %1834 = vmatprep.subr.mxu0 0.0
  %1835 = vmatpush1.msra.mxu0 0.0
  %1836 = vmatprep.subr.mxu0 0.0
  %1837 = vmatpush1.msra.mxu0 0.0
  %1838 = vmatprep.subr.mxu0 0.0
  %1839 = vmatpush1.msra.mxu0 0.0
  %1840 = vmatprep.subr.mxu0 0.0
  %1841 = vmatpush1.msra.mxu0 0.0
  %1842 = vmatprep.subr.mxu0 0.0
  %1843 = vmatpush1.msra.mxu0 0.0
  %1844 = vmatprep.subr.mxu0 0.0
  %1845 = vmatpush1.msra.mxu0 0.0
  %1846 = vmatprep.subr.mxu0 0.0
  %1847 = vmatpush1.msra.mxu0 0.0
  %1848 = vmatprep.subr.mxu0 0.0
  %1849 = vmatpush1.msra.mxu0 0.0
  %1850 = vmatprep.subr.mxu0 0.0
  %1851 = vmatpush1.msra.mxu0 0.0
  %1852 = vmatprep.subr.mxu0 0.0
  %1853 = vmatpush1.msra.mxu0 0.0
  %1854 = vmatprep.subr.mxu0 0.0
  %1855 = vmatpush1.msra.mxu0 0.0
  %1856 = vmatprep.subr.mxu0 0.0
  %1857 = vmatpush1.msra.mxu0 0.0
  %1858 = vmatprep.subr.mxu0 0.0
  %1859 = vmatpush1.msra.mxu0 0.0
  %1860 = vmatprep.subr.mxu0 0.0
  %1861 = vmatpush1.msra.mxu0 0.0
  %1862 = vmatprep.subr.mxu0 0.0
  %1863 = vmatpush1.msra.mxu0 0.0
  %1864 = vmatprep.subr.mxu0 0.0
  %1865 = vmatpush1.msra.mxu0 0.0
  %1866 = vmatprep.mubr.f32.mxu0 0.0
  %1867 = vmatmul.mubr.f32.gmra.mrb[0].mxu0 %v1800
  %v1868 = vpop.f32.mrb[0].mxu0
  %v1869 = vadd.f32 0.0, %v1868
  %v1870 = vpop.f32.mrb[0].mxu0
  %1871 = vdwg.mxu0
  %1872 = vmatprep.subr.mxu0 0.0
  %1873 = vmatpush1.msra.mxu0 %v37
  %1874 = vmatprep.subr.mxu0 0.0
  %1875 = vmatpush1.msra.mxu0 %v38
  %1876 = vmatprep.subr.mxu0 0.0
  %1877 = vmatpush1.msra.mxu0 0.0
  %1878 = vmatprep.subr.mxu0 0.0
  %1879 = vmatpush1.msra.mxu0 0.0
  %1880 = vmatprep.subr.mxu0 0.0
  %1881 = vmatpush1.msra.mxu0 0.0
  %1882 = vmatprep.subr.mxu0 0.0
  %1883 = vmatpush1.msra.mxu0 0.0
  %1884 = vmatprep.subr.mxu0 0.0
  %1885 = vmatpush1.msra.mxu0 0.0
  %1886 = vmatprep.subr.mxu0 0.0
  %1887 = vmatpush1.msra.mxu0 0.0
  %1888 = vmatprep.subr.mxu0 0.0
  %1889 = vmatpush1.msra.mxu0 0.0
  %1890 = vmatprep.subr.mxu0 0.0
  %1891 = vmatpush1.msra.mxu0 0.0
  %1892 = vmatprep.subr.mxu0 0.0
  %1893 = vmatpush1.msra.mxu0 0.0
  %1894 = vmatprep.subr.mxu0 0.0
  %1895 = vmatpush1.msra.mxu0 0.0
  %1896 = vmatprep.subr.mxu0 0.0
  %1897 = vmatpush1.msra.mxu0 0.0
  %1898 = vmatprep.subr.mxu0 0.0
  %1899 = vmatpush1.msra.mxu0 0.0
  %1900 = vmatprep.subr.mxu0 0.0
  %1901 = vmatpush1.msra.mxu0 0.0
  %1902 = vmatprep.subr.mxu0 0.0
  %1903 = vmatpush1.msra.mxu0 0.0
  %1904 = vmatprep.subr.mxu0 0.0
  %1905 = vmatpush1.msra.mxu0 0.0
  %1906 = vmatprep.subr.mxu0 0.0
  %1907 = vmatpush1.msra.mxu0 0.0
  %1908 = vmatprep.subr.mxu0 0.0
  %1909 = vmatpush1.msra.mxu0 0.0
  %1910 = vmatprep.subr.mxu0 0.0
  %1911 = vmatpush1.msra.mxu0 0.0
  %1912 = vmatprep.subr.mxu0 0.0
  %1913 = vmatpush1.msra.mxu0 0.0
  %1914 = vmatprep.subr.mxu0 0.0
  %1915 = vmatpush1.msra.mxu0 0.0
  %1916 = vmatprep.subr.mxu0 0.0
  %1917 = vmatpush1.msra.mxu0 0.0
  %1918 = vmatprep.subr.mxu0 0.0
  %1919 = vmatpush1.msra.mxu0 0.0
  %1920 = vmatprep.subr.mxu0 0.0
  %1921 = vmatpush1.msra.mxu0 0.0
  %1922 = vmatprep.subr.mxu0 0.0
  %1923 = vmatpush1.msra.mxu0 0.0
  %1924 = vmatprep.subr.mxu0 0.0
  %1925 = vmatpush1.msra.mxu0 0.0
  %1926 = vmatprep.subr.mxu0 0.0
  %1927 = vmatpush1.msra.mxu0 0.0
  %1928 = vmatprep.subr.mxu0 0.0
  %1929 = vmatpush1.msra.mxu0 0.0
  %1930 = vmatprep.subr.mxu0 0.0
  %1931 = vmatpush1.msra.mxu0 0.0
  %1932 = vmatprep.subr.mxu0 0.0
  %1933 = vmatpush1.msra.mxu0 0.0
  %1934 = vmatprep.subr.mxu0 0.0
  %1935 = vmatpush1.msra.mxu0 0.0
  %1936 = vmatprep.mubr.f32.mxu0 0.0
  %1937 = vmatmul.mubr.f32.gmra.mrb[0].mxu0 %v1800
  %v1938 = vpop.f32.mrb[0].mxu0
  %v1939 = vadd.f32 0.0, %v1938
  %v1940 = vpop.f32.mrb[0].mxu0
  %1941 = vdwg.mxu0
  %v1942 = vmax.f32 %v1869, %v1939
  %1944 = vrot.lane.b32.xlu0 %v1942, 33
  %v1945 = vpop.permute.xlu0 %1944
  %1947 = vst.msk [vmem:[%s1318] sm:$0xf] %vm686, %v1945
  %v1948 = vld [vmem:[%s1321 + $0x4] sm:$0xf]
  %1950 = vrot.lane.b32.xlu0 %v1948, 112
  %v1951 = vpop.permute.xlu0 %1950
  %v1953 = vmax.f32 %v1948, %v1951
  %v1955 = vsel %vm63, %v1953, 0
  %1957 = vmatprep.subr.mxu0 0.0
  %1958 = vmatpush1.msra.mxu0 %v30
  %1959 = vmatprep.subr.mxu0 0.0
  %1960 = vmatpush1.msra.mxu0 %v31
  %1961 = vmatprep.subr.mxu0 0.0
  %1962 = vmatpush1.msra.mxu0 0.0
  %1963 = vmatprep.subr.mxu0 0.0
  %1964 = vmatpush1.msra.mxu0 0.0
  %1965 = vmatprep.subr.mxu0 0.0
  %1966 = vmatpush1.msra.mxu0 0.0
  %1967 = vmatprep.subr.mxu0 0.0
  %1968 = vmatpush1.msra.mxu0 0.0
  %1969 = vmatprep.subr.mxu0 0.0
  %1970 = vmatpush1.msra.mxu0 0.0
  %1971 = vmatprep.subr.mxu0 0.0
  %1972 = vmatpush1.msra.mxu0 0.0
  %1973 = vmatprep.subr.mxu0 0.0
  %1974 = vmatpush1.msra.mxu0 0.0
  %1975 = vmatprep.subr.mxu0 0.0
  %1976 = vmatpush1.msra.mxu0 0.0
  %1977 = vmatprep.subr.mxu0 0.0
  %1978 = vmatpush1.msra.mxu0 0.0
  %1979 = vmatprep.subr.mxu0 0.0
  %1980 = vmatpush1.msra.mxu0 0.0
  %1981 = vmatprep.subr.mxu0 0.0
  %1982 = vmatpush1.msra.mxu0 0.0
  %1983 = vmatprep.subr.mxu0 0.0
  %1984 = vmatpush1.msra.mxu0 0.0
  %1985 = vmatprep.subr.mxu0 0.0
  %1986 = vmatpush1.msra.mxu0 0.0
  %1987 = vmatprep.subr.mxu0 0.0
  %1988 = vmatpush1.msra.mxu0 0.0
  %1989 = vmatprep.subr.mxu0 0.0
  %1990 = vmatpush1.msra.mxu0 0.0
  %1991 = vmatprep.subr.mxu0 0.0
  %1992 = vmatpush1.msra.mxu0 0.0
  %1993 = vmatprep.subr.mxu0 0.0
  %1994 = vmatpush1.msra.mxu0 0.0
  %1995 = vmatprep.subr.mxu0 0.0
  %1996 = vmatpush1.msra.mxu0 0.0
  %1997 = vmatprep.subr.mxu0 0.0
  %1998 = vmatpush1.msra.mxu0 0.0
  %1999 = vmatprep.subr.mxu0 0.0
  %2000 = vmatpush1.msra.mxu0 0.0
  %2001 = vmatprep.subr.mxu0 0.0
  %2002 = vmatpush1.msra.mxu0 0.0
  %2003 = vmatprep.subr.mxu0 0.0
  %2004 = vmatpush1.msra.mxu0 0.0
  %2005 = vmatprep.subr.mxu0 0.0
  %2006 = vmatpush1.msra.mxu0 0.0
  %2007 = vmatprep.subr.mxu0 0.0
  %2008 = vmatpush1.msra.mxu0 0.0
  %2009 = vmatprep.subr.mxu0 0.0
  %2010 = vmatpush1.msra.mxu0 0.0
  %2011 = vmatprep.subr.mxu0 0.0
  %2012 = vmatpush1.msra.mxu0 0.0
  %2013 = vmatprep.subr.mxu0 0.0
  %2014 = vmatpush1.msra.mxu0 0.0
  %2015 = vmatprep.subr.mxu0 0.0
  %2016 = vmatpush1.msra.mxu0 0.0
  %2017 = vmatprep.subr.mxu0 0.0
  %2018 = vmatpush1.msra.mxu0 0.0
  %2019 = vmatprep.subr.mxu0 0.0
  %2020 = vmatpush1.msra.mxu0 0.0
  %2021 = vmatprep.mubr.f32.mxu0 0.0
  %2022 = vmatmul.mubr.f32.gmra.mrb[0].mxu0 %v1955
  %v2023 = vpop.f32.mrb[0].mxu0
  %v2024 = vadd.f32 0.0, %v2023
  %v2025 = vpop.f32.mrb[0].mxu0
  %2026 = vdwg.mxu0
  %2027 = vmatprep.subr.mxu0 0.0
  %2028 = vmatpush1.msra.mxu0 %v37
  %2029 = vmatprep.subr.mxu0 0.0
  %2030 = vmatpush1.msra.mxu0 %v38
  %2031 = vmatprep.subr.mxu0 0.0
  %2032 = vmatpush1.msra.mxu0 0.0
  %2033 = vmatprep.subr.mxu0 0.0
  %2034 = vmatpush1.msra.mxu0 0.0
  %2035 = vmatprep.subr.mxu0 0.0
  %2036 = vmatpush1.msra.mxu0 0.0
  %2037 = vmatprep.subr.mxu0 0.0
  %2038 = vmatpush1.msra.mxu0 0.0
  %2039 = vmatprep.subr.mxu0 0.0
  %2040 = vmatpush1.msra.mxu0 0.0
  %2041 = vmatprep.subr.mxu0 0.0
  %2042 = vmatpush1.msra.mxu0 0.0
  %2043 = vmatprep.subr.mxu0 0.0
  %2044 = vmatpush1.msra.mxu0 0.0
  %2045 = vmatprep.subr.mxu0 0.0
  %2046 = vmatpush1.msra.mxu0 0.0
  %2047 = vmatprep.subr.mxu0 0.0
  %2048 = vmatpush1.msra.mxu0 0.0
  %2049 = vmatprep.subr.mxu0 0.0
  %2050 = vmatpush1.msra.mxu0 0.0
  %2051 = vmatprep.subr.mxu0 0.0
  %2052 = vmatpush1.msra.mxu0 0.0
  %2053 = vmatprep.subr.mxu0 0.0
  %2054 = vmatpush1.msra.mxu0 0.0
  %2055 = vmatprep.subr.mxu0 0.0
  %2056 = vmatpush1.msra.mxu0 0.0
  %2057 = vmatprep.subr.mxu0 0.0
  %2058 = vmatpush1.msra.mxu0 0.0
  %2059 = vmatprep.subr.mxu0 0.0
  %2060 = vmatpush1.msra.mxu0 0.0
  %2061 = vmatprep.subr.mxu0 0.0
  %2062 = vmatpush1.msra.mxu0 0.0
  %2063 = vmatprep.subr.mxu0 0.0
  %2064 = vmatpush1.msra.mxu0 0.0
  %2065 = vmatprep.subr.mxu0 0.0
  %2066 = vmatpush1.msra.mxu0 0.0
  %2067 = vmatprep.subr.mxu0 0.0
  %2068 = vmatpush1.msra.mxu0 0.0
  %2069 = vmatprep.subr.mxu0 0.0
  %2070 = vmatpush1.msra.mxu0 0.0
  %2071 = vmatprep.subr.mxu0 0.0
  %2072 = vmatpush1.msra.mxu0 0.0
  %2073 = vmatprep.subr.mxu0 0.0
  %2074 = vmatpush1.msra.mxu0 0.0
  %2075 = vmatprep.subr.mxu0 0.0
  %2076 = vmatpush1.msra.mxu0 0.0
  %2077 = vmatprep.subr.mxu0 0.0
  %2078 = vmatpush1.msra.mxu0 0.0
  %2079 = vmatprep.subr.mxu0 0.0
  %2080 = vmatpush1.msra.mxu0 0.0
  %2081 = vmatprep.subr.mxu0 0.0
  %2082 = vmatpush1.msra.mxu0 0.0
  %2083 = vmatprep.subr.mxu0 0.0
  %2084 = vmatpush1.msra.mxu0 0.0
  %2085 = vmatprep.subr.mxu0 0.0
  %2086 = vmatpush1.msra.mxu0 0.0
  %2087 = vmatprep.subr.mxu0 0.0
  %2088 = vmatpush1.msra.mxu0 0.0
  %2089 = vmatprep.subr.mxu0 0.0
  %2090 = vmatpush1.msra.mxu0 0.0
  %2091 = vmatprep.mubr.f32.mxu0 0.0
  %2092 = vmatmul.mubr.f32.gmra.mrb[0].mxu0 %v1955
  %v2093 = vpop.f32.mrb[0].mxu0
  %v2094 = vadd.f32 0.0, %v2093
  %v2095 = vpop.f32.mrb[0].mxu0
  %2096 = vdwg.mxu0
  %v2097 = vmax.f32 %v2024, %v2094
  %2099 = vrot.lane.b32.xlu0 %v2097, 41
  %v2100 = vpop.permute.xlu0 %2099
  %2102 = vst.msk [vmem:[%s1318] sm:$0xf] %vm842, %v2100
  %v2103 = vld [vmem:[%s1321 + $0x4] sm:$0xf]
  %2105 = vrot.lane.b32.xlu0 %v2103, 112
  %v2106 = vpop.permute.xlu0 %2105
  %v2108 = vmax.f32 %v2103, %v2106
  %2110 = vrot.lane.b32.xlu0 %v2108, 96
  %v2111 = vpop.permute.xlu0 %2110
  %v2112 = vsel %vm63, %v2111, 0
  %2114 = vmatprep.subr.mxu0 0.0
  %2115 = vmatpush1.msra.mxu0 %v30
  %2116 = vmatprep.subr.mxu0 0.0
  %2117 = vmatpush1.msra.mxu0 %v31
  %2118 = vmatprep.subr.mxu0 0.0
  %2119 = vmatpush1.msra.mxu0 0.0
  %2120 = vmatprep.subr.mxu0 0.0
  %2121 = vmatpush1.msra.mxu0 0.0
  %2122 = vmatprep.subr.mxu0 0.0
  %2123 = vmatpush1.msra.mxu0 0.0
  %2124 = vmatprep.subr.mxu0 0.0
  %2125 = vmatpush1.msra.mxu0 0.0
  %2126 = vmatprep.subr.mxu0 0.0
  %2127 = vmatpush1.msra.mxu0 0.0
  %2128 = vmatprep.subr.mxu0 0.0
  %2129 = vmatpush1.msra.mxu0 0.0
  %2130 = vmatprep.subr.mxu0 0.0
  %2131 = vmatpush1.msra.mxu0 0.0
  %2132 = vmatprep.subr.mxu0 0.0
  %2133 = vmatpush1.msra.mxu0 0.0
  %2134 = vmatprep.subr.mxu0 0.0
  %2135 = vmatpush1.msra.mxu0 0.0
  %2136 = vmatprep.subr.mxu0 0.0
  %2137 = vmatpush1.msra.mxu0 0.0
  %2138 = vmatprep.subr.mxu0 0.0
  %2139 = vmatpush1.msra.mxu0 0.0
  %2140 = vmatprep.subr.mxu0 0.0
  %2141 = vmatpush1.msra.mxu0 0.0
  %2142 = vmatprep.subr.mxu0 0.0
  %2143 = vmatpush1.msra.mxu0 0.0
  %2144 = vmatprep.subr.mxu0 0.0
  %2145 = vmatpush1.msra.mxu0 0.0
  %2146 = vmatprep.subr.mxu0 0.0
  %2147 = vmatpush1.msra.mxu0 0.0
  %2148 = vmatprep.subr.mxu0 0.0
  %2149 = vmatpush1.msra.mxu0 0.0
  %2150 = vmatprep.subr.mxu0 0.0
  %2151 = vmatpush1.msra.mxu0 0.0
  %2152 = vmatprep.subr.mxu0 0.0
  %2153 = vmatpush1.msra.mxu0 0.0
  %2154 = vmatprep.subr.mxu0 0.0
  %2155 = vmatpush1.msra.mxu0 0.0
  %2156 = vmatprep.subr.mxu0 0.0
  %2157 = vmatpush1.msra.mxu0 0.0
  %2158 = vmatprep.subr.mxu0 0.0
  %2159 = vmatpush1.msra.mxu0 0.0
  %2160 = vmatprep.subr.mxu0 0.0
  %2161 = vmatpush1.msra.mxu0 0.0
  %2162 = vmatprep.subr.mxu0 0.0
  %2163 = vmatpush1.msra.mxu0 0.0
  %2164 = vmatprep.subr.mxu0 0.0
  %2165 = vmatpush1.msra.mxu0 0.0
  %2166 = vmatprep.subr.mxu0 0.0
  %2167 = vmatpush1.msra.mxu0 0.0
  %2168 = vmatprep.subr.mxu0 0.0
  %2169 = vmatpush1.msra.mxu0 0.0
  %2170 = vmatprep.subr.mxu0 0.0
  %2171 = vmatpush1.msra.mxu0 0.0
  %2172 = vmatprep.subr.mxu0 0.0
  %2173 = vmatpush1.msra.mxu0 0.0
  %2174 = vmatprep.subr.mxu0 0.0
  %2175 = vmatpush1.msra.mxu0 0.0
  %2176 = vmatprep.subr.mxu0 0.0
  %2177 = vmatpush1.msra.mxu0 0.0
  %2178 = vmatprep.mubr.f32.mxu0 0.0
  %2179 = vmatmul.mubr.f32.gmra.mrb[0].mxu0 %v2112
  %v2180 = vpop.f32.mrb[0].mxu0
  %v2181 = vadd.f32 0.0, %v2180
  %v2182 = vpop.f32.mrb[0].mxu0
  %2183 = vdwg.mxu0
  %2184 = vmatprep.subr.mxu0 0.0
  %2185 = vmatpush1.msra.mxu0 %v37
  %2186 = vmatprep.subr.mxu0 0.0
  %2187 = vmatpush1.msra.mxu0 %v38
  %2188 = vmatprep.subr.mxu0 0.0
  %2189 = vmatpush1.msra.mxu0 0.0
  %2190 = vmatprep.subr.mxu0 0.0
  %2191 = vmatpush1.msra.mxu0 0.0
  %2192 = vmatprep.subr.mxu0 0.0
  %2193 = vmatpush1.msra.mxu0 0.0
  %2194 = vmatprep.subr.mxu0 0.0
  %2195 = vmatpush1.msra.mxu0 0.0
  %2196 = vmatprep.subr.mxu0 0.0
  %2197 = vmatpush1.msra.mxu0 0.0
  %2198 = vmatprep.subr.mxu0 0.0
  %2199 = vmatpush1.msra.mxu0 0.0
  %2200 = vmatprep.subr.mxu0 0.0
  %2201 = vmatpush1.msra.mxu0 0.0
  %2202 = vmatprep.subr.mxu0 0.0
  %2203 = vmatpush1.msra.mxu0 0.0
  %2204 = vmatprep.subr.mxu0 0.0
  %2205 = vmatpush1.msra.mxu0 0.0
  %2206 = vmatprep.subr.mxu0 0.0
  %2207 = vmatpush1.msra.mxu0 0.0
  %2208 = vmatprep.subr.mxu0 0.0
  %2209 = vmatpush1.msra.mxu0 0.0
  %2210 = vmatprep.subr.mxu0 0.0
  %2211 = vmatpush1.msra.mxu0 0.0
  %2212 = vmatprep.subr.mxu0 0.0
  %2213 = vmatpush1.msra.mxu0 0.0
  %2214 = vmatprep.subr.mxu0 0.0
  %2215 = vmatpush1.msra.mxu0 0.0
  %2216 = vmatprep.subr.mxu0 0.0
  %2217 = vmatpush1.msra.mxu0 0.0
  %2218 = vmatprep.subr.mxu0 0.0
  %2219 = vmatpush1.msra.mxu0 0.0
  %2220 = vmatprep.subr.mxu0 0.0
  %2221 = vmatpush1.msra.mxu0 0.0
  %2222 = vmatprep.subr.mxu0 0.0
  %2223 = vmatpush1.msra.mxu0 0.0
  %2224 = vmatprep.subr.mxu0 0.0
  %2225 = vmatpush1.msra.mxu0 0.0
  %2226 = vmatprep.subr.mxu0 0.0
  %2227 = vmatpush1.msra.mxu0 0.0
  %2228 = vmatprep.subr.mxu0 0.0
  %2229 = vmatpush1.msra.mxu0 0.0
  %2230 = vmatprep.subr.mxu0 0.0
  %2231 = vmatpush1.msra.mxu0 0.0
  %2232 = vmatprep.subr.mxu0 0.0
  %2233 = vmatpush1.msra.mxu0 0.0
  %2234 = vmatprep.subr.mxu0 0.0
  %2235 = vmatpush1.msra.mxu0 0.0
  %2236 = vmatprep.subr.mxu0 0.0
  %2237 = vmatpush1.msra.mxu0 0.0
  %2238 = vmatprep.subr.mxu0 0.0
  %2239 = vmatpush1.msra.mxu0 0.0
  %2240 = vmatprep.subr.mxu0 0.0
  %2241 = vmatpush1.msra.mxu0 0.0
  %2242 = vmatprep.subr.mxu0 0.0
  %2243 = vmatpush1.msra.mxu0 0.0
  %2244 = vmatprep.subr.mxu0 0.0
  %2245 = vmatpush1.msra.mxu0 0.0
  %2246 = vmatprep.subr.mxu0 0.0
  %2247 = vmatpush1.msra.mxu0 0.0
  %2248 = vmatprep.mubr.f32.mxu0 0.0
  %2249 = vmatmul.mubr.f32.gmra.mrb[0].mxu0 %v2112
  %v2250 = vpop.f32.mrb[0].mxu0
  %v2251 = vadd.f32 0.0, %v2250
  %v2252 = vpop.f32.mrb[0].mxu0
  %2253 = vdwg.mxu0
  %v2254 = vmax.f32 %v2181, %v2251
  %2256 = vrot.lane.b32.xlu0 %v2254, 49
  %v2257 = vpop.permute.xlu0 %2256
  %2259 = vst.msk [vmem:[%s1318] sm:$0xf] %vm1000, %v2257
  %v2260 = vld [vmem:[%s1321 + $0x4] sm:$0xf]
  %2262 = vrot.lane.b32.xlu0 %v2260, 112
  %v2263 = vpop.permute.xlu0 %2262
  %v2265 = vmax.f32 %v2260, %v2263
  %2267 = vrot.lane.b32.xlu0 %v2265, 64
  %v2268 = vpop.permute.xlu0 %2267
  %v2269 = vsel %vm63, %v2268, 0
  %2271 = vmatprep.subr.mxu0 0.0
  %2272 = vmatpush1.msra.mxu0 %v30
  %2273 = vmatprep.subr.mxu0 0.0
  %2274 = vmatpush1.msra.mxu0 %v31
  %2275 = vmatprep.subr.mxu0 0.0
  %2276 = vmatpush1.msra.mxu0 0.0
  %2277 = vmatprep.subr.mxu0 0.0
  %2278 = vmatpush1.msra.mxu0 0.0
  %2279 = vmatprep.subr.mxu0 0.0
  %2280 = vmatpush1.msra.mxu0 0.0
  %2281 = vmatprep.subr.mxu0 0.0
  %2282 = vmatpush1.msra.mxu0 0.0
  %2283 = vmatprep.subr.mxu0 0.0
  %2284 = vmatpush1.msra.mxu0 0.0
  %2285 = vmatprep.subr.mxu0 0.0
  %2286 = vmatpush1.msra.mxu0 0.0
  %2287 = vmatprep.subr.mxu0 0.0
  %2288 = vmatpush1.msra.mxu0 0.0
  %2289 = vmatprep.subr.mxu0 0.0
  %2290 = vmatpush1.msra.mxu0 0.0
  %2291 = vmatprep.subr.mxu0 0.0
  %2292 = vmatpush1.msra.mxu0 0.0
  %2293 = vmatprep.subr.mxu0 0.0
  %2294 = vmatpush1.msra.mxu0 0.0
  %2295 = vmatprep.subr.mxu0 0.0
  %2296 = vmatpush1.msra.mxu0 0.0
  %2297 = vmatprep.subr.mxu0 0.0
  %2298 = vmatpush1.msra.mxu0 0.0
  %2299 = vmatprep.subr.mxu0 0.0
  %2300 = vmatpush1.msra.mxu0 0.0
  %2301 = vmatprep.subr.mxu0 0.0
  %2302 = vmatpush1.msra.mxu0 0.0
  %2303 = vmatprep.subr.mxu0 0.0
  %2304 = vmatpush1.msra.mxu0 0.0
  %2305 = vmatprep.subr.mxu0 0.0
  %2306 = vmatpush1.msra.mxu0 0.0
  %2307 = vmatprep.subr.mxu0 0.0
  %2308 = vmatpush1.msra.mxu0 0.0
  %2309 = vmatprep.subr.mxu0 0.0
  %2310 = vmatpush1.msra.mxu0 0.0
  %2311 = vmatprep.subr.mxu0 0.0
  %2312 = vmatpush1.msra.mxu0 0.0
  %2313 = vmatprep.subr.mxu0 0.0
  %2314 = vmatpush1.msra.mxu0 0.0
  %2315 = vmatprep.subr.mxu0 0.0
  %2316 = vmatpush1.msra.mxu0 0.0
  %2317 = vmatprep.subr.mxu0 0.0
  %2318 = vmatpush1.msra.mxu0 0.0
  %2319 = vmatprep.subr.mxu0 0.0
  %2320 = vmatpush1.msra.mxu0 0.0
  %2321 = vmatprep.subr.mxu0 0.0
  %2322 = vmatpush1.msra.mxu0 0.0
  %2323 = vmatprep.subr.mxu0 0.0
  %2324 = vmatpush1.msra.mxu0 0.0
  %2325 = vmatprep.subr.mxu0 0.0
  %2326 = vmatpush1.msra.mxu0 0.0
  %2327 = vmatprep.subr.mxu0 0.0
  %2328 = vmatpush1.msra.mxu0 0.0
  %2329 = vmatprep.subr.mxu0 0.0
  %2330 = vmatpush1.msra.mxu0 0.0
  %2331 = vmatprep.subr.mxu0 0.0
  %2332 = vmatpush1.msra.mxu0 0.0
  %2333 = vmatprep.subr.mxu0 0.0
  %2334 = vmatpush1.msra.mxu0 0.0
  %2335 = vmatprep.mubr.f32.mxu0 0.0
  %2336 = vmatmul.mubr.f32.gmra.mrb[0].mxu0 %v2269
  %v2337 = vpop.f32.mrb[0].mxu0
  %v2338 = vadd.f32 0.0, %v2337
  %v2339 = vpop.f32.mrb[0].mxu0
  %2340 = vdwg.mxu0
  %2341 = vmatprep.subr.mxu0 0.0
  %2342 = vmatpush1.msra.mxu0 %v37
  %2343 = vmatprep.subr.mxu0 0.0
  %2344 = vmatpush1.msra.mxu0 %v38
  %2345 = vmatprep.subr.mxu0 0.0
  %2346 = vmatpush1.msra.mxu0 0.0
  %2347 = vmatprep.subr.mxu0 0.0
  %2348 = vmatpush1.msra.mxu0 0.0
  %2349 = vmatprep.subr.mxu0 0.0
  %2350 = vmatpush1.msra.mxu0 0.0
  %2351 = vmatprep.subr.mxu0 0.0
  %2352 = vmatpush1.msra.mxu0 0.0
  %2353 = vmatprep.subr.mxu0 0.0
  %2354 = vmatpush1.msra.mxu0 0.0
  %2355 = vmatprep.subr.mxu0 0.0
  %2356 = vmatpush1.msra.mxu0 0.0
  %2357 = vmatprep.subr.mxu0 0.0
  %2358 = vmatpush1.msra.mxu0 0.0
  %2359 = vmatprep.subr.mxu0 0.0
  %2360 = vmatpush1.msra.mxu0 0.0
  %2361 = vmatprep.subr.mxu0 0.0
  %2362 = vmatpush1.msra.mxu0 0.0
  %2363 = vmatprep.subr.mxu0 0.0
  %2364 = vmatpush1.msra.mxu0 0.0
  %2365 = vmatprep.subr.mxu0 0.0
  %2366 = vmatpush1.msra.mxu0 0.0
  %2367 = vmatprep.subr.mxu0 0.0
  %2368 = vmatpush1.msra.mxu0 0.0
  %2369 = vmatprep.subr.mxu0 0.0
  %2370 = vmatpush1.msra.mxu0 0.0
  %2371 = vmatprep.subr.mxu0 0.0
  %2372 = vmatpush1.msra.mxu0 0.0
  %2373 = vmatprep.subr.mxu0 0.0
  %2374 = vmatpush1.msra.mxu0 0.0
  %2375 = vmatprep.subr.mxu0 0.0
  %2376 = vmatpush1.msra.mxu0 0.0
  %2377 = vmatprep.subr.mxu0 0.0
  %2378 = vmatpush1.msra.mxu0 0.0
  %2379 = vmatprep.subr.mxu0 0.0
  %2380 = vmatpush1.msra.mxu0 0.0
  %2381 = vmatprep.subr.mxu0 0.0
  %2382 = vmatpush1.msra.mxu0 0.0
  %2383 = vmatprep.subr.mxu0 0.0
  %2384 = vmatpush1.msra.mxu0 0.0
  %2385 = vmatprep.subr.mxu0 0.0
  %2386 = vmatpush1.msra.mxu0 0.0
  %2387 = vmatprep.subr.mxu0 0.0
  %2388 = vmatpush1.msra.mxu0 0.0
  %2389 = vmatprep.subr.mxu0 0.0
  %2390 = vmatpush1.msra.mxu0 0.0
  %2391 = vmatprep.subr.mxu0 0.0
  %2392 = vmatpush1.msra.mxu0 0.0
  %2393 = vmatprep.subr.mxu0 0.0
  %2394 = vmatpush1.msra.mxu0 0.0
  %2395 = vmatprep.subr.mxu0 0.0
  %2396 = vmatpush1.msra.mxu0 0.0
  %2397 = vmatprep.subr.mxu0 0.0
  %2398 = vmatpush1.msra.mxu0 0.0
  %2399 = vmatprep.subr.mxu0 0.0
  %2400 = vmatpush1.msra.mxu0 0.0
  %2401 = vmatprep.subr.mxu0 0.0
  %2402 = vmatpush1.msra.mxu0 0.0
  %2403 = vmatprep.subr.mxu0 0.0
  %2404 = vmatpush1.msra.mxu0 0.0
  %2405 = vmatprep.mubr.f32.mxu0 0.0
  %2406 = vmatmul.mubr.f32.gmra.mrb[0].mxu0 %v2269
  %v2407 = vpop.f32.mrb[0].mxu0
  %v2408 = vadd.f32 0.0, %v2407
  %v2409 = vpop.f32.mrb[0].mxu0
  %2410 = vdwg.mxu0
  %v2411 = vmax.f32 %v2338, %v2408
  %2413 = vrot.lane.b32.xlu0 %v2411, 57
  %v2414 = vpop.permute.xlu0 %2413
  %2416 = vst.msk [vmem:[%s1318] sm:$0xf] %vm1158, %v2414
  %v2417 = vld [vmem:[%s1321 + $0x4] sm:$0xf]
  %2419 = vrot.lane.b32.xlu0 %v2417, 112
  %v2420 = vpop.permute.xlu0 %2419
  %v2422 = vmax.f32 %v2417, %v2420
  %2424 = vrot.lane.b32.xlu0 %v2422, 32
  %v2425 = vpop.permute.xlu0 %2424
  %v2426 = vsel %vm63, %v2425, 0
  %2428 = vmatprep.subr.mxu0 0.0
  %2429 = vmatpush1.msra.mxu0 %v30
  %2430 = vmatprep.subr.mxu0 0.0
  %2431 = vmatpush1.msra.mxu0 %v31
  %2432 = vmatprep.subr.mxu0 0.0
  %2433 = vmatpush1.msra.mxu0 0.0
  %2434 = vmatprep.subr.mxu0 0.0
  %2435 = vmatpush1.msra.mxu0 0.0
  %2436 = vmatprep.subr.mxu0 0.0
  %2437 = vmatpush1.msra.mxu0 0.0
  %2438 = vmatprep.subr.mxu0 0.0
  %2439 = vmatpush1.msra.mxu0 0.0
  %2440 = vmatprep.subr.mxu0 0.0
  %2441 = vmatpush1.msra.mxu0 0.0
  %2442 = vmatprep.subr.mxu0 0.0
  %2443 = vmatpush1.msra.mxu0 0.0
  %2444 = vmatprep.subr.mxu0 0.0
  %2445 = vmatpush1.msra.mxu0 0.0
  %2446 = vmatprep.subr.mxu0 0.0
  %2447 = vmatpush1.msra.mxu0 0.0
  %2448 = vmatprep.subr.mxu0 0.0
  %2449 = vmatpush1.msra.mxu0 0.0
  %2450 = vmatprep.subr.mxu0 0.0
  %2451 = vmatpush1.msra.mxu0 0.0
  %2452 = vmatprep.subr.mxu0 0.0
  %2453 = vmatpush1.msra.mxu0 0.0
  %2454 = vmatprep.subr.mxu0 0.0
  %2455 = vmatpush1.msra.mxu0 0.0
  %2456 = vmatprep.subr.mxu0 0.0
  %2457 = vmatpush1.msra.mxu0 0.0
  %2458 = vmatprep.subr.mxu0 0.0
  %2459 = vmatpush1.msra.mxu0 0.0
  %2460 = vmatprep.subr.mxu0 0.0
  %2461 = vmatpush1.msra.mxu0 0.0
  %2462 = vmatprep.subr.mxu0 0.0
  %2463 = vmatpush1.msra.mxu0 0.0
  %2464 = vmatprep.subr.mxu0 0.0
  %2465 = vmatpush1.msra.mxu0 0.0
  %2466 = vmatprep.subr.mxu0 0.0
  %2467 = vmatpush1.msra.mxu0 0.0
  %2468 = vmatprep.subr.mxu0 0.0
  %2469 = vmatpush1.msra.mxu0 0.0
  %2470 = vmatprep.subr.mxu0 0.0
  %2471 = vmatpush1.msra.mxu0 0.0
  %2472 = vmatprep.subr.mxu0 0.0
  %2473 = vmatpush1.msra.mxu0 0.0
  %2474 = vmatprep.subr.mxu0 0.0
  %2475 = vmatpush1.msra.mxu0 0.0
  %2476 = vmatprep.subr.mxu0 0.0
  %2477 = vmatpush1.msra.mxu0 0.0
  %2478 = vmatprep.subr.mxu0 0.0
  %2479 = vmatpush1.msra.mxu0 0.0
  %2480 = vmatprep.subr.mxu0 0.0
  %2481 = vmatpush1.msra.mxu0 0.0
  %2482 = vmatprep.subr.mxu0 0.0
  %2483 = vmatpush1.msra.mxu0 0.0
  %2484 = vmatprep.subr.mxu0 0.0
  %2485 = vmatpush1.msra.mxu0 0.0
  %2486 = vmatprep.subr.mxu0 0.0
  %2487 = vmatpush1.msra.mxu0 0.0
  %2488 = vmatprep.subr.mxu0 0.0
  %2489 = vmatpush1.msra.mxu0 0.0
  %2490 = vmatprep.subr.mxu0 0.0
  %2491 = vmatpush1.msra.mxu0 0.0
  %2492 = vmatprep.mubr.f32.mxu0 0.0
  %2493 = vmatmul.mubr.f32.gmra.mrb[0].mxu0 %v2426
  %v2494 = vpop.f32.mrb[0].mxu0
  %v2495 = vadd.f32 0.0, %v2494
  %v2496 = vpop.f32.mrb[0].mxu0
  %2497 = vdwg.mxu0
  %2498 = vmatprep.subr.mxu0 0.0
  %2499 = vmatpush1.msra.mxu0 %v37
  %2500 = vmatprep.subr.mxu0 0.0
  %2501 = vmatpush1.msra.mxu0 %v38
  %2502 = vmatprep.subr.mxu0 0.0
  %2503 = vmatpush1.msra.mxu0 0.0
  %2504 = vmatprep.subr.mxu0 0.0
  %2505 = vmatpush1.msra.mxu0 0.0
  %2506 = vmatprep.subr.mxu0 0.0
  %2507 = vmatpush1.msra.mxu0 0.0
  %2508 = vmatprep.subr.mxu0 0.0
  %2509 = vmatpush1.msra.mxu0 0.0
  %2510 = vmatprep.subr.mxu0 0.0
  %2511 = vmatpush1.msra.mxu0 0.0
  %2512 = vmatprep.subr.mxu0 0.0
  %2513 = vmatpush1.msra.mxu0 0.0
  %2514 = vmatprep.subr.mxu0 0.0
  %2515 = vmatpush1.msra.mxu0 0.0
  %2516 = vmatprep.subr.mxu0 0.0
  %2517 = vmatpush1.msra.mxu0 0.0
  %2518 = vmatprep.subr.mxu0 0.0
  %2519 = vmatpush1.msra.mxu0 0.0
  %2520 = vmatprep.subr.mxu0 0.0
  %2521 = vmatpush1.msra.mxu0 0.0
  %2522 = vmatprep.subr.mxu0 0.0
  %2523 = vmatpush1.msra.mxu0 0.0
  %2524 = vmatprep.subr.mxu0 0.0
  %2525 = vmatpush1.msra.mxu0 0.0
  %2526 = vmatprep.subr.mxu0 0.0
  %2527 = vmatpush1.msra.mxu0 0.0
  %2528 = vmatprep.subr.mxu0 0.0
  %2529 = vmatpush1.msra.mxu0 0.0
  %2530 = vmatprep.subr.mxu0 0.0
  %2531 = vmatpush1.msra.mxu0 0.0
  %2532 = vmatprep.subr.mxu0 0.0
  %2533 = vmatpush1.msra.mxu0 0.0
  %2534 = vmatprep.subr.mxu0 0.0
  %2535 = vmatpush1.msra.mxu0 0.0
  %2536 = vmatprep.subr.mxu0 0.0
  %2537 = vmatpush1.msra.mxu0 0.0
  %2538 = vmatprep.subr.mxu0 0.0
  %2539 = vmatpush1.msra.mxu0 0.0
  %2540 = vmatprep.subr.mxu0 0.0
  %2541 = vmatpush1.msra.mxu0 0.0
  %2542 = vmatprep.subr.mxu0 0.0
  %2543 = vmatpush1.msra.mxu0 0.0
  %2544 = vmatprep.subr.mxu0 0.0
  %2545 = vmatpush1.msra.mxu0 0.0
  %2546 = vmatprep.subr.mxu0 0.0
  %2547 = vmatpush1.msra.mxu0 0.0
  %2548 = vmatprep.subr.mxu0 0.0
  %2549 = vmatpush1.msra.mxu0 0.0
  %2550 = vmatprep.subr.mxu0 0.0
  %2551 = vmatpush1.msra.mxu0 0.0
  %2552 = vmatprep.subr.mxu0 0.0
  %2553 = vmatpush1.msra.mxu0 0.0
  %2554 = vmatprep.subr.mxu0 0.0
  %2555 = vmatpush1.msra.mxu0 0.0
  %2556 = vmatprep.subr.mxu0 0.0
  %2557 = vmatpush1.msra.mxu0 0.0
  %2558 = vmatprep.subr.mxu0 0.0
  %2559 = vmatpush1.msra.mxu0 0.0
  %2560 = vmatprep.subr.mxu0 0.0
  %2561 = vmatpush1.msra.mxu0 0.0
  %2562 = vmatprep.mubr.f32.mxu0 0.0
  %2563 = vmatmul.mubr.f32.gmra.mrb[0].mxu0 %v2426
  %v2564 = vpop.f32.mrb[0].mxu0
  %v2565 = vadd.f32 0.0, %v2564
  %v2566 = vpop.f32.mrb[0].mxu0
  %2567 = vdwg.mxu0
  %v2568 = vmax.f32 %v2495, %v2565
  %2570 = vrot.lane.b32.xlu0 %v2568, 65
  %v2571 = vpop.permute.xlu0 %2570
  %2573 = vst.msk [vmem:[%s1318] sm:$0xf] %vm1316, %v2571
  %v2574 = vld [vmem:[#allocation2] sm:$0xf]
  %v2575 = vsel %vm51, 1, 0
  %vm2576 = vcmp.eq.s32.totalorder %v2575, 1
  %v2577 = vsel %vm2576, %v2574, 0.0
  %vm2578 = vcmask 519168
  %2579 = vst.msk [vmem:[#allocation3] sm:$0xf] %vm2578, %v2577
  %v2580 = vld [vmem:[#allocation2] sm:$0xf]
  %2582 = vrot.lane.b32.xlu0 %v2580, 127
  %v2583 = vpop.permute.xlu0 %2582
  %2585 = vst.msk [vmem:[#allocation3 + $0x4] sm:$0xf] %vm2578, %v2583
  %v2586 = vld [vmem:[#allocation2] sm:$0xf]
  %v2587 = vsel %vm52, 1, 0
  %vm2588 = vcmp.eq.s32.totalorder %v2587, 1
  %2590 = vrot.lane.b32.xlu0 %v2586, 126
  %v2591 = vpop.permute.xlu0 %2590
  %v2593 = vsel %vm2588, %v2591, 0.0
  %2594 = vst.msk [vmem:[#allocation3 + $0x8] sm:$0xf] %vm2578, %v2593
  %v2595 = vld [vmem:[#allocation2] sm:$0xf]
  %2597 = vrot.lane.b32.xlu0 %v2595, 120
  %v2598 = vpop.permute.xlu0 %2597
  %v2600 = vsel %vm2576, %v2598, 0.0
  %2601 = vst.msk [vmem:[#allocation3 + $0xc] sm:$0xf] %vm2578, %v2600
  %v2602 = vld [vmem:[#allocation2] sm:$0xf]
  %2604 = vrot.lane.b32.xlu0 %v2602, 119
  %v2605 = vpop.permute.xlu0 %2604
  %2607 = vst.msk [vmem:[#allocation3 + $0x10] sm:$0xf] %vm2578, %v2605
  %v2608 = vld [vmem:[#allocation2] sm:$0xf]
  %2610 = vrot.lane.b32.xlu0 %v2608, 118
  %v2611 = vpop.permute.xlu0 %2610
  %v2613 = vsel %vm2588, %v2611, 0.0
  %2614 = vst.msk [vmem:[#allocation3 + $0x14] sm:$0xf] %vm2578, %v2613
  %v2615 = vld [vmem:[#allocation2] sm:$0xf]
  %2617 = vrot.lane.b32.xlu0 %v2615, 112
  %v2618 = vpop.permute.xlu0 %2617
  %v2620 = vsel %vm2576, %v2618, 0.0
  %2621 = vst.msk [vmem:[#allocation3 + $0x18] sm:$0xf] %vm2578, %v2620
  %v2622 = vld [vmem:[#allocation2] sm:$0xf]
  %2624 = vrot.lane.b32.xlu0 %v2622, 111
  %v2625 = vpop.permute.xlu0 %2624
  %2627 = vst.msk [vmem:[#allocation3 + $0x1c] sm:$0xf] %vm2578, %v2625
  %v2628 = vld [vmem:[#allocation2] sm:$0xf]
  %2630 = vrot.lane.b32.xlu0 %v2628, 110
  %v2631 = vpop.permute.xlu0 %2630
  %v2633 = vsel %vm2588, %v2631, 0.0
  %2634 = vst.msk [vmem:[#allocation3 + $0x20] sm:$0xf] %vm2578, %v2633
  %v2635 = vld [vmem:[%s1318] sm:$0xf]
  %v2636 = vsel %vm2576, %v2635, 0.0
  %2638 = vrot.lane.b32.xlu0 %v2636, 64
  %v2639 = vpop.permute.xlu0 %2638
  %vm2641 = vcmask 1043968
  %2642 = vst.msk [vmem:[#allocation3] sm:$0xf] %vm2641, %v2639
  %v2643 = vld [vmem:[%s1318] sm:$0xf]
  %2645 = vrot.lane.b32.xlu0 %v2643, 63
  %v2646 = vpop.permute.xlu0 %2645
  %2648 = vst.msk [vmem:[#allocation3 + $0x4] sm:$0xf] %vm2641, %v2646
  %v2649 = vld [vmem:[%s1318] sm:$0xf]
  %2651 = vrot.lane.b32.xlu0 %v2649, 126
  %v2652 = vpop.permute.xlu0 %2651
  %v2654 = vsel %vm2588, %v2652, 0.0
  %2656 = vrot.lane.b32.xlu0 %v2654, 64
  %v2657 = vpop.permute.xlu0 %2656
  %2659 = vst.msk [vmem:[#allocation3 + $0x8] sm:$0xf] %vm2641, %v2657
  %v2660 = vld [vmem:[%s1318] sm:$0xf]
  %2662 = vrot.lane.b32.xlu0 %v2660, 120
  %v2663 = vpop.permute.xlu0 %2662
  %v2665 = vsel %vm2576, %v2663, 0.0
  %2667 = vrot.lane.b32.xlu0 %v2665, 64
  %v2668 = vpop.permute.xlu0 %2667
  %2670 = vst.msk [vmem:[#allocation3 + $0xc] sm:$0xf] %vm2641, %v2668
  %v2671 = vld [vmem:[%s1318] sm:$0xf]
  %2673 = vrot.lane.b32.xlu0 %v2671, 55
  %v2674 = vpop.permute.xlu0 %2673
  %2676 = vst.msk [vmem:[#allocation3 + $0x10] sm:$0xf] %vm2641, %v2674
  %v2677 = vld [vmem:[%s1318] sm:$0xf]
  %2679 = vrot.lane.b32.xlu0 %v2677, 118
  %v2680 = vpop.permute.xlu0 %2679
  %v2682 = vsel %vm2588, %v2680, 0.0
  %2684 = vrot.lane.b32.xlu0 %v2682, 64
  %v2685 = vpop.permute.xlu0 %2684
  %2687 = vst.msk [vmem:[#allocation3 + $0x14] sm:$0xf] %vm2641, %v2685
  %v2688 = vld [vmem:[%s1318] sm:$0xf]
  %2690 = vrot.lane.b32.xlu0 %v2688, 112
  %v2691 = vpop.permute.xlu0 %2690
  %v2693 = vsel %vm2576, %v2691, 0.0
  %2695 = vrot.lane.b32.xlu0 %v2693, 64
  %v2696 = vpop.permute.xlu0 %2695
  %2698 = vst.msk [vmem:[#allocation3 + $0x18] sm:$0xf] %vm2641, %v2696
  %v2699 = vld [vmem:[%s1318] sm:$0xf]
  %2701 = vrot.lane.b32.xlu0 %v2699, 47
  %v2702 = vpop.permute.xlu0 %2701
  %2704 = vst.msk [vmem:[#allocation3 + $0x1c] sm:$0xf] %vm2641, %v2702
  %v2705 = vld [vmem:[%s1318] sm:$0xf]
  %2707 = vrot.lane.b32.xlu0 %v2705, 110
  %v2708 = vpop.permute.xlu0 %2707
  %v2710 = vsel %vm2588, %v2708, 0.0
  %2712 = vrot.lane.b32.xlu0 %v2710, 64
  %v2713 = vpop.permute.xlu0 %2712
  %2715 = vst.msk [vmem:[#allocation3 + $0x20] sm:$0xf] %vm2641, %v2713
  %v2716 = vld [vmem:[%s1] sm:$0xff]
  %v2717 = vld [vmem:[#allocation3] sm:$0xff]
  %v2718 = vld [vmem:[#allocation3 + $0x8] sm:$0xff]
  %v2719 = vld [vmem:[#allocation3 + $0x10] sm:$0xff]
  %v2720 = vld [vmem:[#allocation3 + $0x18] sm:$0xff]
  %v2721 = vld [vmem:[#allocation3 + $0x20] sm:$0xf]
  %v2722 = vld [vmem:[%s2] sm:$0xff]
  %2724 = vset.pattern.permute.xlu0 0
  %2725 = vperm.xlu0 %2724, %v2722
  %v2726 = vpop.permute.xlu0 %2725
  %vm2728 = vcmask 293888
  %v2730 = vsel %vm2728, %v2716, 0
  %vm2732 = vcmask 1043456
  %v2734 = vsel %vm2732, %v2721, 0
  %2736 = vmatprep.subr.mxu0 0.0
  %2737 = vmatpush1.msra.mxu0 %v2717
  %2738 = vmatprep.subr.mxu0 0.0
  %2739 = vmatpush1.msra.mxu0 %v2718
  %2740 = vmatprep.subr.mxu0 0.0
  %2741 = vmatpush1.msra.mxu0 %v2719
  %2742 = vmatprep.subr.mxu0 0.0
  %2743 = vmatpush1.msra.mxu0 %v2720
  %2744 = vmatprep.subr.mxu0 0.0
  %2745 = vmatpush1.msra.mxu0 %v2734
  %2746 = vmatprep.subr.mxu0 0.0
  %2747 = vmatpush1.msra.mxu0 0.0
  %2748 = vmatprep.subr.mxu0 0.0
  %2749 = vmatpush1.msra.mxu0 0.0
  %2750 = vmatprep.subr.mxu0 0.0
  %2751 = vmatpush1.msra.mxu0 0.0
  %2752 = vmatprep.subr.mxu0 0.0
  %2753 = vmatpush1.msra.mxu0 0.0
  %2754 = vmatprep.subr.mxu0 0.0
  %2755 = vmatpush1.msra.mxu0 0.0
  %2756 = vmatprep.subr.mxu0 0.0
  %2757 = vmatpush1.msra.mxu0 0.0
  %2758 = vmatprep.subr.mxu0 0.0
  %2759 = vmatpush1.msra.mxu0 0.0
  %2760 = vmatprep.subr.mxu0 0.0
  %2761 = vmatpush1.msra.mxu0 0.0
  %2762 = vmatprep.subr.mxu0 0.0
  %2763 = vmatpush1.msra.mxu0 0.0
  %2764 = vmatprep.subr.mxu0 0.0
  %2765 = vmatpush1.msra.mxu0 0.0
  %2766 = vmatprep.subr.mxu0 0.0
  %2767 = vmatpush1.msra.mxu0 0.0
  %2768 = vmatprep.subr.mxu0 0.0
  %2769 = vmatpush1.msra.mxu0 0.0
  %2770 = vmatprep.subr.mxu0 0.0
  %2771 = vmatpush1.msra.mxu0 0.0
  %2772 = vmatprep.subr.mxu0 0.0
  %2773 = vmatpush1.msra.mxu0 0.0
  %2774 = vmatprep.subr.mxu0 0.0
  %2775 = vmatpush1.msra.mxu0 0.0
  %2776 = vmatprep.subr.mxu0 0.0
  %2777 = vmatpush1.msra.mxu0 0.0
  %2778 = vmatprep.subr.mxu0 0.0
  %2779 = vmatpush1.msra.mxu0 0.0
  %2780 = vmatprep.subr.mxu0 0.0
  %2781 = vmatpush1.msra.mxu0 0.0
  %2782 = vmatprep.subr.mxu0 0.0
  %2783 = vmatpush1.msra.mxu0 0.0
  %2784 = vmatprep.subr.mxu0 0.0
  %2785 = vmatpush1.msra.mxu0 0.0
  %2786 = vmatprep.subr.mxu0 0.0
  %2787 = vmatpush1.msra.mxu0 0.0
  %2788 = vmatprep.subr.mxu0 0.0
  %2789 = vmatpush1.msra.mxu0 0.0
  %2790 = vmatprep.subr.mxu0 0.0
  %2791 = vmatpush1.msra.mxu0 0.0
  %2792 = vmatprep.subr.mxu0 0.0
  %2793 = vmatpush1.msra.mxu0 0.0
  %2794 = vmatprep.subr.mxu0 0.0
  %2795 = vmatpush1.msra.mxu0 0.0
  %2796 = vmatprep.subr.mxu0 0.0
  %2797 = vmatpush1.msra.mxu0 0.0
  %2798 = vmatprep.subr.mxu0 0.0
  %2799 = vmatpush1.msra.mxu0 0.0
  %2800 = vmatprep.mubr.f32.mxu0 0.0
  %2801 = vmatmul.mubr.f32.gmra.mrb[0].mxu0 %v2730
  %v2802 = vpop.f32.mrb[0].mxu0
  %v2803 = vadd.f32 %v2726, %v2802
  %v2804 = vpop.f32.mrb[0].mxu0
  %2805 = vdwg.mxu0
  %v2806 = vmax.f32 %v2803, 0.0
  %vm2807 = vcmask 72704
  %2808 = vst.msk [vmem:[#allocation4] sm:$0xff] %vm2807, 0.0
  %vm2809 = vcmask 671304
  %2810 = vst.msk [vmem:[#allocation4] sm:$0xff] %vm2809, 0.0
  %2812 = vrot.lane.b32.xlu0 %v2806, 9
  %v2813 = vpop.permute.xlu0 %2812
  %vm2815 = vcmask 597064
  %2816 = vst.msk [vmem:[#allocation4] sm:$0xff] %vm2815, %v2813
  %s2817 = scalar_lea.vmem [#allocation4], 8
  %2818 = vst.msk [vmem:[%s2817] sm:$0xff] %vm2807, 0.0
  %2819 = vst.msk [vmem:[%s2817] sm:$0xff] %vm2809, 0.0
  %2820 = vrot.lane.b32.xlu0 %v2806, 73
  %v2821 = vpop.permute.xlu0 %2820
  %2823 = vst.msk [vmem:[%s2817] sm:$0xff] %vm2815, %v2821
  %v2824 = vld [vmem:[#allocation4] sm:$0xff]
  %v2825 = vsel %vm2576, %v2824, 0.0
  %vm2826 = vcmask 523264
  %2827 = vst.msk [vmem:[#allocation5] sm:$0xff] %vm2826, %v2825
  %v2828 = vld [vmem:[#allocation4] sm:$0xff]
  %2830 = vrot.lane.b32.xlu0 %v2828, 127
  %v2831 = vpop.permute.xlu0 %2830
  %2833 = vst.msk [vmem:[#allocation5 + $0x8] sm:$0xff] %vm2826, %v2831
  %v2834 = vld [vmem:[#allocation4] sm:$0xff]
  %2836 = vrot.lane.b32.xlu0 %v2834, 126
  %v2837 = vpop.permute.xlu0 %2836
  %v2839 = vsel %vm2588, %v2837, 0.0
  %2840 = vst.msk [vmem:[#allocation5 + $0x10] sm:$0xff] %vm2826, %v2839
  %v2841 = vld [vmem:[#allocation4] sm:$0xff]
  %2843 = vrot.lane.b32.xlu0 %v2841, 120
  %v2844 = vpop.permute.xlu0 %2843
  %v2846 = vsel %vm2576, %v2844, 0.0
  %2847 = vst.msk [vmem:[#allocation5 + $0x18] sm:$0xff] %vm2826, %v2846
  %v2848 = vld [vmem:[#allocation4] sm:$0xff]
  %2850 = vrot.lane.b32.xlu0 %v2848, 119
  %v2851 = vpop.permute.xlu0 %2850
  %2853 = vst.msk [vmem:[#allocation5 + $0x20] sm:$0xff] %vm2826, %v2851
  %v2854 = vld [vmem:[#allocation4] sm:$0xff]
  %2856 = vrot.lane.b32.xlu0 %v2854, 118
  %v2857 = vpop.permute.xlu0 %2856
  %v2859 = vsel %vm2588, %v2857, 0.0
  %2860 = vst.msk [vmem:[#allocation5 + $0x28] sm:$0xff] %vm2826, %v2859
  %v2861 = vld [vmem:[#allocation4] sm:$0xff]
  %2863 = vrot.lane.b32.xlu0 %v2861, 112
  %v2864 = vpop.permute.xlu0 %2863
  %v2866 = vsel %vm2576, %v2864, 0.0
  %2867 = vst.msk [vmem:[#allocation5 + $0x30] sm:$0xff] %vm2826, %v2866
  %v2868 = vld [vmem:[#allocation4] sm:$0xff]
  %2870 = vrot.lane.b32.xlu0 %v2868, 111
  %v2871 = vpop.permute.xlu0 %2870
  %2873 = vst.msk [vmem:[#allocation5 + $0x38] sm:$0xff] %vm2826, %v2871
  %v2874 = vld [vmem:[#allocation4] sm:$0xff]
  %2876 = vrot.lane.b32.xlu0 %v2874, 110
  %v2877 = vpop.permute.xlu0 %2876
  %v2879 = vsel %vm2588, %v2877, 0.0
  %2880 = vst.msk [vmem:[#allocation5 + $0x40] sm:$0xff] %vm2826, %v2879
  %v2881 = vld [vmem:[%s2817] sm:$0xff]
  %v2882 = vsel %vm2576, %v2881, 0.0
  %2884 = vrot.lane.b32.xlu0 %v2882, 64
  %v2885 = vpop.permute.xlu0 %2884
  %vm2887 = vcmask 1048064
  %2888 = vst.msk [vmem:[#allocation5] sm:$0xff] %vm2887, %v2885
  %v2889 = vld [vmem:[%s2817] sm:$0xff]
  %2891 = vrot.lane.b32.xlu0 %v2889, 63
  %v2892 = vpop.permute.xlu0 %2891
  %2894 = vst.msk [vmem:[#allocation5 + $0x8] sm:$0xff] %vm2887, %v2892
  %v2895 = vld [vmem:[%s2817] sm:$0xff]
  %2897 = vrot.lane.b32.xlu0 %v2895, 126
  %v2898 = vpop.permute.xlu0 %2897
  %v2900 = vsel %vm2588, %v2898, 0.0
  %2902 = vrot.lane.b32.xlu0 %v2900, 64
  %v2903 = vpop.permute.xlu0 %2902
  %2905 = vst.msk [vmem:[#allocation5 + $0x10] sm:$0xff] %vm2887, %v2903
  %v2906 = vld [vmem:[%s2817] sm:$0xff]
  %2908 = vrot.lane.b32.xlu0 %v2906, 120
  %v2909 = vpop.permute.xlu0 %2908
  %v2911 = vsel %vm2576, %v2909, 0.0
  %2913 = vrot.lane.b32.xlu0 %v2911, 64
  %v2914 = vpop.permute.xlu0 %2913
  %2916 = vst.msk [vmem:[#allocation5 + $0x18] sm:$0xff] %vm2887, %v2914
  %v2917 = vld [vmem:[%s2817] sm:$0xff]
  %2919 = vrot.lane.b32.xlu0 %v2917, 55
  %v2920 = vpop.permute.xlu0 %2919
  %2922 = vst.msk [vmem:[#allocation5 + $0x20] sm:$0xff] %vm2887, %v2920
  %v2923 = vld [vmem:[%s2817] sm:$0xff]
  %2925 = vrot.lane.b32.xlu0 %v2923, 118
  %v2926 = vpop.permute.xlu0 %2925
  %v2928 = vsel %vm2588, %v2926, 0.0
  %2930 = vrot.lane.b32.xlu0 %v2928, 64
  %v2931 = vpop.permute.xlu0 %2930
  %2933 = vst.msk [vmem:[#allocation5 + $0x28] sm:$0xff] %vm2887, %v2931
  %v2934 = vld [vmem:[%s2817] sm:$0xff]
  %2936 = vrot.lane.b32.xlu0 %v2934, 112
  %v2937 = vpop.permute.xlu0 %2936
  %v2939 = vsel %vm2576, %v2937, 0.0
  %2941 = vrot.lane.b32.xlu0 %v2939, 64
  %v2942 = vpop.permute.xlu0 %2941
  %2944 = vst.msk [vmem:[#allocation5 + $0x30] sm:$0xff] %vm2887, %v2942
  %v2945 = vld [vmem:[%s2817] sm:$0xff]
  %2947 = vrot.lane.b32.xlu0 %v2945, 47
  %v2948 = vpop.permute.xlu0 %2947
  %2950 = vst.msk [vmem:[#allocation5 + $0x38] sm:$0xff] %vm2887, %v2948
  %v2951 = vld [vmem:[%s2817] sm:$0xff]
  %2953 = vrot.lane.b32.xlu0 %v2951, 110
  %v2954 = vpop.permute.xlu0 %2953
  %v2956 = vsel %vm2588, %v2954, 0.0
  %2958 = vrot.lane.b32.xlu0 %v2956, 64
  %v2959 = vpop.permute.xlu0 %2958
  %2961 = vst.msk [vmem:[#allocation5 + $0x40] sm:$0xff] %vm2887, %v2959
  %v2962 = vld [vmem:[%s3] sm:$0xff]
  %v2963 = vld [vmem:[#allocation5] sm:$0xff]
  %v2964 = vld [vmem:[#allocation5 + $0x8] sm:$0xff]
  %v2965 = vld [vmem:[#allocation5 + $0x10] sm:$0xff]
  %v2966 = vld [vmem:[#allocation5 + $0x18] sm:$0xff]
  %v2967 = vld [vmem:[#allocation5 + $0x20] sm:$0xff]
  %v2968 = vld [vmem:[#allocation5 + $0x28] sm:$0xff]
  %v2969 = vld [vmem:[#allocation5 + $0x30] sm:$0xff]
  %v2970 = vld [vmem:[#allocation5 + $0x38] sm:$0xff]
  %v2971 = vld [vmem:[#allocation5 + $0x40] sm:$0xff]
  %v2972 = vld [vmem:[%s4] sm:$0xff]
  %2974 = vset.pattern.permute.xlu0 0
  %2975 = vperm.xlu0 %2974, %v2972
  %v2976 = vpop.permute.xlu0 %2975
  %vm2978 = vcmask 588800
  %v2980 = vsel %vm2978, %v2962, 0
  %2982 = vmatprep.subr.mxu0 0.0
  %2983 = vmatpush1.msra.mxu0 %v2963
  %2984 = vmatprep.subr.mxu0 0.0
  %2985 = vmatpush1.msra.mxu0 %v2964
  %2986 = vmatprep.subr.mxu0 0.0
  %2987 = vmatpush1.msra.mxu0 %v2965
  %2988 = vmatprep.subr.mxu0 0.0
  %2989 = vmatpush1.msra.mxu0 %v2966
  %2990 = vmatprep.subr.mxu0 0.0
  %2991 = vmatpush1.msra.mxu0 %v2967
  %2992 = vmatprep.subr.mxu0 0.0
  %2993 = vmatpush1.msra.mxu0 %v2968
  %2994 = vmatprep.subr.mxu0 0.0
  %2995 = vmatpush1.msra.mxu0 %v2969
  %2996 = vmatprep.subr.mxu0 0.0
  %2997 = vmatpush1.msra.mxu0 %v2970
  %2998 = vmatprep.subr.mxu0 0.0
  %2999 = vmatpush1.msra.mxu0 %v2971
  %3000 = vmatprep.subr.mxu0 0.0
  %3001 = vmatpush1.msra.mxu0 0.0
  %3002 = vmatprep.subr.mxu0 0.0
  %3003 = vmatpush1.msra.mxu0 0.0
  %3004 = vmatprep.subr.mxu0 0.0
  %3005 = vmatpush1.msra.mxu0 0.0
  %3006 = vmatprep.subr.mxu0 0.0
  %3007 = vmatpush1.msra.mxu0 0.0
  %3008 = vmatprep.subr.mxu0 0.0
  %3009 = vmatpush1.msra.mxu0 0.0
  %3010 = vmatprep.subr.mxu0 0.0
  %3011 = vmatpush1.msra.mxu0 0.0
  %3012 = vmatprep.subr.mxu0 0.0
  %3013 = vmatpush1.msra.mxu0 0.0
  %3014 = vmatprep.subr.mxu0 0.0
  %3015 = vmatpush1.msra.mxu0 0.0
  %3016 = vmatprep.subr.mxu0 0.0
  %3017 = vmatpush1.msra.mxu0 0.0
  %3018 = vmatprep.subr.mxu0 0.0
  %3019 = vmatpush1.msra.mxu0 0.0
  %3020 = vmatprep.subr.mxu0 0.0
  %3021 = vmatpush1.msra.mxu0 0.0
  %3022 = vmatprep.subr.mxu0 0.0
  %3023 = vmatpush1.msra.mxu0 0.0
  %3024 = vmatprep.subr.mxu0 0.0
  %3025 = vmatpush1.msra.mxu0 0.0
  %3026 = vmatprep.subr.mxu0 0.0
  %3027 = vmatpush1.msra.mxu0 0.0
  %3028 = vmatprep.subr.mxu0 0.0
  %3029 = vmatpush1.msra.mxu0 0.0
  %3030 = vmatprep.subr.mxu0 0.0
  %3031 = vmatpush1.msra.mxu0 0.0
  %3032 = vmatprep.subr.mxu0 0.0
  %3033 = vmatpush1.msra.mxu0 0.0
  %3034 = vmatprep.subr.mxu0 0.0
  %3035 = vmatpush1.msra.mxu0 0.0
  %3036 = vmatprep.subr.mxu0 0.0
  %3037 = vmatpush1.msra.mxu0 0.0
  %3038 = vmatprep.subr.mxu0 0.0
  %3039 = vmatpush1.msra.mxu0 0.0
  %3040 = vmatprep.subr.mxu0 0.0
  %3041 = vmatpush1.msra.mxu0 0.0
  %3042 = vmatprep.subr.mxu0 0.0
  %3043 = vmatpush1.msra.mxu0 0.0
  %3044 = vmatprep.subr.mxu0 0.0
  %3045 = vmatpush1.msra.mxu0 0.0
  %3046 = vmatprep.mubr.f32.mxu0 0.0
  %3047 = vmatmul.mubr.f32.gmra.mrb[0].mxu0 %v2980
  %v3048 = vpop.f32.mrb[0].mxu0
  %v3049 = vadd.f32 %v2976, %v3048
  %v3050 = vpop.f32.mrb[0].mxu0
  %3051 = vdwg.mxu0
  %v3052 = vmax.f32 %v3049, 0.0
  %3053 = vst [vmem:[%s5] sm:$0xff] %v3052
  // Predicated region
  $region22: #{down_forward.1} parent=0 // pred_check
    _
  $region23: #{down_forward.1} parent=0 // pred_check_branch
    %3055 = sbr.rel (0) target = $region25
  $region24: #{down_forward.1} parent=0 // pred_region
    _
  $region25: #{down_forward.1} parent=0 // pred_fallthru
    _
  // Predicated region
  $region26: #{down_forward.1} parent=0 // pred_check
    _
  $region27: #{down_forward.1} parent=0 // pred_check_branch
    %3057 = sbr.rel (0) target = $region29
  $region28: #{down_forward.1} parent=0 // pred_region
    _
  $region29: #{down_forward.1} parent=0 // pred_fallthru
    _

</llo_original>
